<compile_context>
chip_gen: v7x
topology: tpu7x:2x2x1
jax: 0.10.0
libtpu: 0.0.40
codegen_flags: <defaults>
</compile_context>

<pallas_src>
import functools

import jax
import jax.numpy as jnp
from jax import lax
from jax.experimental import pallas as pl
from jax.experimental.pallas import tpu as pltpu


def _tensorcores_per_chip():
    """Best-effort detection of TensorCores per chip (v7x: 2, v5e/v6e: 1)."""
    try:
        kind = jax.devices()[0].device_kind.lower()
    except Exception:
        return 1
    return 2 if "v7" in kind else 1


# --------------------------------------------------------------------------
# Fused kernel: LinearMLPBlock + (num_layers-1) AttentionBlocks
# --------------------------------------------------------------------------
def _fused_nn_kernel(*refs, n_h, n_t, n_layers_att):
    # With attention layers:    (wt_ref, wpk_ref, x_ref, o_ref)
    # Linear-only (L_att == 0): (wt_ref,          x_ref, o_ref)
    if n_layers_att > 0:
        wt_ref, wpk_ref, x_ref, o_ref = refs
    else:
        wt_ref, x_ref, o_ref = refs
        wpk_ref = None

    nets, rows, _ = x_ref.shape  # networks folded into this block, d*n_t rows

    if n_layers_att > 0:
        # Block-diagonal causal mask over the stacked (d, n_t) rows, built
        # once in-kernel (row = b*n_t + t, col = b'*n_t + u; keep iff
        # b == b' and u <= t).  Comparison-only -> cheap VPU work.
        ri = lax.broadcasted_iota(jnp.int32, (rows, rows), 0)
        ci = lax.broadcasted_iota(jnp.int32, (rows, rows), 1)
        causal = ci <= ri
        mask = None
        for bidx in range(rows // n_t):
            lo = bidx * n_t
            blk = causal & (ci >= lo) & (ri < lo + n_t)
            mask = blk if mask is None else (mask | blk)

    for b in range(nets):  # static loop over networks in this block
        # --- layer 0: linear (s = x @ W^T) ----------------------------------
        s = jnp.dot(x_ref[b], wt_ref[b], preferred_element_type=jnp.float32)

        # --- attention layers (static, unrolled) -----------------------------
        for li in range(n_layers_att):
            base = li * 2 * n_h
            s_t = s.T                      # hoisted: one transpose per layer
            acc = None
            for h in range(n_h):
                # Static ref indices -> lane-aligned (n, n) operands.
                xq = jnp.dot(s, wpk_ref[b, base + h],
                             preferred_element_type=jnp.float32)       # s @ Q_h
                v = jnp.dot(s, wpk_ref[b, base + n_h + h],
                            preferred_element_type=jnp.float32)        # s @ E_h^T
                # Omega_h[t, u] = sum_{i,j} s[t,i] Q_h[i,j] s[u,j]
                omega = jnp.dot(xq, s_t, preferred_element_type=jnp.float32)
                omega = jnp.where(mask, omega, 0.0)
                # r_h[t, i] = sum_u (Omega_h * Theta)[t, u] * (s @ E_h^T)[u, i]
                term = jnp.dot(omega, v, preferred_element_type=jnp.float32)
                acc = term if acc is None else acc + term
            s = acc

        o_ref[b] = s.astype(o_ref.dtype)


# --------------------------------------------------------------------------
# Wrapper
# --------------------------------------------------------------------------
def nn_forward(params, x):
    """Full NN forward: LinearMLPBlock followed by (num_layers-1) AttentionBlocks."""
    W = params["W"]                  # (N_net, n, n_in)
    Qs = params["Qs"]                # list of (N_net, n_h, n, n)
    Es = params["Es"]                # list of (N_net, n_h, n, n)

    N_net, d, n_t, n_in = x.shape
    n = W.shape[1]
    n_layers_att = len(Qs)
    n_h = Qs[0].shape[1] if n_layers_att > 0 else 1
    rows = d * n_t

    # Grid strategy: fold all networks into one grid step on 1-TC chips
    # (v5e/v6e: no per-step pipeline overhead); one network per grid step
    # on 2-TC chips (v7x: both TensorCores busy).
    n_tc = _tensorcores_per_chip()
    if n_tc > 1 and N_net % n_tc == 0:
        nets_per_block = N_net // n_tc
    else:
        nets_per_block = N_net
    grid = (N_net // nets_per_block,)

    # Layer-0 weight, pre-transposed so the kernel does a plain x @ W^T matmul.
    wt = jnp.transpose(W, (0, 2, 1)).astype(jnp.float32)      # (N_net, n_in, n)
    x2 = x.reshape(N_net, rows, n_in).astype(jnp.float32)

    args = [wt]
    in_specs = [pl.BlockSpec((nets_per_block, n_in, n), lambda i: (i, 0, 0))]

    if n_layers_att > 0:
        # Per-layer slot order: [Q_0 .. Q_{n_h-1}, E_0^T .. E_{n_h-1}^T];
        # flattened index = layer * 2*n_h + slot.
        per_layer = []
        for Q, E in zip(Qs, Es):
            per_layer.append(
                jnp.concatenate([Q, jnp.swapaxes(E, -1, -2)], axis=1))  # (N, 2*n_h, n, n)
        wpk = jnp.concatenate(per_layer, axis=1).astype(jnp.float32)    # (N, L*2*n_h, n, n)
        in_specs.append(
            pl.BlockSpec((nets_per_block, n_layers_att * 2 * n_h, n, n),
                         lambda i: (i, 0, 0, 0)))
        args.append(wpk)
        # TODO(synk): for large L_att / rows on v7x (64 MiB VMEM), stream the
        # per-layer weight slabs with a manual double buffer (pl.ANY +
        # pltpu.make_async_copy) instead of keeping the whole stack resident.

    in_specs.append(pl.BlockSpec((nets_per_block, rows, n_in), lambda i: (i, 0, 0)))
    args.append(x2)

    kernel = functools.partial(_fused_nn_kernel, n_h=n_h, n_t=n_t,
                               n_layers_att=n_layers_att)

    out = pl.pallas_call(
        kernel,
        out_shape=jax.ShapeDtypeStruct((N_net, rows, n), jnp.float32),
        grid=grid,
        in_specs=in_specs,
        out_specs=pl.BlockSpec((nets_per_block, rows, n), lambda i: (i, 0, 0)),
        compiler_params=pltpu.CompilerParams(
            dimension_semantics=("parallel",)),
    )(*args)

    return out.reshape(N_net, d, n_t, n)


# --------------------------------------------------------------------------
# Pure-JAX reference (mirrors the PyTorch einsums exactly)
# --------------------------------------------------------------------------
def nn_reference(params, x):
    s = jnp.einsum("Nji,Ndti->Ndtj", params["W"], x)
    n_t = x.shape[2]
    theta = jnp.tril(jnp.ones((n_t, n_t), jnp.float32))
    for Q, E in zip(params["Qs"], params["Es"]):
        omega = jnp.einsum("Nbti,Nhij,Nbuj->Nbhtu", s, Q, s)
        s = jnp.einsum("Nbhtu,tu,Nhij,Nbuj->Nbti", omega, theta, E, s)
    return s


# --------------------------------------------------------------------------
# Main
# --------------------------------------------------------------------------
if __name__ == "__main__":
    # Small shapes consistent with the module.
    N_net, d, n_t, n_in, n, n_h, num_layers = 2, 2, 8, 4, 32, 2, 3
    W_std = E_std = Q_std = 0.02

    key = jax.random.PRNGKey(0)
    k_x, k_w, *k_layers = jax.random.split(key, 2 + 2 * (num_layers - 1))

    x = jax.random.normal(k_x, (N_net, d, n_t, n_in), dtype=jnp.float32)

    params = {
        "W": W_std * jax.random.normal(k_w, (N_net, n, n_in), dtype=jnp.float32),
        "Qs": [],
        "Es": [],
    }
    for li in range(num_layers - 1):
        kq, ke = k_layers[2 * li], k_layers[2 * li + 1]
        params["Qs"].append(
            Q_std * jax.random.normal(kq, (N_net, n_h, n, n), dtype=jnp.float32)
        )
        params["Es"].append(
            E_std * jax.random.normal(ke, (N_net, n_h, n, n), dtype=jnp.float32)
        )

    out = jax.block_until_ready(nn_forward(params, x))
    ref = jax.block_until_ready(nn_reference(params, x))

    assert out.shape == (N_net, d, n_t, n), out.shape
    assert jnp.allclose(out, ref, atol=1e-5, rtol=1e-4), float(
        jnp.max(jnp.abs(out - ref))
    )
    print("KERNEL_OK")
</pallas_src>

<mosaic_0001>
module attributes {stable_mosaic.version = 11 : i64} {
  func.func @_fused_nn_kernel(%arg0: i32, %arg1: memref<2x4x32xf32, #tpu.memory_space<vmem>>, %arg2: memref<2x8x32x32xf32, #tpu.memory_space<vmem>>, %arg3: memref<2x16x4xf32, #tpu.memory_space<vmem>>, %arg4: memref<2x16x32xf32, #tpu.memory_space<vmem>>) attributes {dimension_semantics = [#tpu.dimension_semantics<parallel>], iteration_bounds = array<i64: 1>, scalar_prefetch = 0 : i64, scratch_operands = 0 : i64, tpu.core_type = #tpu.core_type<tc>, window_params = [{transform_indices = @transform_0, window_bounds = array<i64: 2, 4, 32>}, {transform_indices = @transform_1, window_bounds = array<i64: 2, 8, 32, 32>}, {transform_indices = @transform_2, window_bounds = array<i64: 2, 16, 4>}, {transform_indices = @transform_3, window_bounds = array<i64: 2, 16, 32>}]} {
    %0 = tpu.iota {dimensions = array<i32: 0>} : vector<16x16xi32>
    %1 = tpu.iota {dimensions = array<i32: 1>} : vector<16x16xi32>
    %2 = arith.cmpi sle, %1, %0 : vector<16x16xi32>
    %c0_i32 = arith.constant 0 : i32
    %3 = vector.broadcast %c0_i32 : i32 to vector<16x16xi32>
    %4 = arith.cmpi sge, %1, %3 : vector<16x16xi32>
    %5 = arith.andi %2, %4 : vector<16x16xi1>
    %c8_i32 = arith.constant 8 : i32
    %6 = vector.broadcast %c8_i32 : i32 to vector<16x16xi32>
    %7 = arith.cmpi slt, %0, %6 : vector<16x16xi32>
    %8 = arith.andi %5, %7 : vector<16x16xi1>
    %c8_i32_0 = arith.constant 8 : i32
    %9 = vector.broadcast %c8_i32_0 : i32 to vector<16x16xi32>
    %10 = arith.cmpi sge, %1, %9 : vector<16x16xi32>
    %11 = arith.andi %2, %10 : vector<16x16xi1>
    %c16_i32 = arith.constant 16 : i32
    %12 = vector.broadcast %c16_i32 : i32 to vector<16x16xi32>
    %13 = arith.cmpi slt, %0, %12 : vector<16x16xi32>
    %14 = arith.andi %11, %13 : vector<16x16xi1>
    %15 = arith.ori %8, %14 : vector<16x16xi1>
    %c0 = arith.constant 0 : index
    %c0_1 = arith.constant 0 : index
    %c0_2 = arith.constant 0 : index
    %16 = vector.load %arg3[%c0, %c0_1, %c0_2] : memref<2x16x4xf32, #tpu.memory_space<vmem>>, vector<1x16x4xf32>
    %17 = vector.shape_cast %16 : vector<1x16x4xf32> to vector<16x4xf32>
    %c0_3 = arith.constant 0 : index
    %c0_4 = arith.constant 0 : index
    %c0_5 = arith.constant 0 : index
    %18 = vector.load %arg1[%c0_3, %c0_4, %c0_5] : memref<2x4x32xf32, #tpu.memory_space<vmem>>, vector<1x4x32xf32>
    %19 = vector.shape_cast %18 : vector<1x4x32xf32> to vector<4x32xf32>
    %cst = arith.constant dense<0.000000e+00> : vector<16x32xf32>
    %20 = tpu.matmul %17, %19, %cst {dimension_numbers = #tpu.dot_dimension_numbers<[1], [0], [0], [1], [0, 0, 1, 1], [], []>} : vector<16x4xf32>, vector<4x32xf32>, vector<16x32xf32> -> vector<16x32xf32>
    %21 = tpu.transpose %20, [1, 0] : vector<16x32xf32> -> vector<32x16xf32>
    %c0_6 = arith.constant 0 : index
    %c0_7 = arith.constant 0 : index
    %c0_8 = arith.constant 0 : index
    %c0_9 = arith.constant 0 : index
    %22 = vector.load %arg2[%c0_6, %c0_7, %c0_8, %c0_9] : memref<2x8x32x32xf32, #tpu.memory_space<vmem>>, vector<1x1x32x32xf32>
    %23 = vector.shape_cast %22 : vector<1x1x32x32xf32> to vector<32x32xf32>
    %cst_10 = arith.constant dense<0.000000e+00> : vector<16x32xf32>
    %24 = tpu.matmul %20, %23, %cst_10 {dimension_numbers = #tpu.dot_dimension_numbers<[1], [0], [0], [1], [0, 0, 1, 1], [], []>} : vector<16x32xf32>, vector<32x32xf32>, vector<16x32xf32> -> vector<16x32xf32>
    %c0_11 = arith.constant 0 : index
    %c2 = arith.constant 2 : index
    %c0_12 = arith.constant 0 : index
    %c0_13 = arith.constant 0 : index
    %25 = vector.load %arg2[%c0_11, %c2, %c0_12, %c0_13] : memref<2x8x32x32xf32, #tpu.memory_space<vmem>>, vector<1x1x32x32xf32>
    %26 = vector.shape_cast %25 : vector<1x1x32x32xf32> to vector<32x32xf32>
    %cst_14 = arith.constant dense<0.000000e+00> : vector<16x32xf32>
    %27 = tpu.matmul %20, %26, %cst_14 {dimension_numbers = #tpu.dot_dimension_numbers<[1], [0], [0], [1], [0, 0, 1, 1], [], []>} : vector<16x32xf32>, vector<32x32xf32>, vector<16x32xf32> -> vector<16x32xf32>
    %cst_15 = arith.constant dense<0.000000e+00> : vector<16x16xf32>
    %28 = tpu.matmul %24, %21, %cst_15 {dimension_numbers = #tpu.dot_dimension_numbers<[1], [0], [0], [1], [0, 0, 1, 1], [], []>} : vector<16x32xf32>, vector<32x16xf32>, vector<16x16xf32> -> vector<16x16xf32>
    %cst_16 = arith.constant 0.000000e+00 : f32
    %29 = vector.broadcast %cst_16 : f32 to vector<16x16xf32>
    %30 = arith.select %15, %28, %29 : vector<16x16xi1>, vector<16x16xf32>
    %cst_17 = arith.constant dense<0.000000e+00> : vector<16x32xf32>
    %31 = tpu.matmul %30, %27, %cst_17 {dimension_numbers = #tpu.dot_dimension_numbers<[1], [0], [0], [1], [0, 0, 1, 1], [], []>} : vector<16x16xf32>, vector<16x32xf32>, vector<16x32xf32> -> vector<16x32xf32>
    %c0_18 = arith.constant 0 : index
    %c1 = arith.constant 1 : index
    %c0_19 = arith.constant 0 : index
    %c0_20 = arith.constant 0 : index
    %32 = vector.load %arg2[%c0_18, %c1, %c0_19, %c0_20] : memref<2x8x32x32xf32, #tpu.memory_space<vmem>>, vector<1x1x32x32xf32>
    %33 = vector.shape_cast %32 : vector<1x1x32x32xf32> to vector<32x32xf32>
    %cst_21 = arith.constant dense<0.000000e+00> : vector<16x32xf32>
    %34 = tpu.matmul %20, %33, %cst_21 {dimension_numbers = #tpu.dot_dimension_numbers<[1], [0], [0], [1], [0, 0, 1, 1], [], []>} : vector<16x32xf32>, vector<32x32xf32>, vector<16x32xf32> -> vector<16x32xf32>
    %c0_22 = arith.constant 0 : index
    %c3 = arith.constant 3 : index
    %c0_23 = arith.constant 0 : index
    %c0_24 = arith.constant 0 : index
    %35 = vector.load %arg2[%c0_22, %c3, %c0_23, %c0_24] : memref<2x8x32x32xf32, #tpu.memory_space<vmem>>, vector<1x1x32x32xf32>
    %36 = vector.shape_cast %35 : vector<1x1x32x32xf32> to vector<32x32xf32>
    %cst_25 = arith.constant dense<0.000000e+00> : vector<16x32xf32>
    %37 = tpu.matmul %20, %36, %cst_25 {dimension_numbers = #tpu.dot_dimension_numbers<[1], [0], [0], [1], [0, 0, 1, 1], [], []>} : vector<16x32xf32>, vector<32x32xf32>, vector<16x32xf32> -> vector<16x32xf32>
    %cst_26 = arith.constant dense<0.000000e+00> : vector<16x16xf32>
    %38 = tpu.matmul %34, %21, %cst_26 {dimension_numbers = #tpu.dot_dimension_numbers<[1], [0], [0], [1], [0, 0, 1, 1], [], []>} : vector<16x32xf32>, vector<32x16xf32>, vector<16x16xf32> -> vector<16x16xf32>
    %cst_27 = arith.constant 0.000000e+00 : f32
    %39 = vector.broadcast %cst_27 : f32 to vector<16x16xf32>
    %40 = arith.select %15, %38, %39 : vector<16x16xi1>, vector<16x16xf32>
    %cst_28 = arith.constant dense<0.000000e+00> : vector<16x32xf32>
    %41 = tpu.matmul %40, %37, %cst_28 {dimension_numbers = #tpu.dot_dimension_numbers<[1], [0], [0], [1], [0, 0, 1, 1], [], []>} : vector<16x16xf32>, vector<16x32xf32>, vector<16x32xf32> -> vector<16x32xf32>
    %42 = arith.addf %31, %41 : vector<16x32xf32>
    %43 = tpu.transpose %42, [1, 0] : vector<16x32xf32> -> vector<32x16xf32>
    %c0_29 = arith.constant 0 : index
    %c4 = arith.constant 4 : index
    %c0_30 = arith.constant 0 : index
    %c0_31 = arith.constant 0 : index
    %44 = vector.load %arg2[%c0_29, %c4, %c0_30, %c0_31] : memref<2x8x32x32xf32, #tpu.memory_space<vmem>>, vector<1x1x32x32xf32>
    %45 = vector.shape_cast %44 : vector<1x1x32x32xf32> to vector<32x32xf32>
    %cst_32 = arith.constant dense<0.000000e+00> : vector<16x32xf32>
    %46 = tpu.matmul %42, %45, %cst_32 {dimension_numbers = #tpu.dot_dimension_numbers<[1], [0], [0], [1], [0, 0, 1, 1], [], []>} : vector<16x32xf32>, vector<32x32xf32>, vector<16x32xf32> -> vector<16x32xf32>
    %c0_33 = arith.constant 0 : index
    %c6 = arith.constant 6 : index
    %c0_34 = arith.constant 0 : index
    %c0_35 = arith.constant 0 : index
    %47 = vector.load %arg2[%c0_33, %c6, %c0_34, %c0_35] : memref<2x8x32x32xf32, #tpu.memory_space<vmem>>, vector<1x1x32x32xf32>
    %48 = vector.shape_cast %47 : vector<1x1x32x32xf32> to vector<32x32xf32>
    %cst_36 = arith.constant dense<0.000000e+00> : vector<16x32xf32>
    %49 = tpu.matmul %42, %48, %cst_36 {dimension_numbers = #tpu.dot_dimension_numbers<[1], [0], [0], [1], [0, 0, 1, 1], [], []>} : vector<16x32xf32>, vector<32x32xf32>, vector<16x32xf32> -> vector<16x32xf32>
    %cst_37 = arith.constant dense<0.000000e+00> : vector<16x16xf32>
    %50 = tpu.matmul %46, %43, %cst_37 {dimension_numbers = #tpu.dot_dimension_numbers<[1], [0], [0], [1], [0, 0, 1, 1], [], []>} : vector<16x32xf32>, vector<32x16xf32>, vector<16x16xf32> -> vector<16x16xf32>
    %cst_38 = arith.constant 0.000000e+00 : f32
    %51 = vector.broadcast %cst_38 : f32 to vector<16x16xf32>
    %52 = arith.select %15, %50, %51 : vector<16x16xi1>, vector<16x16xf32>
    %cst_39 = arith.constant dense<0.000000e+00> : vector<16x32xf32>
    %53 = tpu.matmul %52, %49, %cst_39 {dimension_numbers = #tpu.dot_dimension_numbers<[1], [0], [0], [1], [0, 0, 1, 1], [], []>} : vector<16x16xf32>, vector<16x32xf32>, vector<16x32xf32> -> vector<16x32xf32>
    %c0_40 = arith.constant 0 : index
    %c5 = arith.constant 5 : index
    %c0_41 = arith.constant 0 : index
    %c0_42 = arith.constant 0 : index
    %54 = vector.load %arg2[%c0_40, %c5, %c0_41, %c0_42] : memref<2x8x32x32xf32, #tpu.memory_space<vmem>>, vector<1x1x32x32xf32>
    %55 = vector.shape_cast %54 : vector<1x1x32x32xf32> to vector<32x32xf32>
    %cst_43 = arith.constant dense<0.000000e+00> : vector<16x32xf32>
    %56 = tpu.matmul %42, %55, %cst_43 {dimension_numbers = #tpu.dot_dimension_numbers<[1], [0], [0], [1], [0, 0, 1, 1], [], []>} : vector<16x32xf32>, vector<32x32xf32>, vector<16x32xf32> -> vector<16x32xf32>
    %c0_44 = arith.constant 0 : index
    %c7 = arith.constant 7 : index
    %c0_45 = arith.constant 0 : index
    %c0_46 = arith.constant 0 : index
    %57 = vector.load %arg2[%c0_44, %c7, %c0_45, %c0_46] : memref<2x8x32x32xf32, #tpu.memory_space<vmem>>, vector<1x1x32x32xf32>
    %58 = vector.shape_cast %57 : vector<1x1x32x32xf32> to vector<32x32xf32>
    %cst_47 = arith.constant dense<0.000000e+00> : vector<16x32xf32>
    %59 = tpu.matmul %42, %58, %cst_47 {dimension_numbers = #tpu.dot_dimension_numbers<[1], [0], [0], [1], [0, 0, 1, 1], [], []>} : vector<16x32xf32>, vector<32x32xf32>, vector<16x32xf32> -> vector<16x32xf32>
    %cst_48 = arith.constant dense<0.000000e+00> : vector<16x16xf32>
    %60 = tpu.matmul %56, %43, %cst_48 {dimension_numbers = #tpu.dot_dimension_numbers<[1], [0], [0], [1], [0, 0, 1, 1], [], []>} : vector<16x32xf32>, vector<32x16xf32>, vector<16x16xf32> -> vector<16x16xf32>
    %cst_49 = arith.constant 0.000000e+00 : f32
    %61 = vector.broadcast %cst_49 : f32 to vector<16x16xf32>
    %62 = arith.select %15, %60, %61 : vector<16x16xi1>, vector<16x16xf32>
    %cst_50 = arith.constant dense<0.000000e+00> : vector<16x32xf32>
    %63 = tpu.matmul %62, %59, %cst_50 {dimension_numbers = #tpu.dot_dimension_numbers<[1], [0], [0], [1], [0, 0, 1, 1], [], []>} : vector<16x16xf32>, vector<16x32xf32>, vector<16x32xf32> -> vector<16x32xf32>
    %64 = arith.addf %53, %63 : vector<16x32xf32>
    %c0_51 = arith.constant 0 : index
    %c0_52 = arith.constant 0 : index
    %c0_53 = arith.constant 0 : index
    %65 = vector.load %arg4[%c0_51, %c0_52, %c0_53] : memref<2x16x32xf32, #tpu.memory_space<vmem>>, vector<1x16x32xf32>
    %66 = vector.shape_cast %65 : vector<1x16x32xf32> to vector<16x32xf32>
    %67 = vector.shape_cast %64 : vector<16x32xf32> to vector<1x16x32xf32>
    tpu.vector_store %arg4[%c0_51, %c0_52, %c0_53], %67 {strides = array<i32>} : memref<2x16x32xf32, #tpu.memory_space<vmem>>, vector<1x16x32xf32>,
    %c1_54 = arith.constant 1 : index
    %c0_55 = arith.constant 0 : index
    %c0_56 = arith.constant 0 : index
    %68 = vector.load %arg3[%c1_54, %c0_55, %c0_56] : memref<2x16x4xf32, #tpu.memory_space<vmem>>, vector<1x16x4xf32>
    %69 = vector.shape_cast %68 : vector<1x16x4xf32> to vector<16x4xf32>
    %c1_57 = arith.constant 1 : index
    %c0_58 = arith.constant 0 : index
    %c0_59 = arith.constant 0 : index
    %70 = vector.load %arg1[%c1_57, %c0_58, %c0_59] : memref<2x4x32xf32, #tpu.memory_space<vmem>>, vector<1x4x32xf32>
    %71 = vector.shape_cast %70 : vector<1x4x32xf32> to vector<4x32xf32>
    %cst_60 = arith.constant dense<0.000000e+00> : vector<16x32xf32>
    %72 = tpu.matmul %69, %71, %cst_60 {dimension_numbers = #tpu.dot_dimension_numbers<[1], [0], [0], [1], [0, 0, 1, 1], [], []>} : vector<16x4xf32>, vector<4x32xf32>, vector<16x32xf32> -> vector<16x32xf32>
    %73 = tpu.transpose %72, [1, 0] : vector<16x32xf32> -> vector<32x16xf32>
    %c1_61 = arith.constant 1 : index
    %c0_62 = arith.constant 0 : index
    %c0_63 = arith.constant 0 : index
    %c0_64 = arith.constant 0 : index
    %74 = vector.load %arg2[%c1_61, %c0_62, %c0_63, %c0_64] : memref<2x8x32x32xf32, #tpu.memory_space<vmem>>, vector<1x1x32x32xf32>
    %75 = vector.shape_cast %74 : vector<1x1x32x32xf32> to vector<32x32xf32>
    %cst_65 = arith.constant dense<0.000000e+00> : vector<16x32xf32>
    %76 = tpu.matmul %72, %75, %cst_65 {dimension_numbers = #tpu.dot_dimension_numbers<[1], [0], [0], [1], [0, 0, 1, 1], [], []>} : vector<16x32xf32>, vector<32x32xf32>, vector<16x32xf32> -> vector<16x32xf32>
    %c1_66 = arith.constant 1 : index
    %c2_67 = arith.constant 2 : index
    %c0_68 = arith.constant 0 : index
    %c0_69 = arith.constant 0 : index
    %77 = vector.load %arg2[%c1_66, %c2_67, %c0_68, %c0_69] : memref<2x8x32x32xf32, #tpu.memory_space<vmem>>, vector<1x1x32x32xf32>
    %78 = vector.shape_cast %77 : vector<1x1x32x32xf32> to vector<32x32xf32>
    %cst_70 = arith.constant dense<0.000000e+00> : vector<16x32xf32>
    %79 = tpu.matmul %72, %78, %cst_70 {dimension_numbers = #tpu.dot_dimension_numbers<[1], [0], [0], [1], [0, 0, 1, 1], [], []>} : vector<16x32xf32>, vector<32x32xf32>, vector<16x32xf32> -> vector<16x32xf32>
    %cst_71 = arith.constant dense<0.000000e+00> : vector<16x16xf32>
    %80 = tpu.matmul %76, %73, %cst_71 {dimension_numbers = #tpu.dot_dimension_numbers<[1], [0], [0], [1], [0, 0, 1, 1], [], []>} : vector<16x32xf32>, vector<32x16xf32>, vector<16x16xf32> -> vector<16x16xf32>
    %cst_72 = arith.constant 0.000000e+00 : f32
    %81 = vector.broadcast %cst_72 : f32 to vector<16x16xf32>
    %82 = arith.select %15, %80, %81 : vector<16x16xi1>, vector<16x16xf32>
    %cst_73 = arith.constant dense<0.000000e+00> : vector<16x32xf32>
    %83 = tpu.matmul %82, %79, %cst_73 {dimension_numbers = #tpu.dot_dimension_numbers<[1], [0], [0], [1], [0, 0, 1, 1], [], []>} : vector<16x16xf32>, vector<16x32xf32>, vector<16x32xf32> -> vector<16x32xf32>
    %c1_74 = arith.constant 1 : index
    %c1_75 = arith.constant 1 : index
    %c0_76 = arith.constant 0 : index
    %c0_77 = arith.constant 0 : index
    %84 = vector.load %arg2[%c1_74, %c1_75, %c0_76, %c0_77] : memref<2x8x32x32xf32, #tpu.memory_space<vmem>>, vector<1x1x32x32xf32>
    %85 = vector.shape_cast %84 : vector<1x1x32x32xf32> to vector<32x32xf32>
    %cst_78 = arith.constant dense<0.000000e+00> : vector<16x32xf32>
    %86 = tpu.matmul %72, %85, %cst_78 {dimension_numbers = #tpu.dot_dimension_numbers<[1], [0], [0], [1], [0, 0, 1, 1], [], []>} : vector<16x32xf32>, vector<32x32xf32>, vector<16x32xf32> -> vector<16x32xf32>
    %c1_79 = arith.constant 1 : index
    %c3_80 = arith.constant 3 : index
    %c0_81 = arith.constant 0 : index
    %c0_82 = arith.constant 0 : index
    %87 = vector.load %arg2[%c1_79, %c3_80, %c0_81, %c0_82] : memref<2x8x32x32xf32, #tpu.memory_space<vmem>>, vector<1x1x32x32xf32>
    %88 = vector.shape_cast %87 : vector<1x1x32x32xf32> to vector<32x32xf32>
    %cst_83 = arith.constant dense<0.000000e+00> : vector<16x32xf32>
    %89 = tpu.matmul %72, %88, %cst_83 {dimension_numbers = #tpu.dot_dimension_numbers<[1], [0], [0], [1], [0, 0, 1, 1], [], []>} : vector<16x32xf32>, vector<32x32xf32>, vector<16x32xf32> -> vector<16x32xf32>
    %cst_84 = arith.constant dense<0.000000e+00> : vector<16x16xf32>
    %90 = tpu.matmul %86, %73, %cst_84 {dimension_numbers = #tpu.dot_dimension_numbers<[1], [0], [0], [1], [0, 0, 1, 1], [], []>} : vector<16x32xf32>, vector<32x16xf32>, vector<16x16xf32> -> vector<16x16xf32>
    %cst_85 = arith.constant 0.000000e+00 : f32
    %91 = vector.broadcast %cst_85 : f32 to vector<16x16xf32>
    %92 = arith.select %15, %90, %91 : vector<16x16xi1>, vector<16x16xf32>
    %cst_86 = arith.constant dense<0.000000e+00> : vector<16x32xf32>
    %93 = tpu.matmul %92, %89, %cst_86 {dimension_numbers = #tpu.dot_dimension_numbers<[1], [0], [0], [1], [0, 0, 1, 1], [], []>} : vector<16x16xf32>, vector<16x32xf32>, vector<16x32xf32> -> vector<16x32xf32>
    %94 = arith.addf %83, %93 : vector<16x32xf32>
    %95 = tpu.transpose %94, [1, 0] : vector<16x32xf32> -> vector<32x16xf32>
    %c1_87 = arith.constant 1 : index
    %c4_88 = arith.constant 4 : index
    %c0_89 = arith.constant 0 : index
    %c0_90 = arith.constant 0 : index
    %96 = vector.load %arg2[%c1_87, %c4_88, %c0_89, %c0_90] : memref<2x8x32x32xf32, #tpu.memory_space<vmem>>, vector<1x1x32x32xf32>
    %97 = vector.shape_cast %96 : vector<1x1x32x32xf32> to vector<32x32xf32>
    %cst_91 = arith.constant dense<0.000000e+00> : vector<16x32xf32>
    %98 = tpu.matmul %94, %97, %cst_91 {dimension_numbers = #tpu.dot_dimension_numbers<[1], [0], [0], [1], [0, 0, 1, 1], [], []>} : vector<16x32xf32>, vector<32x32xf32>, vector<16x32xf32> -> vector<16x32xf32>
    %c1_92 = arith.constant 1 : index
    %c6_93 = arith.constant 6 : index
    %c0_94 = arith.constant 0 : index
    %c0_95 = arith.constant 0 : index
    %99 = vector.load %arg2[%c1_92, %c6_93, %c0_94, %c0_95] : memref<2x8x32x32xf32, #tpu.memory_space<vmem>>, vector<1x1x32x32xf32>
    %100 = vector.shape_cast %99 : vector<1x1x32x32xf32> to vector<32x32xf32>
    %cst_96 = arith.constant dense<0.000000e+00> : vector<16x32xf32>
    %101 = tpu.matmul %94, %100, %cst_96 {dimension_numbers = #tpu.dot_dimension_numbers<[1], [0], [0], [1], [0, 0, 1, 1], [], []>} : vector<16x32xf32>, vector<32x32xf32>, vector<16x32xf32> -> vector<16x32xf32>
    %cst_97 = arith.constant dense<0.000000e+00> : vector<16x16xf32>
    %102 = tpu.matmul %98, %95, %cst_97 {dimension_numbers = #tpu.dot_dimension_numbers<[1], [0], [0], [1], [0, 0, 1, 1], [], []>} : vector<16x32xf32>, vector<32x16xf32>, vector<16x16xf32> -> vector<16x16xf32>
    %cst_98 = arith.constant 0.000000e+00 : f32
    %103 = vector.broadcast %cst_98 : f32 to vector<16x16xf32>
    %104 = arith.select %15, %102, %103 : vector<16x16xi1>, vector<16x16xf32>
    %cst_99 = arith.constant dense<0.000000e+00> : vector<16x32xf32>
    %105 = tpu.matmul %104, %101, %cst_99 {dimension_numbers = #tpu.dot_dimension_numbers<[1], [0], [0], [1], [0, 0, 1, 1], [], []>} : vector<16x16xf32>, vector<16x32xf32>, vector<16x32xf32> -> vector<16x32xf32>
    %c1_100 = arith.constant 1 : index
    %c5_101 = arith.constant 5 : index
    %c0_102 = arith.constant 0 : index
    %c0_103 = arith.constant 0 : index
    %106 = vector.load %arg2[%c1_100, %c5_101, %c0_102, %c0_103] : memref<2x8x32x32xf32, #tpu.memory_space<vmem>>, vector<1x1x32x32xf32>
    %107 = vector.shape_cast %106 : vector<1x1x32x32xf32> to vector<32x32xf32>
    %cst_104 = arith.constant dense<0.000000e+00> : vector<16x32xf32>
    %108 = tpu.matmul %94, %107, %cst_104 {dimension_numbers = #tpu.dot_dimension_numbers<[1], [0], [0], [1], [0, 0, 1, 1], [], []>} : vector<16x32xf32>, vector<32x32xf32>, vector<16x32xf32> -> vector<16x32xf32>
    %c1_105 = arith.constant 1 : index
    %c7_106 = arith.constant 7 : index
    %c0_107 = arith.constant 0 : index
    %c0_108 = arith.constant 0 : index
    %109 = vector.load %arg2[%c1_105, %c7_106, %c0_107, %c0_108] : memref<2x8x32x32xf32, #tpu.memory_space<vmem>>, vector<1x1x32x32xf32>
    %110 = vector.shape_cast %109 : vector<1x1x32x32xf32> to vector<32x32xf32>
    %cst_109 = arith.constant dense<0.000000e+00> : vector<16x32xf32>
    %111 = tpu.matmul %94, %110, %cst_109 {dimension_numbers = #tpu.dot_dimension_numbers<[1], [0], [0], [1], [0, 0, 1, 1], [], []>} : vector<16x32xf32>, vector<32x32xf32>, vector<16x32xf32> -> vector<16x32xf32>
    %cst_110 = arith.constant dense<0.000000e+00> : vector<16x16xf32>
    %112 = tpu.matmul %108, %95, %cst_110 {dimension_numbers = #tpu.dot_dimension_numbers<[1], [0], [0], [1], [0, 0, 1, 1], [], []>} : vector<16x32xf32>, vector<32x16xf32>, vector<16x16xf32> -> vector<16x16xf32>
    %cst_111 = arith.constant 0.000000e+00 : f32
    %113 = vector.broadcast %cst_111 : f32 to vector<16x16xf32>
    %114 = arith.select %15, %112, %113 : vector<16x16xi1>, vector<16x16xf32>
    %cst_112 = arith.constant dense<0.000000e+00> : vector<16x32xf32>
    %115 = tpu.matmul %114, %111, %cst_112 {dimension_numbers = #tpu.dot_dimension_numbers<[1], [0], [0], [1], [0, 0, 1, 1], [], []>} : vector<16x16xf32>, vector<16x32xf32>, vector<16x32xf32> -> vector<16x32xf32>
    %116 = arith.addf %105, %115 : vector<16x32xf32>
    %c1_113 = arith.constant 1 : index
    %c0_114 = arith.constant 0 : index
    %c0_115 = arith.constant 0 : index
    %117 = vector.load %arg4[%c1_113, %c0_114, %c0_115] : memref<2x16x32xf32, #tpu.memory_space<vmem>>, vector<1x16x32xf32>
    %118 = vector.shape_cast %117 : vector<1x16x32xf32> to vector<16x32xf32>
    %119 = vector.shape_cast %116 : vector<16x32xf32> to vector<1x16x32xf32>
    tpu.vector_store %arg4[%c1_113, %c0_114, %c0_115], %119 {strides = array<i32>} : memref<2x16x32xf32, #tpu.memory_space<vmem>>, vector<1x16x32xf32>,
    return
  }
  func.func @transform_0(%arg0: i32) -> (i32, i32, i32) {
    %c0_i32 = arith.constant 0 : i32
    %c0_i32_0 = arith.constant 0 : i32
    %c0_i32_1 = arith.constant 0 : i32
    return %arg0, %c0_i32, %c0_i32_0 : i32, i32, i32
  }
  func.func @transform_1(%arg0: i32) -> (i32, i32, i32, i32) {
    %c0_i32 = arith.constant 0 : i32
    %c0_i32_0 = arith.constant 0 : i32
    %c0_i32_1 = arith.constant 0 : i32
    %c0_i32_2 = arith.constant 0 : i32
    return %arg0, %c0_i32, %c0_i32_0, %c0_i32_1 : i32, i32, i32, i32
  }
  func.func @transform_2(%arg0: i32) -> (i32, i32, i32) {
    %c0_i32 = arith.constant 0 : i32
    %c0_i32_0 = arith.constant 0 : i32
    %c0_i32_1 = arith.constant 0 : i32
    return %arg0, %c0_i32, %c0_i32_0 : i32, i32, i32
  }
  func.func @transform_3(%arg0: i32) -> (i32, i32, i32) {
    %c0_i32 = arith.constant 0 : i32
    %c0_i32_0 = arith.constant 0 : i32
    %c0_i32_1 = arith.constant 0 : i32
    return %arg0, %c0_i32, %c0_i32_0 : i32, i32, i32
  }
}

</mosaic_0001>

<llo_original>
// kernel: tpu_custom_call.1
$region0: #{tpu_custom_call.1}
  #allocation0 [shape = 'u32[]', space=smem, size = 0x4, offset = 0x4, fixed_abs, tag = 'smem constant byte address 0x4 - core index']
  #allocation1 [shape = 'u32[144,128]{1,0:T(1,128)}', space=vmem, size = 0x12000, scoped, tag = 'internal scratch']
  %s0 = inlined_call_operand.vmem [shape: f32[2,4,32], index: 0, kind: input, shape index: {}]
  %s1 = inlined_call_operand.hbm [shape: f32[2,8,32,32], index: 1, kind: input, shape index: {}]
  %s2 = inlined_call_operand.vmem [shape: f32[2,16,4], index: 2, kind: input, shape index: {}]
  %s3 = inlined_call_operand.hbm [shape: f32[2,16,32], index: 3, kind: output, shape index: {}]
  %s4 = sld [smem:[#allocation0]]
  $region26: #{tpu_custom_call.1} parent=0
    _
  %s6 = ssub.s32 1, %s4
  %s7 = scalar_select 0, %s6, %s4
  $region1: #{tpu_custom_call.1} parent=0
    #allocation2 [shape = 'u8[262144]{0}', space=vmem, size = 0x40000, scoped, tag = 'input window, operand 1, single buffered']
    #allocation3 [shape = 's32[1]{0}', space=sflag, size = 0x4, scoped, tag = 'scoped memory for tpu_custom_call.1']
    #allocation4 [shape = 's32[1]{0}', space=sflag, size = 0x4, scoped, tag = 'scoped memory for tpu_custom_call.1']
    #allocation5 [shape = 'u8[16384]{0}', space=vmem, size = 0x4000, scoped, tag = 'output window, operand 0, single buffered']
    %8 = vsyncpa [#allocation3], 0
    %9 = vsyncpa [#allocation4], 0
    // Predicated region
    $region2: #{tpu_custom_call.1} parent=1 // pred_check
      _
    $region3: #{tpu_custom_call.1} parent=1 // pred_check_branch
      %11 = sbr.rel (0) target = $region5
    $region4: #{tpu_custom_call.1} parent=1 // pred_region
      _
    $region5: #{tpu_custom_call.1} parent=1 // pred_fallthru
      _
    // Predicated region
    $region6: #{tpu_custom_call.1} parent=1 // pred_check
      _
    $region7: #{tpu_custom_call.1} parent=1 // pred_check_branch
      %13 = sbr.rel (0) target = $region9
    $region8: #{tpu_custom_call.1} parent=1 // pred_region
      %s15 = ssub.s32 8192, 8192
      %16 = vsyncadd [#allocation3], %s15
      %s17 = sshll.u32 [#allocation2], 4
      %s18 = int_to_ptr.vmem [resolvable:$true] %s17
      %23 = dma.hbm_to_vmem [thread:$0]  %s1, 8192, %s18, [#allocation3], 128, 128, 8
    $region9: #{tpu_custom_call.1} parent=1 // pred_fallthru
      _
    // Predicated region
    $region10: #{tpu_custom_call.1} parent=1 // pred_check
      _
    $region11: #{tpu_custom_call.1} parent=1 // pred_check_branch
      %25 = sbr.rel (0) target = $region13
    $region12: #{tpu_custom_call.1} parent=1 // pred_region
      _
    $region13: #{tpu_custom_call.1} parent=1 // pred_fallthru
      _
    // Predicated region
    $region14: #{tpu_custom_call.1} parent=1 // pred_check
      _
    $region15: #{tpu_custom_call.1} parent=1 // pred_check_branch
      %27 = sbr.rel (0) target = $region17
    $region16: #{tpu_custom_call.1} parent=1 // pred_region
      %28 = dma.done [#allocation3], 8192
    $region17: #{tpu_custom_call.1} parent=1 // pred_fallthru
      _
    %v29 = vlaneseq
    %v30 = vshrl.u32 %v29, 7
    %v31 = vadd.s32 %v30, 8
    %v32 = vlaneseq
    %v33 = vand.u32 %v32, 127
    %vm34 = vcmp.le.s32.totalorder %v33, %v30
    %vm35 = vcmp.le.s32.totalorder %v33, %v31
    %vm36 = vcmp.ge.s32.totalorder %v33, 0
    %vm37 = vmand %vm34, %vm36
    %vm38 = vmand %vm35, %vm36
    %vm39 = vcmp.lt.s32.totalorder %v30, 8
    %vm40 = vcmp.lt.s32.totalorder %v31, 8
    %vm41 = vmand %vm37, %vm39
    %vm42 = vmand %vm38, %vm40
    %vm43 = vcmp.ge.s32.totalorder %v33, 8
    %vm44 = vmand %vm34, %vm43
    %vm45 = vmand %vm35, %vm43
    %vm46 = vcmp.lt.s32.totalorder %v30, 16
    %vm47 = vcmp.lt.s32.totalorder %v31, 16
    %vm48 = vmand %vm44, %vm46
    %vm49 = vmand %vm45, %vm47
    %vm50 = vmor %vm41, %vm48
    %vm51 = vmor %vm42, %vm49
    %v52 = vld [vmem:[%s2] sm:$0xff]
    %v53 = vld [vmem:[%s2 + $0x8] sm:$0xff]
    %v54 = vld [vmem:[%s0] sm:$0xf]
    %vm55 = vcmask 31744
    %v57 = vsel %vm55, %v52, 0
    %v60 = vsel %vm55, %v53, 0
    %vm62 = vcmask 1043456
    %v64 = vsel %vm62, %v54, 0
    %66 = vmatprep.subr.mxu0 0.0
    %67 = vmatpush1.msra.mxu0 %v64
    %68 = vmatprep.subr.mxu0 0.0
    %69 = vmatpush1.msra.mxu0 0.0
    %70 = vmatprep.subr.mxu0 0.0
    %71 = vmatpush1.msra.mxu0 0.0
    %72 = vmatprep.subr.mxu0 0.0
    %73 = vmatpush1.msra.mxu0 0.0
    %74 = vmatprep.subr.mxu0 0.0
    %75 = vmatpush1.msra.mxu0 0.0
    %76 = vmatprep.subr.mxu0 0.0
    %77 = vmatpush1.msra.mxu0 0.0
    %78 = vmatprep.subr.mxu0 0.0
    %79 = vmatpush1.msra.mxu0 0.0
    %80 = vmatprep.subr.mxu0 0.0
    %81 = vmatpush1.msra.mxu0 0.0
    %82 = vmatprep.subr.mxu0 0.0
    %83 = vmatpush1.msra.mxu0 0.0
    %84 = vmatprep.subr.mxu0 0.0
    %85 = vmatpush1.msra.mxu0 0.0
    %86 = vmatprep.subr.mxu0 0.0
    %87 = vmatpush1.msra.mxu0 0.0
    %88 = vmatprep.subr.mxu0 0.0
    %89 = vmatpush1.msra.mxu0 0.0
    %90 = vmatprep.subr.mxu0 0.0
    %91 = vmatpush1.msra.mxu0 0.0
    %92 = vmatprep.subr.mxu0 0.0
    %93 = vmatpush1.msra.mxu0 0.0
    %94 = vmatprep.subr.mxu0 0.0
    %95 = vmatpush1.msra.mxu0 0.0
    %96 = vmatprep.subr.mxu0 0.0
    %97 = vmatpush1.msra.mxu0 0.0
    %98 = vmatprep.subr.mxu0 0.0
    %99 = vmatpush1.msra.mxu0 0.0
    %100 = vmatprep.subr.mxu0 0.0
    %101 = vmatpush1.msra.mxu0 0.0
    %102 = vmatprep.subr.mxu0 0.0
    %103 = vmatpush1.msra.mxu0 0.0
    %104 = vmatprep.subr.mxu0 0.0
    %105 = vmatpush1.msra.mxu0 0.0
    %106 = vmatprep.subr.mxu0 0.0
    %107 = vmatpush1.msra.mxu0 0.0
    %108 = vmatprep.subr.mxu0 0.0
    %109 = vmatpush1.msra.mxu0 0.0
    %110 = vmatprep.subr.mxu0 0.0
    %111 = vmatpush1.msra.mxu0 0.0
    %112 = vmatprep.subr.mxu0 0.0
    %113 = vmatpush1.msra.mxu0 0.0
    %114 = vmatprep.subr.mxu0 0.0
    %115 = vmatpush1.msra.mxu0 0.0
    %116 = vmatprep.subr.mxu0 0.0
    %117 = vmatpush1.msra.mxu0 0.0
    %118 = vmatprep.subr.mxu0 0.0
    %119 = vmatpush1.msra.mxu0 0.0
    %120 = vmatprep.subr.mxu0 0.0
    %121 = vmatpush1.msra.mxu0 0.0
    %122 = vmatprep.subr.mxu0 0.0
    %123 = vmatpush1.msra.mxu0 0.0
    %124 = vmatprep.subr.mxu0 0.0
    %125 = vmatpush1.msra.mxu0 0.0
    %126 = vmatprep.subr.mxu0 0.0
    %127 = vmatpush1.msra.mxu0 0.0
    %128 = vmatprep.subr.mxu0 0.0
    %129 = vmatpush1.msra.mxu0 0.0
    %130 = vmatprep.mubr.f32.mxu0 0.0
    %131 = vmatmul.mubr.f32.gmra.mrb[0].mxu0 %v57
    %v132 = vpop.f32.mrb[0].mxu0
    %v133 = vadd.f32 0.0, %v132
    %v134 = vpop.f32.mrb[0].mxu0
    %135 = vmatprep.mubr.f32.mxu0 0.0
    %136 = vmatmul.mubr.f32.gmra.mrb[0].mxu0 %v60
    %v137 = vpop.f32.mrb[0].mxu0
    %v138 = vadd.f32 0.0, %v137
    %v139 = vpop.f32.mrb[0].mxu0
    %140 = vdwg.mxu0
    %v141 = vld [vmem:[#allocation2] sm:$0xff]
    %v142 = vld [vmem:[#allocation2 + $0x8] sm:$0xff]
    %v143 = vld [vmem:[#allocation2 + $0x10] sm:$0xff]
    %v144 = vld [vmem:[#allocation2 + $0x18] sm:$0xff]
    %vm145 = vcmask 261120
    %v147 = vsel %vm145, %v133, 0
    %v150 = vsel %vm145, %v138, 0
    %152 = vmatprep.subr.mxu0 0.0
    %153 = vmatpush1.msra.mxu0 %v141
    %154 = vmatprep.subr.mxu0 0.0
    %155 = vmatpush1.msra.mxu0 %v142
    %156 = vmatprep.subr.mxu0 0.0
    %157 = vmatpush1.msra.mxu0 %v143
    %158 = vmatprep.subr.mxu0 0.0
    %159 = vmatpush1.msra.mxu0 %v144
    %160 = vmatprep.subr.mxu0 0.0
    %161 = vmatpush1.msra.mxu0 0.0
    %162 = vmatprep.subr.mxu0 0.0
    %163 = vmatpush1.msra.mxu0 0.0
    %164 = vmatprep.subr.mxu0 0.0
    %165 = vmatpush1.msra.mxu0 0.0
    %166 = vmatprep.subr.mxu0 0.0
    %167 = vmatpush1.msra.mxu0 0.0
    %168 = vmatprep.subr.mxu0 0.0
    %169 = vmatpush1.msra.mxu0 0.0
    %170 = vmatprep.subr.mxu0 0.0
    %171 = vmatpush1.msra.mxu0 0.0
    %172 = vmatprep.subr.mxu0 0.0
    %173 = vmatpush1.msra.mxu0 0.0
    %174 = vmatprep.subr.mxu0 0.0
    %175 = vmatpush1.msra.mxu0 0.0
    %176 = vmatprep.subr.mxu0 0.0
    %177 = vmatpush1.msra.mxu0 0.0
    %178 = vmatprep.subr.mxu0 0.0
    %179 = vmatpush1.msra.mxu0 0.0
    %180 = vmatprep.subr.mxu0 0.0
    %181 = vmatpush1.msra.mxu0 0.0
    %182 = vmatprep.subr.mxu0 0.0
    %183 = vmatpush1.msra.mxu0 0.0
    %184 = vmatprep.subr.mxu0 0.0
    %185 = vmatpush1.msra.mxu0 0.0
    %186 = vmatprep.subr.mxu0 0.0
    %187 = vmatpush1.msra.mxu0 0.0
    %188 = vmatprep.subr.mxu0 0.0
    %189 = vmatpush1.msra.mxu0 0.0
    %190 = vmatprep.subr.mxu0 0.0
    %191 = vmatpush1.msra.mxu0 0.0
    %192 = vmatprep.subr.mxu0 0.0
    %193 = vmatpush1.msra.mxu0 0.0
    %194 = vmatprep.subr.mxu0 0.0
    %195 = vmatpush1.msra.mxu0 0.0
    %196 = vmatprep.subr.mxu0 0.0
    %197 = vmatpush1.msra.mxu0 0.0
    %198 = vmatprep.subr.mxu0 0.0
    %199 = vmatpush1.msra.mxu0 0.0
    %200 = vmatprep.subr.mxu0 0.0
    %201 = vmatpush1.msra.mxu0 0.0
    %202 = vmatprep.subr.mxu0 0.0
    %203 = vmatpush1.msra.mxu0 0.0
    %204 = vmatprep.subr.mxu0 0.0
    %205 = vmatpush1.msra.mxu0 0.0
    %206 = vmatprep.subr.mxu0 0.0
    %207 = vmatpush1.msra.mxu0 0.0
    %208 = vmatprep.subr.mxu0 0.0
    %209 = vmatpush1.msra.mxu0 0.0
    %210 = vmatprep.subr.mxu0 0.0
    %211 = vmatpush1.msra.mxu0 0.0
    %212 = vmatprep.subr.mxu0 0.0
    %213 = vmatpush1.msra.mxu0 0.0
    %214 = vmatprep.subr.mxu0 0.0
    %215 = vmatpush1.msra.mxu0 0.0
    %216 = vmatprep.mubr.f32.mxu0 0.0
    %217 = vmatmul.mubr.f32.gmra.mrb[0].mxu0 %v147
    %v218 = vpop.f32.mrb[0].mxu0
    %v219 = vadd.f32 0.0, %v218
    %v220 = vpop.f32.mrb[0].mxu0
    %221 = vmatprep.mubr.f32.mxu0 0.0
    %222 = vmatmul.mubr.f32.gmra.mrb[0].mxu0 %v150
    %v223 = vpop.f32.mrb[0].mxu0
    %v224 = vadd.f32 0.0, %v223
    %v225 = vpop.f32.mrb[0].mxu0
    %226 = vdwg.mxu0
    %s227 = scalar_lea.vmem [#allocation2], 64
    %v228 = vld [vmem:[%s227] sm:$0xff]
    %v229 = vld [vmem:[%s227 + $0x8] sm:$0xff]
    %v230 = vld [vmem:[%s227 + $0x10] sm:$0xff]
    %v231 = vld [vmem:[%s227 + $0x18] sm:$0xff]
    %232 = vmatprep.subr.mxu0 0.0
    %233 = vmatpush1.msra.mxu0 %v228
    %234 = vmatprep.subr.mxu0 0.0
    %235 = vmatpush1.msra.mxu0 %v229
    %236 = vmatprep.subr.mxu0 0.0
    %237 = vmatpush1.msra.mxu0 %v230
    %238 = vmatprep.subr.mxu0 0.0
    %239 = vmatpush1.msra.mxu0 %v231
    %240 = vmatprep.subr.mxu0 0.0
    %241 = vmatpush1.msra.mxu0 0.0
    %242 = vmatprep.subr.mxu0 0.0
    %243 = vmatpush1.msra.mxu0 0.0
    %244 = vmatprep.subr.mxu0 0.0
    %245 = vmatpush1.msra.mxu0 0.0
    %246 = vmatprep.subr.mxu0 0.0
    %247 = vmatpush1.msra.mxu0 0.0
    %248 = vmatprep.subr.mxu0 0.0
    %249 = vmatpush1.msra.mxu0 0.0
    %250 = vmatprep.subr.mxu0 0.0
    %251 = vmatpush1.msra.mxu0 0.0
    %252 = vmatprep.subr.mxu0 0.0
    %253 = vmatpush1.msra.mxu0 0.0
    %254 = vmatprep.subr.mxu0 0.0
    %255 = vmatpush1.msra.mxu0 0.0
    %256 = vmatprep.subr.mxu0 0.0
    %257 = vmatpush1.msra.mxu0 0.0
    %258 = vmatprep.subr.mxu0 0.0
    %259 = vmatpush1.msra.mxu0 0.0
    %260 = vmatprep.subr.mxu0 0.0
    %261 = vmatpush1.msra.mxu0 0.0
    %262 = vmatprep.subr.mxu0 0.0
    %263 = vmatpush1.msra.mxu0 0.0
    %264 = vmatprep.subr.mxu0 0.0
    %265 = vmatpush1.msra.mxu0 0.0
    %266 = vmatprep.subr.mxu0 0.0
    %267 = vmatpush1.msra.mxu0 0.0
    %268 = vmatprep.subr.mxu0 0.0
    %269 = vmatpush1.msra.mxu0 0.0
    %270 = vmatprep.subr.mxu0 0.0
    %271 = vmatpush1.msra.mxu0 0.0
    %272 = vmatprep.subr.mxu0 0.0
    %273 = vmatpush1.msra.mxu0 0.0
    %274 = vmatprep.subr.mxu0 0.0
    %275 = vmatpush1.msra.mxu0 0.0
    %276 = vmatprep.subr.mxu0 0.0
    %277 = vmatpush1.msra.mxu0 0.0
    %278 = vmatprep.subr.mxu0 0.0
    %279 = vmatpush1.msra.mxu0 0.0
    %280 = vmatprep.subr.mxu0 0.0
    %281 = vmatpush1.msra.mxu0 0.0
    %282 = vmatprep.subr.mxu0 0.0
    %283 = vmatpush1.msra.mxu0 0.0
    %284 = vmatprep.subr.mxu0 0.0
    %285 = vmatpush1.msra.mxu0 0.0
    %286 = vmatprep.subr.mxu0 0.0
    %287 = vmatpush1.msra.mxu0 0.0
    %288 = vmatprep.subr.mxu0 0.0
    %289 = vmatpush1.msra.mxu0 0.0
    %290 = vmatprep.subr.mxu0 0.0
    %291 = vmatpush1.msra.mxu0 0.0
    %292 = vmatprep.subr.mxu0 0.0
    %293 = vmatpush1.msra.mxu0 0.0
    %294 = vmatprep.subr.mxu0 0.0
    %295 = vmatpush1.msra.mxu0 0.0
    %296 = vmatprep.mubr.f32.mxu0 0.0
    %297 = vmatmul.mubr.f32.gmra.mrb[0].mxu0 %v147
    %v298 = vpop.f32.mrb[0].mxu0
    %v299 = vadd.f32 0.0, %v298
    %v300 = vpop.f32.mrb[0].mxu0
    %301 = vmatprep.mubr.f32.mxu0 0.0
    %302 = vmatmul.mubr.f32.gmra.mrb[0].mxu0 %v150
    %v303 = vpop.f32.mrb[0].mxu0
    %v304 = vadd.f32 0.0, %v303
    %v305 = vpop.f32.mrb[0].mxu0
    %306 = vdwg.mxu0
    %v308 = vsel %vm145, %v219, 0
    %v311 = vsel %vm145, %v224, 0
    %313 = vmatprep.subr.mxu0 0.0
    %314 = vmatpush1.xpose.msra.mxu0 %v147
    %315 = vmatprep.subr.mxu0 0.0
    %316 = vmatpush1.xpose.msra.mxu0 %v150
    %317 = vmatprep.subr.mxu0 0.0
    %318 = vmatpush1.xpose.msra.mxu0 0.0
    %319 = vmatprep.subr.mxu0 0.0
    %320 = vmatpush1.xpose.msra.mxu0 0.0
    %321 = vmatprep.subr.mxu0 0.0
    %322 = vmatpush1.xpose.msra.mxu0 0.0
    %323 = vmatprep.subr.mxu0 0.0
    %324 = vmatpush1.xpose.msra.mxu0 0.0
    %325 = vmatprep.subr.mxu0 0.0
    %326 = vmatpush1.xpose.msra.mxu0 0.0
    %327 = vmatprep.subr.mxu0 0.0
    %328 = vmatpush1.xpose.msra.mxu0 0.0
    %329 = vmatprep.subr.mxu0 0.0
    %330 = vmatpush1.xpose.msra.mxu0 0.0
    %331 = vmatprep.subr.mxu0 0.0
    %332 = vmatpush1.xpose.msra.mxu0 0.0
    %333 = vmatprep.subr.mxu0 0.0
    %334 = vmatpush1.xpose.msra.mxu0 0.0
    %335 = vmatprep.subr.mxu0 0.0
    %336 = vmatpush1.xpose.msra.mxu0 0.0
    %337 = vmatprep.subr.mxu0 0.0
    %338 = vmatpush1.xpose.msra.mxu0 0.0
    %339 = vmatprep.subr.mxu0 0.0
    %340 = vmatpush1.xpose.msra.mxu0 0.0
    %341 = vmatprep.subr.mxu0 0.0
    %342 = vmatpush1.xpose.msra.mxu0 0.0
    %343 = vmatprep.subr.mxu0 0.0
    %344 = vmatpush1.xpose.msra.mxu0 0.0
    %345 = vmatprep.subr.mxu0 0.0
    %346 = vmatpush1.xpose.msra.mxu0 0.0
    %347 = vmatprep.subr.mxu0 0.0
    %348 = vmatpush1.xpose.msra.mxu0 0.0
    %349 = vmatprep.subr.mxu0 0.0
    %350 = vmatpush1.xpose.msra.mxu0 0.0
    %351 = vmatprep.subr.mxu0 0.0
    %352 = vmatpush1.xpose.msra.mxu0 0.0
    %353 = vmatprep.subr.mxu0 0.0
    %354 = vmatpush1.xpose.msra.mxu0 0.0
    %355 = vmatprep.subr.mxu0 0.0
    %356 = vmatpush1.xpose.msra.mxu0 0.0
    %357 = vmatprep.subr.mxu0 0.0
    %358 = vmatpush1.xpose.msra.mxu0 0.0
    %359 = vmatprep.subr.mxu0 0.0
    %360 = vmatpush1.xpose.msra.mxu0 0.0
    %361 = vmatprep.subr.mxu0 0.0
    %362 = vmatpush1.xpose.msra.mxu0 0.0
    %363 = vmatprep.subr.mxu0 0.0
    %364 = vmatpush1.xpose.msra.mxu0 0.0
    %365 = vmatprep.subr.mxu0 0.0
    %366 = vmatpush1.xpose.msra.mxu0 0.0
    %367 = vmatprep.subr.mxu0 0.0
    %368 = vmatpush1.xpose.msra.mxu0 0.0
    %369 = vmatprep.subr.mxu0 0.0
    %370 = vmatpush1.xpose.msra.mxu0 0.0
    %371 = vmatprep.subr.mxu0 0.0
    %372 = vmatpush1.xpose.msra.mxu0 0.0
    %373 = vmatprep.subr.mxu0 0.0
    %374 = vmatpush1.xpose.msra.mxu0 0.0
    %375 = vmatprep.subr.mxu0 0.0
    %376 = vmatpush1.xpose.msra.mxu0 0.0
    %377 = vmatprep.mubr.f32.mxu0 0.0
    %378 = vmatmul.mubr.f32.gmra.mrb[0].mxu0 %v308
    %v379 = vpop.f32.mrb[0].mxu0
    %v380 = vadd.f32 0.0, %v379
    %v381 = vpop.f32.mrb[0].mxu0
    %382 = vmatprep.mubr.f32.mxu0 0.0
    %383 = vmatmul.mubr.f32.gmra.mrb[0].mxu0 %v311
    %v384 = vpop.f32.mrb[0].mxu0
    %v385 = vadd.f32 0.0, %v384
    %v386 = vpop.f32.mrb[0].mxu0
    %387 = vdwg.mxu0
    %v388 = vsel %vm50, %v380, 0.0
    %v389 = vsel %vm51, %v385, 0.0
    %s390 = scalar_lea.vmem [#allocation2], 32
    %v391 = vld [vmem:[%s390] sm:$0xff]
    %v392 = vld [vmem:[%s390 + $0x8] sm:$0xff]
    %v393 = vld [vmem:[%s390 + $0x10] sm:$0xff]
    %v394 = vld [vmem:[%s390 + $0x18] sm:$0xff]
    %395 = vmatprep.subr.mxu0 0.0
    %396 = vmatpush1.msra.mxu0 %v391
    %397 = vmatprep.subr.mxu0 0.0
    %398 = vmatpush1.msra.mxu0 %v392
    %399 = vmatprep.subr.mxu0 0.0
    %400 = vmatpush1.msra.mxu0 %v393
    %401 = vmatprep.subr.mxu0 0.0
    %402 = vmatpush1.msra.mxu0 %v394
    %403 = vmatprep.subr.mxu0 0.0
    %404 = vmatpush1.msra.mxu0 0.0
    %405 = vmatprep.subr.mxu0 0.0
    %406 = vmatpush1.msra.mxu0 0.0
    %407 = vmatprep.subr.mxu0 0.0
    %408 = vmatpush1.msra.mxu0 0.0
    %409 = vmatprep.subr.mxu0 0.0
    %410 = vmatpush1.msra.mxu0 0.0
    %411 = vmatprep.subr.mxu0 0.0
    %412 = vmatpush1.msra.mxu0 0.0
    %413 = vmatprep.subr.mxu0 0.0
    %414 = vmatpush1.msra.mxu0 0.0
    %415 = vmatprep.subr.mxu0 0.0
    %416 = vmatpush1.msra.mxu0 0.0
    %417 = vmatprep.subr.mxu0 0.0
    %418 = vmatpush1.msra.mxu0 0.0
    %419 = vmatprep.subr.mxu0 0.0
    %420 = vmatpush1.msra.mxu0 0.0
    %421 = vmatprep.subr.mxu0 0.0
    %422 = vmatpush1.msra.mxu0 0.0
    %423 = vmatprep.subr.mxu0 0.0
    %424 = vmatpush1.msra.mxu0 0.0
    %425 = vmatprep.subr.mxu0 0.0
    %426 = vmatpush1.msra.mxu0 0.0
    %427 = vmatprep.subr.mxu0 0.0
    %428 = vmatpush1.msra.mxu0 0.0
    %429 = vmatprep.subr.mxu0 0.0
    %430 = vmatpush1.msra.mxu0 0.0
    %431 = vmatprep.subr.mxu0 0.0
    %432 = vmatpush1.msra.mxu0 0.0
    %433 = vmatprep.subr.mxu0 0.0
    %434 = vmatpush1.msra.mxu0 0.0
    %435 = vmatprep.subr.mxu0 0.0
    %436 = vmatpush1.msra.mxu0 0.0
    %437 = vmatprep.subr.mxu0 0.0
    %438 = vmatpush1.msra.mxu0 0.0
    %439 = vmatprep.subr.mxu0 0.0
    %440 = vmatpush1.msra.mxu0 0.0
    %441 = vmatprep.subr.mxu0 0.0
    %442 = vmatpush1.msra.mxu0 0.0
    %443 = vmatprep.subr.mxu0 0.0
    %444 = vmatpush1.msra.mxu0 0.0
    %445 = vmatprep.subr.mxu0 0.0
    %446 = vmatpush1.msra.mxu0 0.0
    %447 = vmatprep.subr.mxu0 0.0
    %448 = vmatpush1.msra.mxu0 0.0
    %449 = vmatprep.subr.mxu0 0.0
    %450 = vmatpush1.msra.mxu0 0.0
    %451 = vmatprep.subr.mxu0 0.0
    %452 = vmatpush1.msra.mxu0 0.0
    %453 = vmatprep.subr.mxu0 0.0
    %454 = vmatpush1.msra.mxu0 0.0
    %455 = vmatprep.subr.mxu0 0.0
    %456 = vmatpush1.msra.mxu0 0.0
    %457 = vmatprep.subr.mxu0 0.0
    %458 = vmatpush1.msra.mxu0 0.0
    %459 = vmatprep.mubr.f32.mxu0 0.0
    %460 = vmatmul.mubr.f32.gmra.mrb[0].mxu0 %v147
    %v461 = vpop.f32.mrb[0].mxu0
    %v462 = vadd.f32 0.0, %v461
    %v463 = vpop.f32.mrb[0].mxu0
    %464 = vmatprep.mubr.f32.mxu0 0.0
    %465 = vmatmul.mubr.f32.gmra.mrb[0].mxu0 %v150
    %v466 = vpop.f32.mrb[0].mxu0
    %v467 = vadd.f32 0.0, %v466
    %v468 = vpop.f32.mrb[0].mxu0
    %469 = vdwg.mxu0
    %s470 = scalar_lea.vmem [#allocation2], 96
    %v471 = vld [vmem:[%s470] sm:$0xff]
    %v472 = vld [vmem:[%s470 + $0x8] sm:$0xff]
    %v473 = vld [vmem:[%s470 + $0x10] sm:$0xff]
    %v474 = vld [vmem:[%s470 + $0x18] sm:$0xff]
    %475 = vmatprep.subr.mxu0 0.0
    %476 = vmatpush1.msra.mxu0 %v471
    %477 = vmatprep.subr.mxu0 0.0
    %478 = vmatpush1.msra.mxu0 %v472
    %479 = vmatprep.subr.mxu0 0.0
    %480 = vmatpush1.msra.mxu0 %v473
    %481 = vmatprep.subr.mxu0 0.0
    %482 = vmatpush1.msra.mxu0 %v474
    %483 = vmatprep.subr.mxu0 0.0
    %484 = vmatpush1.msra.mxu0 0.0
    %485 = vmatprep.subr.mxu0 0.0
    %486 = vmatpush1.msra.mxu0 0.0
    %487 = vmatprep.subr.mxu0 0.0
    %488 = vmatpush1.msra.mxu0 0.0
    %489 = vmatprep.subr.mxu0 0.0
    %490 = vmatpush1.msra.mxu0 0.0
    %491 = vmatprep.subr.mxu0 0.0
    %492 = vmatpush1.msra.mxu0 0.0
    %493 = vmatprep.subr.mxu0 0.0
    %494 = vmatpush1.msra.mxu0 0.0
    %495 = vmatprep.subr.mxu0 0.0
    %496 = vmatpush1.msra.mxu0 0.0
    %497 = vmatprep.subr.mxu0 0.0
    %498 = vmatpush1.msra.mxu0 0.0
    %499 = vmatprep.subr.mxu0 0.0
    %500 = vmatpush1.msra.mxu0 0.0
    %501 = vmatprep.subr.mxu0 0.0
    %502 = vmatpush1.msra.mxu0 0.0
    %503 = vmatprep.subr.mxu0 0.0
    %504 = vmatpush1.msra.mxu0 0.0
    %505 = vmatprep.subr.mxu0 0.0
    %506 = vmatpush1.msra.mxu0 0.0
    %507 = vmatprep.subr.mxu0 0.0
    %508 = vmatpush1.msra.mxu0 0.0
    %509 = vmatprep.subr.mxu0 0.0
    %510 = vmatpush1.msra.mxu0 0.0
    %511 = vmatprep.subr.mxu0 0.0
    %512 = vmatpush1.msra.mxu0 0.0
    %513 = vmatprep.subr.mxu0 0.0
    %514 = vmatpush1.msra.mxu0 0.0
    %515 = vmatprep.subr.mxu0 0.0
    %516 = vmatpush1.msra.mxu0 0.0
    %517 = vmatprep.subr.mxu0 0.0
    %518 = vmatpush1.msra.mxu0 0.0
    %519 = vmatprep.subr.mxu0 0.0
    %520 = vmatpush1.msra.mxu0 0.0
    %521 = vmatprep.subr.mxu0 0.0
    %522 = vmatpush1.msra.mxu0 0.0
    %523 = vmatprep.subr.mxu0 0.0
    %524 = vmatpush1.msra.mxu0 0.0
    %525 = vmatprep.subr.mxu0 0.0
    %526 = vmatpush1.msra.mxu0 0.0
    %527 = vmatprep.subr.mxu0 0.0
    %528 = vmatpush1.msra.mxu0 0.0
    %529 = vmatprep.subr.mxu0 0.0
    %530 = vmatpush1.msra.mxu0 0.0
    %531 = vmatprep.subr.mxu0 0.0
    %532 = vmatpush1.msra.mxu0 0.0
    %533 = vmatprep.subr.mxu0 0.0
    %534 = vmatpush1.msra.mxu0 0.0
    %535 = vmatprep.subr.mxu0 0.0
    %536 = vmatpush1.msra.mxu0 0.0
    %537 = vmatprep.subr.mxu0 0.0
    %538 = vmatpush1.msra.mxu0 0.0
    %539 = vmatprep.mubr.f32.mxu0 0.0
    %540 = vmatmul.mubr.f32.gmra.mrb[0].mxu0 %v147
    %v541 = vpop.f32.mrb[0].mxu0
    %v542 = vadd.f32 0.0, %v541
    %v543 = vpop.f32.mrb[0].mxu0
    %544 = vmatprep.mubr.f32.mxu0 0.0
    %545 = vmatmul.mubr.f32.gmra.mrb[0].mxu0 %v150
    %v546 = vpop.f32.mrb[0].mxu0
    %v547 = vadd.f32 0.0, %v546
    %v548 = vpop.f32.mrb[0].mxu0
    %549 = vdwg.mxu0
    %v551 = vsel %vm145, %v462, 0
    %v554 = vsel %vm145, %v467, 0
    %556 = vmatprep.subr.mxu0 0.0
    %557 = vmatpush1.xpose.msra.mxu0 %v147
    %558 = vmatprep.subr.mxu0 0.0
    %559 = vmatpush1.xpose.msra.mxu0 %v150
    %560 = vmatprep.subr.mxu0 0.0
    %561 = vmatpush1.xpose.msra.mxu0 0.0
    %562 = vmatprep.subr.mxu0 0.0
    %563 = vmatpush1.xpose.msra.mxu0 0.0
    %564 = vmatprep.subr.mxu0 0.0
    %565 = vmatpush1.xpose.msra.mxu0 0.0
    %566 = vmatprep.subr.mxu0 0.0
    %567 = vmatpush1.xpose.msra.mxu0 0.0
    %568 = vmatprep.subr.mxu0 0.0
    %569 = vmatpush1.xpose.msra.mxu0 0.0
    %570 = vmatprep.subr.mxu0 0.0
    %571 = vmatpush1.xpose.msra.mxu0 0.0
    %572 = vmatprep.subr.mxu0 0.0
    %573 = vmatpush1.xpose.msra.mxu0 0.0
    %574 = vmatprep.subr.mxu0 0.0
    %575 = vmatpush1.xpose.msra.mxu0 0.0
    %576 = vmatprep.subr.mxu0 0.0
    %577 = vmatpush1.xpose.msra.mxu0 0.0
    %578 = vmatprep.subr.mxu0 0.0
    %579 = vmatpush1.xpose.msra.mxu0 0.0
    %580 = vmatprep.subr.mxu0 0.0
    %581 = vmatpush1.xpose.msra.mxu0 0.0
    %582 = vmatprep.subr.mxu0 0.0
    %583 = vmatpush1.xpose.msra.mxu0 0.0
    %584 = vmatprep.subr.mxu0 0.0
    %585 = vmatpush1.xpose.msra.mxu0 0.0
    %586 = vmatprep.subr.mxu0 0.0
    %587 = vmatpush1.xpose.msra.mxu0 0.0
    %588 = vmatprep.subr.mxu0 0.0
    %589 = vmatpush1.xpose.msra.mxu0 0.0
    %590 = vmatprep.subr.mxu0 0.0
    %591 = vmatpush1.xpose.msra.mxu0 0.0
    %592 = vmatprep.subr.mxu0 0.0
    %593 = vmatpush1.xpose.msra.mxu0 0.0
    %594 = vmatprep.subr.mxu0 0.0
    %595 = vmatpush1.xpose.msra.mxu0 0.0
    %596 = vmatprep.subr.mxu0 0.0
    %597 = vmatpush1.xpose.msra.mxu0 0.0
    %598 = vmatprep.subr.mxu0 0.0
    %599 = vmatpush1.xpose.msra.mxu0 0.0
    %600 = vmatprep.subr.mxu0 0.0
    %601 = vmatpush1.xpose.msra.mxu0 0.0
    %602 = vmatprep.subr.mxu0 0.0
    %603 = vmatpush1.xpose.msra.mxu0 0.0
    %604 = vmatprep.subr.mxu0 0.0
    %605 = vmatpush1.xpose.msra.mxu0 0.0
    %606 = vmatprep.subr.mxu0 0.0
    %607 = vmatpush1.xpose.msra.mxu0 0.0
    %608 = vmatprep.subr.mxu0 0.0
    %609 = vmatpush1.xpose.msra.mxu0 0.0
    %610 = vmatprep.subr.mxu0 0.0
    %611 = vmatpush1.xpose.msra.mxu0 0.0
    %612 = vmatprep.subr.mxu0 0.0
    %613 = vmatpush1.xpose.msra.mxu0 0.0
    %614 = vmatprep.subr.mxu0 0.0
    %615 = vmatpush1.xpose.msra.mxu0 0.0
    %616 = vmatprep.subr.mxu0 0.0
    %617 = vmatpush1.xpose.msra.mxu0 0.0
    %618 = vmatprep.subr.mxu0 0.0
    %619 = vmatpush1.xpose.msra.mxu0 0.0
    %620 = vmatprep.mubr.f32.mxu0 0.0
    %621 = vmatmul.mubr.f32.gmra.mrb[0].mxu0 %v551
    %v622 = vpop.f32.mrb[0].mxu0
    %v623 = vadd.f32 0.0, %v622
    %v624 = vpop.f32.mrb[0].mxu0
    %625 = vmatprep.mubr.f32.mxu0 0.0
    %626 = vmatmul.mubr.f32.gmra.mrb[0].mxu0 %v554
    %v627 = vpop.f32.mrb[0].mxu0
    %v628 = vadd.f32 0.0, %v627
    %v629 = vpop.f32.mrb[0].mxu0
    %630 = vdwg.mxu0
    %v631 = vsel %vm50, %v623, 0.0
    %v632 = vsel %vm51, %v628, 0.0
    %vm633 = vcmask 130048
    %v635 = vsel %vm633, %v631, 0
    %v638 = vsel %vm633, %v632, 0
    %640 = vmatprep.subr.mxu0 0.0
    %641 = vmatpush1.msra.mxu0 %v542
    %642 = vmatprep.subr.mxu0 0.0
    %643 = vmatpush1.msra.mxu0 %v547
    %644 = vmatprep.subr.mxu0 0.0
    %645 = vmatpush1.msra.mxu0 0.0
    %646 = vmatprep.subr.mxu0 0.0
    %647 = vmatpush1.msra.mxu0 0.0
    %648 = vmatprep.subr.mxu0 0.0
    %649 = vmatpush1.msra.mxu0 0.0
    %650 = vmatprep.subr.mxu0 0.0
    %651 = vmatpush1.msra.mxu0 0.0
    %652 = vmatprep.subr.mxu0 0.0
    %653 = vmatpush1.msra.mxu0 0.0
    %654 = vmatprep.subr.mxu0 0.0
    %655 = vmatpush1.msra.mxu0 0.0
    %656 = vmatprep.subr.mxu0 0.0
    %657 = vmatpush1.msra.mxu0 0.0
    %658 = vmatprep.subr.mxu0 0.0
    %659 = vmatpush1.msra.mxu0 0.0
    %660 = vmatprep.subr.mxu0 0.0
    %661 = vmatpush1.msra.mxu0 0.0
    %662 = vmatprep.subr.mxu0 0.0
    %663 = vmatpush1.msra.mxu0 0.0
    %664 = vmatprep.subr.mxu0 0.0
    %665 = vmatpush1.msra.mxu0 0.0
    %666 = vmatprep.subr.mxu0 0.0
    %667 = vmatpush1.msra.mxu0 0.0
    %668 = vmatprep.subr.mxu0 0.0
    %669 = vmatpush1.msra.mxu0 0.0
    %670 = vmatprep.subr.mxu0 0.0
    %671 = vmatpush1.msra.mxu0 0.0
    %672 = vmatprep.subr.mxu0 0.0
    %673 = vmatpush1.msra.mxu0 0.0
    %674 = vmatprep.subr.mxu0 0.0
    %675 = vmatpush1.msra.mxu0 0.0
    %676 = vmatprep.subr.mxu0 0.0
    %677 = vmatpush1.msra.mxu0 0.0
    %678 = vmatprep.subr.mxu0 0.0
    %679 = vmatpush1.msra.mxu0 0.0
    %680 = vmatprep.subr.mxu0 0.0
    %681 = vmatpush1.msra.mxu0 0.0
    %682 = vmatprep.subr.mxu0 0.0
    %683 = vmatpush1.msra.mxu0 0.0
    %684 = vmatprep.subr.mxu0 0.0
    %685 = vmatpush1.msra.mxu0 0.0
    %686 = vmatprep.subr.mxu0 0.0
    %687 = vmatpush1.msra.mxu0 0.0
    %688 = vmatprep.subr.mxu0 0.0
    %689 = vmatpush1.msra.mxu0 0.0
    %690 = vmatprep.subr.mxu0 0.0
    %691 = vmatpush1.msra.mxu0 0.0
    %692 = vmatprep.subr.mxu0 0.0
    %693 = vmatpush1.msra.mxu0 0.0
    %694 = vmatprep.subr.mxu0 0.0
    %695 = vmatpush1.msra.mxu0 0.0
    %696 = vmatprep.subr.mxu0 0.0
    %697 = vmatpush1.msra.mxu0 0.0
    %698 = vmatprep.subr.mxu0 0.0
    %699 = vmatpush1.msra.mxu0 0.0
    %700 = vmatprep.subr.mxu0 0.0
    %701 = vmatpush1.msra.mxu0 0.0
    %702 = vmatprep.subr.mxu0 0.0
    %703 = vmatpush1.msra.mxu0 0.0
    %704 = vmatprep.mubr.f32.mxu0 0.0
    %705 = vmatmul.mubr.f32.gmra.mrb[0].mxu0 %v635
    %v706 = vpop.f32.mrb[0].mxu0
    %v707 = vadd.f32 0.0, %v706
    %v708 = vpop.f32.mrb[0].mxu0
    %709 = vmatprep.mubr.f32.mxu0 0.0
    %710 = vmatmul.mubr.f32.gmra.mrb[0].mxu0 %v638
    %v711 = vpop.f32.mrb[0].mxu0
    %v712 = vadd.f32 0.0, %v711
    %v713 = vpop.f32.mrb[0].mxu0
    %714 = vdwg.mxu0
    %v716 = vsel %vm633, %v388, 0
    %v719 = vsel %vm633, %v389, 0
    %721 = vmatprep.subr.mxu0 0.0
    %722 = vmatpush1.msra.mxu0 %v299
    %723 = vmatprep.subr.mxu0 0.0
    %724 = vmatpush1.msra.mxu0 %v304
    %725 = vmatprep.subr.mxu0 0.0
    %726 = vmatpush1.msra.mxu0 0.0
    %727 = vmatprep.subr.mxu0 0.0
    %728 = vmatpush1.msra.mxu0 0.0
    %729 = vmatprep.subr.mxu0 0.0
    %730 = vmatpush1.msra.mxu0 0.0
    %731 = vmatprep.subr.mxu0 0.0
    %732 = vmatpush1.msra.mxu0 0.0
    %733 = vmatprep.subr.mxu0 0.0
    %734 = vmatpush1.msra.mxu0 0.0
    %735 = vmatprep.subr.mxu0 0.0
    %736 = vmatpush1.msra.mxu0 0.0
    %737 = vmatprep.subr.mxu0 0.0
    %738 = vmatpush1.msra.mxu0 0.0
    %739 = vmatprep.subr.mxu0 0.0
    %740 = vmatpush1.msra.mxu0 0.0
    %741 = vmatprep.subr.mxu0 0.0
    %742 = vmatpush1.msra.mxu0 0.0
    %743 = vmatprep.subr.mxu0 0.0
    %744 = vmatpush1.msra.mxu0 0.0
    %745 = vmatprep.subr.mxu0 0.0
    %746 = vmatpush1.msra.mxu0 0.0
    %747 = vmatprep.subr.mxu0 0.0
    %748 = vmatpush1.msra.mxu0 0.0
    %749 = vmatprep.subr.mxu0 0.0
    %750 = vmatpush1.msra.mxu0 0.0
    %751 = vmatprep.subr.mxu0 0.0
    %752 = vmatpush1.msra.mxu0 0.0
    %753 = vmatprep.subr.mxu0 0.0
    %754 = vmatpush1.msra.mxu0 0.0
    %755 = vmatprep.subr.mxu0 0.0
    %756 = vmatpush1.msra.mxu0 0.0
    %757 = vmatprep.subr.mxu0 0.0
    %758 = vmatpush1.msra.mxu0 0.0
    %759 = vmatprep.subr.mxu0 0.0
    %760 = vmatpush1.msra.mxu0 0.0
    %761 = vmatprep.subr.mxu0 0.0
    %762 = vmatpush1.msra.mxu0 0.0
    %763 = vmatprep.subr.mxu0 0.0
    %764 = vmatpush1.msra.mxu0 0.0
    %765 = vmatprep.subr.mxu0 0.0
    %766 = vmatpush1.msra.mxu0 0.0
    %767 = vmatprep.subr.mxu0 0.0
    %768 = vmatpush1.msra.mxu0 0.0
    %769 = vmatprep.subr.mxu0 0.0
    %770 = vmatpush1.msra.mxu0 0.0
    %771 = vmatprep.subr.mxu0 0.0
    %772 = vmatpush1.msra.mxu0 0.0
    %773 = vmatprep.subr.mxu0 0.0
    %774 = vmatpush1.msra.mxu0 0.0
    %775 = vmatprep.subr.mxu0 0.0
    %776 = vmatpush1.msra.mxu0 0.0
    %777 = vmatprep.subr.mxu0 0.0
    %778 = vmatpush1.msra.mxu0 0.0
    %779 = vmatprep.subr.mxu0 0.0
    %780 = vmatpush1.msra.mxu0 0.0
    %781 = vmatprep.subr.mxu0 0.0
    %782 = vmatpush1.msra.mxu0 0.0
    %783 = vmatprep.subr.mxu0 0.0
    %784 = vmatpush1.msra.mxu0 0.0
    %785 = vmatprep.mubr.f32.mxu0 0.0
    %786 = vmatmul.mubr.f32.gmra.mrb[0].mxu0 %v716
    %v787 = vpop.f32.mrb[0].mxu0
    %v788 = vadd.f32 %v707, %v787
    %v789 = vpop.f32.mrb[0].mxu0
    %790 = vmatprep.mubr.f32.mxu0 0.0
    %791 = vmatmul.mubr.f32.gmra.mrb[0].mxu0 %v719
    %v792 = vpop.f32.mrb[0].mxu0
    %v793 = vadd.f32 %v712, %v792
    %v794 = vpop.f32.mrb[0].mxu0
    %795 = vdwg.mxu0
    %s796 = scalar_lea.vmem [#allocation2], 128
    %v797 = vld [vmem:[%s796] sm:$0xff]
    %v798 = vld [vmem:[%s796 + $0x8] sm:$0xff]
    %v799 = vld [vmem:[%s796 + $0x10] sm:$0xff]
    %v800 = vld [vmem:[%s796 + $0x18] sm:$0xff]
    %v802 = vsel %vm145, %v788, 0
    %v805 = vsel %vm145, %v793, 0
    %807 = vmatprep.subr.mxu0 0.0
    %808 = vmatpush1.msra.mxu0 %v797
    %809 = vmatprep.subr.mxu0 0.0
    %810 = vmatpush1.msra.mxu0 %v798
    %811 = vmatprep.subr.mxu0 0.0
    %812 = vmatpush1.msra.mxu0 %v799
    %813 = vmatprep.subr.mxu0 0.0
    %814 = vmatpush1.msra.mxu0 %v800
    %815 = vmatprep.subr.mxu0 0.0
    %816 = vmatpush1.msra.mxu0 0.0
    %817 = vmatprep.subr.mxu0 0.0
    %818 = vmatpush1.msra.mxu0 0.0
    %819 = vmatprep.subr.mxu0 0.0
    %820 = vmatpush1.msra.mxu0 0.0
    %821 = vmatprep.subr.mxu0 0.0
    %822 = vmatpush1.msra.mxu0 0.0
    %823 = vmatprep.subr.mxu0 0.0
    %824 = vmatpush1.msra.mxu0 0.0
    %825 = vmatprep.subr.mxu0 0.0
    %826 = vmatpush1.msra.mxu0 0.0
    %827 = vmatprep.subr.mxu0 0.0
    %828 = vmatpush1.msra.mxu0 0.0
    %829 = vmatprep.subr.mxu0 0.0
    %830 = vmatpush1.msra.mxu0 0.0
    %831 = vmatprep.subr.mxu0 0.0
    %832 = vmatpush1.msra.mxu0 0.0
    %833 = vmatprep.subr.mxu0 0.0
    %834 = vmatpush1.msra.mxu0 0.0
    %835 = vmatprep.subr.mxu0 0.0
    %836 = vmatpush1.msra.mxu0 0.0
    %837 = vmatprep.subr.mxu0 0.0
    %838 = vmatpush1.msra.mxu0 0.0
    %839 = vmatprep.subr.mxu0 0.0
    %840 = vmatpush1.msra.mxu0 0.0
    %841 = vmatprep.subr.mxu0 0.0
    %842 = vmatpush1.msra.mxu0 0.0
    %843 = vmatprep.subr.mxu0 0.0
    %844 = vmatpush1.msra.mxu0 0.0
    %845 = vmatprep.subr.mxu0 0.0
    %846 = vmatpush1.msra.mxu0 0.0
    %847 = vmatprep.subr.mxu0 0.0
    %848 = vmatpush1.msra.mxu0 0.0
    %849 = vmatprep.subr.mxu0 0.0
    %850 = vmatpush1.msra.mxu0 0.0
    %851 = vmatprep.subr.mxu0 0.0
    %852 = vmatpush1.msra.mxu0 0.0
    %853 = vmatprep.subr.mxu0 0.0
    %854 = vmatpush1.msra.mxu0 0.0
    %855 = vmatprep.subr.mxu0 0.0
    %856 = vmatpush1.msra.mxu0 0.0
    %857 = vmatprep.subr.mxu0 0.0
    %858 = vmatpush1.msra.mxu0 0.0
    %859 = vmatprep.subr.mxu0 0.0
    %860 = vmatpush1.msra.mxu0 0.0
    %861 = vmatprep.subr.mxu0 0.0
    %862 = vmatpush1.msra.mxu0 0.0
    %863 = vmatprep.subr.mxu0 0.0
    %864 = vmatpush1.msra.mxu0 0.0
    %865 = vmatprep.subr.mxu0 0.0
    %866 = vmatpush1.msra.mxu0 0.0
    %867 = vmatprep.subr.mxu0 0.0
    %868 = vmatpush1.msra.mxu0 0.0
    %869 = vmatprep.subr.mxu0 0.0
    %870 = vmatpush1.msra.mxu0 0.0
    %871 = vmatprep.mubr.f32.mxu0 0.0
    %872 = vmatmul.mubr.f32.gmra.mrb[0].mxu0 %v802
    %v873 = vpop.f32.mrb[0].mxu0
    %v874 = vadd.f32 0.0, %v873
    %v875 = vpop.f32.mrb[0].mxu0
    %876 = vmatprep.mubr.f32.mxu0 0.0
    %877 = vmatmul.mubr.f32.gmra.mrb[0].mxu0 %v805
    %v878 = vpop.f32.mrb[0].mxu0
    %v879 = vadd.f32 0.0, %v878
    %v880 = vpop.f32.mrb[0].mxu0
    %881 = vdwg.mxu0
    %s882 = scalar_lea.vmem [#allocation2], 192
    %v883 = vld [vmem:[%s882] sm:$0xff]
    %v884 = vld [vmem:[%s882 + $0x8] sm:$0xff]
    %v885 = vld [vmem:[%s882 + $0x10] sm:$0xff]
    %v886 = vld [vmem:[%s882 + $0x18] sm:$0xff]
    %887 = vmatprep.subr.mxu0 0.0
    %888 = vmatpush1.msra.mxu0 %v883
    %889 = vmatprep.subr.mxu0 0.0
    %890 = vmatpush1.msra.mxu0 %v884
    %891 = vmatprep.subr.mxu0 0.0
    %892 = vmatpush1.msra.mxu0 %v885
    %893 = vmatprep.subr.mxu0 0.0
    %894 = vmatpush1.msra.mxu0 %v886
    %895 = vmatprep.subr.mxu0 0.0
    %896 = vmatpush1.msra.mxu0 0.0
    %897 = vmatprep.subr.mxu0 0.0
    %898 = vmatpush1.msra.mxu0 0.0
    %899 = vmatprep.subr.mxu0 0.0
    %900 = vmatpush1.msra.mxu0 0.0
    %901 = vmatprep.subr.mxu0 0.0
    %902 = vmatpush1.msra.mxu0 0.0
    %903 = vmatprep.subr.mxu0 0.0
    %904 = vmatpush1.msra.mxu0 0.0
    %905 = vmatprep.subr.mxu0 0.0
    %906 = vmatpush1.msra.mxu0 0.0
    %907 = vmatprep.subr.mxu0 0.0
    %908 = vmatpush1.msra.mxu0 0.0
    %909 = vmatprep.subr.mxu0 0.0
    %910 = vmatpush1.msra.mxu0 0.0
    %911 = vmatprep.subr.mxu0 0.0
    %912 = vmatpush1.msra.mxu0 0.0
    %913 = vmatprep.subr.mxu0 0.0
    %914 = vmatpush1.msra.mxu0 0.0
    %915 = vmatprep.subr.mxu0 0.0
    %916 = vmatpush1.msra.mxu0 0.0
    %917 = vmatprep.subr.mxu0 0.0
    %918 = vmatpush1.msra.mxu0 0.0
    %919 = vmatprep.subr.mxu0 0.0
    %920 = vmatpush1.msra.mxu0 0.0
    %921 = vmatprep.subr.mxu0 0.0
    %922 = vmatpush1.msra.mxu0 0.0
    %923 = vmatprep.subr.mxu0 0.0
    %924 = vmatpush1.msra.mxu0 0.0
    %925 = vmatprep.subr.mxu0 0.0
    %926 = vmatpush1.msra.mxu0 0.0
    %927 = vmatprep.subr.mxu0 0.0
    %928 = vmatpush1.msra.mxu0 0.0
    %929 = vmatprep.subr.mxu0 0.0
    %930 = vmatpush1.msra.mxu0 0.0
    %931 = vmatprep.subr.mxu0 0.0
    %932 = vmatpush1.msra.mxu0 0.0
    %933 = vmatprep.subr.mxu0 0.0
    %934 = vmatpush1.msra.mxu0 0.0
    %935 = vmatprep.subr.mxu0 0.0
    %936 = vmatpush1.msra.mxu0 0.0
    %937 = vmatprep.subr.mxu0 0.0
    %938 = vmatpush1.msra.mxu0 0.0
    %939 = vmatprep.subr.mxu0 0.0
    %940 = vmatpush1.msra.mxu0 0.0
    %941 = vmatprep.subr.mxu0 0.0
    %942 = vmatpush1.msra.mxu0 0.0
    %943 = vmatprep.subr.mxu0 0.0
    %944 = vmatpush1.msra.mxu0 0.0
    %945 = vmatprep.subr.mxu0 0.0
    %946 = vmatpush1.msra.mxu0 0.0
    %947 = vmatprep.subr.mxu0 0.0
    %948 = vmatpush1.msra.mxu0 0.0
    %949 = vmatprep.subr.mxu0 0.0
    %950 = vmatpush1.msra.mxu0 0.0
    %951 = vmatprep.mubr.f32.mxu0 0.0
    %952 = vmatmul.mubr.f32.gmra.mrb[0].mxu0 %v802
    %v953 = vpop.f32.mrb[0].mxu0
    %v954 = vadd.f32 0.0, %v953
    %v955 = vpop.f32.mrb[0].mxu0
    %956 = vmatprep.mubr.f32.mxu0 0.0
    %957 = vmatmul.mubr.f32.gmra.mrb[0].mxu0 %v805
    %v958 = vpop.f32.mrb[0].mxu0
    %v959 = vadd.f32 0.0, %v958
    %v960 = vpop.f32.mrb[0].mxu0
    %961 = vdwg.mxu0
    %v963 = vsel %vm145, %v874, 0
    %v966 = vsel %vm145, %v879, 0
    %968 = vmatprep.subr.mxu0 0.0
    %969 = vmatpush1.xpose.msra.mxu0 %v802
    %970 = vmatprep.subr.mxu0 0.0
    %971 = vmatpush1.xpose.msra.mxu0 %v805
    %972 = vmatprep.subr.mxu0 0.0
    %973 = vmatpush1.xpose.msra.mxu0 0.0
    %974 = vmatprep.subr.mxu0 0.0
    %975 = vmatpush1.xpose.msra.mxu0 0.0
    %976 = vmatprep.subr.mxu0 0.0
    %977 = vmatpush1.xpose.msra.mxu0 0.0
    %978 = vmatprep.subr.mxu0 0.0
    %979 = vmatpush1.xpose.msra.mxu0 0.0
    %980 = vmatprep.subr.mxu0 0.0
    %981 = vmatpush1.xpose.msra.mxu0 0.0
    %982 = vmatprep.subr.mxu0 0.0
    %983 = vmatpush1.xpose.msra.mxu0 0.0
    %984 = vmatprep.subr.mxu0 0.0
    %985 = vmatpush1.xpose.msra.mxu0 0.0
    %986 = vmatprep.subr.mxu0 0.0
    %987 = vmatpush1.xpose.msra.mxu0 0.0
    %988 = vmatprep.subr.mxu0 0.0
    %989 = vmatpush1.xpose.msra.mxu0 0.0
    %990 = vmatprep.subr.mxu0 0.0
    %991 = vmatpush1.xpose.msra.mxu0 0.0
    %992 = vmatprep.subr.mxu0 0.0
    %993 = vmatpush1.xpose.msra.mxu0 0.0
    %994 = vmatprep.subr.mxu0 0.0
    %995 = vmatpush1.xpose.msra.mxu0 0.0
    %996 = vmatprep.subr.mxu0 0.0
    %997 = vmatpush1.xpose.msra.mxu0 0.0
    %998 = vmatprep.subr.mxu0 0.0
    %999 = vmatpush1.xpose.msra.mxu0 0.0
    %1000 = vmatprep.subr.mxu0 0.0
    %1001 = vmatpush1.xpose.msra.mxu0 0.0
    %1002 = vmatprep.subr.mxu0 0.0
    %1003 = vmatpush1.xpose.msra.mxu0 0.0
    %1004 = vmatprep.subr.mxu0 0.0
    %1005 = vmatpush1.xpose.msra.mxu0 0.0
    %1006 = vmatprep.subr.mxu0 0.0
    %1007 = vmatpush1.xpose.msra.mxu0 0.0
    %1008 = vmatprep.subr.mxu0 0.0
    %1009 = vmatpush1.xpose.msra.mxu0 0.0
    %1010 = vmatprep.subr.mxu0 0.0
    %1011 = vmatpush1.xpose.msra.mxu0 0.0
    %1012 = vmatprep.subr.mxu0 0.0
    %1013 = vmatpush1.xpose.msra.mxu0 0.0
    %1014 = vmatprep.subr.mxu0 0.0
    %1015 = vmatpush1.xpose.msra.mxu0 0.0
    %1016 = vmatprep.subr.mxu0 0.0
    %1017 = vmatpush1.xpose.msra.mxu0 0.0
    %1018 = vmatprep.subr.mxu0 0.0
    %1019 = vmatpush1.xpose.msra.mxu0 0.0
    %1020 = vmatprep.subr.mxu0 0.0
    %1021 = vmatpush1.xpose.msra.mxu0 0.0
    %1022 = vmatprep.subr.mxu0 0.0
    %1023 = vmatpush1.xpose.msra.mxu0 0.0
    %1024 = vmatprep.subr.mxu0 0.0
    %1025 = vmatpush1.xpose.msra.mxu0 0.0
    %1026 = vmatprep.subr.mxu0 0.0
    %1027 = vmatpush1.xpose.msra.mxu0 0.0
    %1028 = vmatprep.subr.mxu0 0.0
    %1029 = vmatpush1.xpose.msra.mxu0 0.0
    %1030 = vmatprep.subr.mxu0 0.0
    %1031 = vmatpush1.xpose.msra.mxu0 0.0
    %1032 = vmatprep.mubr.f32.mxu0 0.0
    %1033 = vmatmul.mubr.f32.gmra.mrb[0].mxu0 %v963
    %v1034 = vpop.f32.mrb[0].mxu0
    %v1035 = vadd.f32 0.0, %v1034
    %v1036 = vpop.f32.mrb[0].mxu0
    %1037 = vmatprep.mubr.f32.mxu0 0.0
    %1038 = vmatmul.mubr.f32.gmra.mrb[0].mxu0 %v966
    %v1039 = vpop.f32.mrb[0].mxu0
    %v1040 = vadd.f32 0.0, %v1039
    %v1041 = vpop.f32.mrb[0].mxu0
    %1042 = vdwg.mxu0
    %v1043 = vsel %vm50, %v1035, 0.0
    %v1044 = vsel %vm51, %v1040, 0.0
    %s1045 = scalar_lea.vmem [#allocation2], 160
    %v1046 = vld [vmem:[%s1045] sm:$0xff]
    %v1047 = vld [vmem:[%s1045 + $0x8] sm:$0xff]
    %v1048 = vld [vmem:[%s1045 + $0x10] sm:$0xff]
    %v1049 = vld [vmem:[%s1045 + $0x18] sm:$0xff]
    %1050 = vmatprep.subr.mxu0 0.0
    %1051 = vmatpush1.msra.mxu0 %v1046
    %1052 = vmatprep.subr.mxu0 0.0
    %1053 = vmatpush1.msra.mxu0 %v1047
    %1054 = vmatprep.subr.mxu0 0.0
    %1055 = vmatpush1.msra.mxu0 %v1048
    %1056 = vmatprep.subr.mxu0 0.0
    %1057 = vmatpush1.msra.mxu0 %v1049
    %1058 = vmatprep.subr.mxu0 0.0
    %1059 = vmatpush1.msra.mxu0 0.0
    %1060 = vmatprep.subr.mxu0 0.0
    %1061 = vmatpush1.msra.mxu0 0.0
    %1062 = vmatprep.subr.mxu0 0.0
    %1063 = vmatpush1.msra.mxu0 0.0
    %1064 = vmatprep.subr.mxu0 0.0
    %1065 = vmatpush1.msra.mxu0 0.0
    %1066 = vmatprep.subr.mxu0 0.0
    %1067 = vmatpush1.msra.mxu0 0.0
    %1068 = vmatprep.subr.mxu0 0.0
    %1069 = vmatpush1.msra.mxu0 0.0
    %1070 = vmatprep.subr.mxu0 0.0
    %1071 = vmatpush1.msra.mxu0 0.0
    %1072 = vmatprep.subr.mxu0 0.0
    %1073 = vmatpush1.msra.mxu0 0.0
    %1074 = vmatprep.subr.mxu0 0.0
    %1075 = vmatpush1.msra.mxu0 0.0
    %1076 = vmatprep.subr.mxu0 0.0
    %1077 = vmatpush1.msra.mxu0 0.0
    %1078 = vmatprep.subr.mxu0 0.0
    %1079 = vmatpush1.msra.mxu0 0.0
    %1080 = vmatprep.subr.mxu0 0.0
    %1081 = vmatpush1.msra.mxu0 0.0
    %1082 = vmatprep.subr.mxu0 0.0
    %1083 = vmatpush1.msra.mxu0 0.0
    %1084 = vmatprep.subr.mxu0 0.0
    %1085 = vmatpush1.msra.mxu0 0.0
    %1086 = vmatprep.subr.mxu0 0.0
    %1087 = vmatpush1.msra.mxu0 0.0
    %1088 = vmatprep.subr.mxu0 0.0
    %1089 = vmatpush1.msra.mxu0 0.0
    %1090 = vmatprep.subr.mxu0 0.0
    %1091 = vmatpush1.msra.mxu0 0.0
    %1092 = vmatprep.subr.mxu0 0.0
    %1093 = vmatpush1.msra.mxu0 0.0
    %1094 = vmatprep.subr.mxu0 0.0
    %1095 = vmatpush1.msra.mxu0 0.0
    %1096 = vmatprep.subr.mxu0 0.0
    %1097 = vmatpush1.msra.mxu0 0.0
    %1098 = vmatprep.subr.mxu0 0.0
    %1099 = vmatpush1.msra.mxu0 0.0
    %1100 = vmatprep.subr.mxu0 0.0
    %1101 = vmatpush1.msra.mxu0 0.0
    %1102 = vmatprep.subr.mxu0 0.0
    %1103 = vmatpush1.msra.mxu0 0.0
    %1104 = vmatprep.subr.mxu0 0.0
    %1105 = vmatpush1.msra.mxu0 0.0
    %1106 = vmatprep.subr.mxu0 0.0
    %1107 = vmatpush1.msra.mxu0 0.0
    %1108 = vmatprep.subr.mxu0 0.0
    %1109 = vmatpush1.msra.mxu0 0.0
    %1110 = vmatprep.subr.mxu0 0.0
    %1111 = vmatpush1.msra.mxu0 0.0
    %1112 = vmatprep.subr.mxu0 0.0
    %1113 = vmatpush1.msra.mxu0 0.0
    %1114 = vmatprep.mubr.f32.mxu0 0.0
    %1115 = vmatmul.mubr.f32.gmra.mrb[0].mxu0 %v802
    %v1116 = vpop.f32.mrb[0].mxu0
    %v1117 = vadd.f32 0.0, %v1116
    %v1118 = vpop.f32.mrb[0].mxu0
    %1119 = vmatprep.mubr.f32.mxu0 0.0
    %1120 = vmatmul.mubr.f32.gmra.mrb[0].mxu0 %v805
    %v1121 = vpop.f32.mrb[0].mxu0
    %v1122 = vadd.f32 0.0, %v1121
    %v1123 = vpop.f32.mrb[0].mxu0
    %1124 = vdwg.mxu0
    %s1125 = scalar_lea.vmem [#allocation2], 224
    %v1126 = vld [vmem:[%s1125] sm:$0xff]
    %v1127 = vld [vmem:[%s1125 + $0x8] sm:$0xff]
    %v1128 = vld [vmem:[%s1125 + $0x10] sm:$0xff]
    %v1129 = vld [vmem:[%s1125 + $0x18] sm:$0xff]
    %1130 = vmatprep.subr.mxu0 0.0
    %1131 = vmatpush1.msra.mxu0 %v1126
    %1132 = vmatprep.subr.mxu0 0.0
    %1133 = vmatpush1.msra.mxu0 %v1127
    %1134 = vmatprep.subr.mxu0 0.0
    %1135 = vmatpush1.msra.mxu0 %v1128
    %1136 = vmatprep.subr.mxu0 0.0
    %1137 = vmatpush1.msra.mxu0 %v1129
    %1138 = vmatprep.subr.mxu0 0.0
    %1139 = vmatpush1.msra.mxu0 0.0
    %1140 = vmatprep.subr.mxu0 0.0
    %1141 = vmatpush1.msra.mxu0 0.0
    %1142 = vmatprep.subr.mxu0 0.0
    %1143 = vmatpush1.msra.mxu0 0.0
    %1144 = vmatprep.subr.mxu0 0.0
    %1145 = vmatpush1.msra.mxu0 0.0
    %1146 = vmatprep.subr.mxu0 0.0
    %1147 = vmatpush1.msra.mxu0 0.0
    %1148 = vmatprep.subr.mxu0 0.0
    %1149 = vmatpush1.msra.mxu0 0.0
    %1150 = vmatprep.subr.mxu0 0.0
    %1151 = vmatpush1.msra.mxu0 0.0
    %1152 = vmatprep.subr.mxu0 0.0
    %1153 = vmatpush1.msra.mxu0 0.0
    %1154 = vmatprep.subr.mxu0 0.0
    %1155 = vmatpush1.msra.mxu0 0.0
    %1156 = vmatprep.subr.mxu0 0.0
    %1157 = vmatpush1.msra.mxu0 0.0
    %1158 = vmatprep.subr.mxu0 0.0
    %1159 = vmatpush1.msra.mxu0 0.0
    %1160 = vmatprep.subr.mxu0 0.0
    %1161 = vmatpush1.msra.mxu0 0.0
    %1162 = vmatprep.subr.mxu0 0.0
    %1163 = vmatpush1.msra.mxu0 0.0
    %1164 = vmatprep.subr.mxu0 0.0
    %1165 = vmatpush1.msra.mxu0 0.0
    %1166 = vmatprep.subr.mxu0 0.0
    %1167 = vmatpush1.msra.mxu0 0.0
    %1168 = vmatprep.subr.mxu0 0.0
    %1169 = vmatpush1.msra.mxu0 0.0
    %1170 = vmatprep.subr.mxu0 0.0
    %1171 = vmatpush1.msra.mxu0 0.0
    %1172 = vmatprep.subr.mxu0 0.0
    %1173 = vmatpush1.msra.mxu0 0.0
    %1174 = vmatprep.subr.mxu0 0.0
    %1175 = vmatpush1.msra.mxu0 0.0
    %1176 = vmatprep.subr.mxu0 0.0
    %1177 = vmatpush1.msra.mxu0 0.0
    %1178 = vmatprep.subr.mxu0 0.0
    %1179 = vmatpush1.msra.mxu0 0.0
    %1180 = vmatprep.subr.mxu0 0.0
    %1181 = vmatpush1.msra.mxu0 0.0
    %1182 = vmatprep.subr.mxu0 0.0
    %1183 = vmatpush1.msra.mxu0 0.0
    %1184 = vmatprep.subr.mxu0 0.0
    %1185 = vmatpush1.msra.mxu0 0.0
    %1186 = vmatprep.subr.mxu0 0.0
    %1187 = vmatpush1.msra.mxu0 0.0
    %1188 = vmatprep.subr.mxu0 0.0
    %1189 = vmatpush1.msra.mxu0 0.0
    %1190 = vmatprep.subr.mxu0 0.0
    %1191 = vmatpush1.msra.mxu0 0.0
    %1192 = vmatprep.subr.mxu0 0.0
    %1193 = vmatpush1.msra.mxu0 0.0
    %1194 = vmatprep.mubr.f32.mxu0 0.0
    %1195 = vmatmul.mubr.f32.gmra.mrb[0].mxu0 %v802
    %v1196 = vpop.f32.mrb[0].mxu0
    %v1197 = vadd.f32 0.0, %v1196
    %v1198 = vpop.f32.mrb[0].mxu0
    %1199 = vmatprep.mubr.f32.mxu0 0.0
    %1200 = vmatmul.mubr.f32.gmra.mrb[0].mxu0 %v805
    %v1201 = vpop.f32.mrb[0].mxu0
    %v1202 = vadd.f32 0.0, %v1201
    %v1203 = vpop.f32.mrb[0].mxu0
    %1204 = vdwg.mxu0
    %v1206 = vsel %vm145, %v1117, 0
    %v1209 = vsel %vm145, %v1122, 0
    %1211 = vmatprep.subr.mxu0 0.0
    %1212 = vmatpush1.xpose.msra.mxu0 %v802
    %1213 = vmatprep.subr.mxu0 0.0
    %1214 = vmatpush1.xpose.msra.mxu0 %v805
    %1215 = vmatprep.subr.mxu0 0.0
    %1216 = vmatpush1.xpose.msra.mxu0 0.0
    %1217 = vmatprep.subr.mxu0 0.0
    %1218 = vmatpush1.xpose.msra.mxu0 0.0
    %1219 = vmatprep.subr.mxu0 0.0
    %1220 = vmatpush1.xpose.msra.mxu0 0.0
    %1221 = vmatprep.subr.mxu0 0.0
    %1222 = vmatpush1.xpose.msra.mxu0 0.0
    %1223 = vmatprep.subr.mxu0 0.0
    %1224 = vmatpush1.xpose.msra.mxu0 0.0
    %1225 = vmatprep.subr.mxu0 0.0
    %1226 = vmatpush1.xpose.msra.mxu0 0.0
    %1227 = vmatprep.subr.mxu0 0.0
    %1228 = vmatpush1.xpose.msra.mxu0 0.0
    %1229 = vmatprep.subr.mxu0 0.0
    %1230 = vmatpush1.xpose.msra.mxu0 0.0
    %1231 = vmatprep.subr.mxu0 0.0
    %1232 = vmatpush1.xpose.msra.mxu0 0.0
    %1233 = vmatprep.subr.mxu0 0.0
    %1234 = vmatpush1.xpose.msra.mxu0 0.0
    %1235 = vmatprep.subr.mxu0 0.0
    %1236 = vmatpush1.xpose.msra.mxu0 0.0
    %1237 = vmatprep.subr.mxu0 0.0
    %1238 = vmatpush1.xpose.msra.mxu0 0.0
    %1239 = vmatprep.subr.mxu0 0.0
    %1240 = vmatpush1.xpose.msra.mxu0 0.0
    %1241 = vmatprep.subr.mxu0 0.0
    %1242 = vmatpush1.xpose.msra.mxu0 0.0
    %1243 = vmatprep.subr.mxu0 0.0
    %1244 = vmatpush1.xpose.msra.mxu0 0.0
    %1245 = vmatprep.subr.mxu0 0.0
    %1246 = vmatpush1.xpose.msra.mxu0 0.0
    %1247 = vmatprep.subr.mxu0 0.0
    %1248 = vmatpush1.xpose.msra.mxu0 0.0
    %1249 = vmatprep.subr.mxu0 0.0
    %1250 = vmatpush1.xpose.msra.mxu0 0.0
    %1251 = vmatprep.subr.mxu0 0.0
    %1252 = vmatpush1.xpose.msra.mxu0 0.0
    %1253 = vmatprep.subr.mxu0 0.0
    %1254 = vmatpush1.xpose.msra.mxu0 0.0
    %1255 = vmatprep.subr.mxu0 0.0
    %1256 = vmatpush1.xpose.msra.mxu0 0.0
    %1257 = vmatprep.subr.mxu0 0.0
    %1258 = vmatpush1.xpose.msra.mxu0 0.0
    %1259 = vmatprep.subr.mxu0 0.0
    %1260 = vmatpush1.xpose.msra.mxu0 0.0
    %1261 = vmatprep.subr.mxu0 0.0
    %1262 = vmatpush1.xpose.msra.mxu0 0.0
    %1263 = vmatprep.subr.mxu0 0.0
    %1264 = vmatpush1.xpose.msra.mxu0 0.0
    %1265 = vmatprep.subr.mxu0 0.0
    %1266 = vmatpush1.xpose.msra.mxu0 0.0
    %1267 = vmatprep.subr.mxu0 0.0
    %1268 = vmatpush1.xpose.msra.mxu0 0.0
    %1269 = vmatprep.subr.mxu0 0.0
    %1270 = vmatpush1.xpose.msra.mxu0 0.0
    %1271 = vmatprep.subr.mxu0 0.0
    %1272 = vmatpush1.xpose.msra.mxu0 0.0
    %1273 = vmatprep.subr.mxu0 0.0
    %1274 = vmatpush1.xpose.msra.mxu0 0.0
    %1275 = vmatprep.mubr.f32.mxu0 0.0
    %1276 = vmatmul.mubr.f32.gmra.mrb[0].mxu0 %v1206
    %v1277 = vpop.f32.mrb[0].mxu0
    %v1278 = vadd.f32 0.0, %v1277
    %v1279 = vpop.f32.mrb[0].mxu0
    %1280 = vmatprep.mubr.f32.mxu0 0.0
    %1281 = vmatmul.mubr.f32.gmra.mrb[0].mxu0 %v1209
    %v1282 = vpop.f32.mrb[0].mxu0
    %v1283 = vadd.f32 0.0, %v1282
    %v1284 = vpop.f32.mrb[0].mxu0
    %1285 = vdwg.mxu0
    %v1286 = vsel %vm50, %v1278, 0.0
    %v1287 = vsel %vm51, %v1283, 0.0
    %v1289 = vsel %vm633, %v1286, 0
    %v1292 = vsel %vm633, %v1287, 0
    %1294 = vmatprep.subr.mxu0 0.0
    %1295 = vmatpush1.msra.mxu0 %v1197
    %1296 = vmatprep.subr.mxu0 0.0
    %1297 = vmatpush1.msra.mxu0 %v1202
    %1298 = vmatprep.subr.mxu0 0.0
    %1299 = vmatpush1.msra.mxu0 0.0
    %1300 = vmatprep.subr.mxu0 0.0
    %1301 = vmatpush1.msra.mxu0 0.0
    %1302 = vmatprep.subr.mxu0 0.0
    %1303 = vmatpush1.msra.mxu0 0.0
    %1304 = vmatprep.subr.mxu0 0.0
    %1305 = vmatpush1.msra.mxu0 0.0
    %1306 = vmatprep.subr.mxu0 0.0
    %1307 = vmatpush1.msra.mxu0 0.0
    %1308 = vmatprep.subr.mxu0 0.0
    %1309 = vmatpush1.msra.mxu0 0.0
    %1310 = vmatprep.subr.mxu0 0.0
    %1311 = vmatpush1.msra.mxu0 0.0
    %1312 = vmatprep.subr.mxu0 0.0
    %1313 = vmatpush1.msra.mxu0 0.0
    %1314 = vmatprep.subr.mxu0 0.0
    %1315 = vmatpush1.msra.mxu0 0.0
    %1316 = vmatprep.subr.mxu0 0.0
    %1317 = vmatpush1.msra.mxu0 0.0
    %1318 = vmatprep.subr.mxu0 0.0
    %1319 = vmatpush1.msra.mxu0 0.0
    %1320 = vmatprep.subr.mxu0 0.0
    %1321 = vmatpush1.msra.mxu0 0.0
    %1322 = vmatprep.subr.mxu0 0.0
    %1323 = vmatpush1.msra.mxu0 0.0
    %1324 = vmatprep.subr.mxu0 0.0
    %1325 = vmatpush1.msra.mxu0 0.0
    %1326 = vmatprep.subr.mxu0 0.0
    %1327 = vmatpush1.msra.mxu0 0.0
    %1328 = vmatprep.subr.mxu0 0.0
    %1329 = vmatpush1.msra.mxu0 0.0
    %1330 = vmatprep.subr.mxu0 0.0
    %1331 = vmatpush1.msra.mxu0 0.0
    %1332 = vmatprep.subr.mxu0 0.0
    %1333 = vmatpush1.msra.mxu0 0.0
    %1334 = vmatprep.subr.mxu0 0.0
    %1335 = vmatpush1.msra.mxu0 0.0
    %1336 = vmatprep.subr.mxu0 0.0
    %1337 = vmatpush1.msra.mxu0 0.0
    %1338 = vmatprep.subr.mxu0 0.0
    %1339 = vmatpush1.msra.mxu0 0.0
    %1340 = vmatprep.subr.mxu0 0.0
    %1341 = vmatpush1.msra.mxu0 0.0
    %1342 = vmatprep.subr.mxu0 0.0
    %1343 = vmatpush1.msra.mxu0 0.0
    %1344 = vmatprep.subr.mxu0 0.0
    %1345 = vmatpush1.msra.mxu0 0.0
    %1346 = vmatprep.subr.mxu0 0.0
    %1347 = vmatpush1.msra.mxu0 0.0
    %1348 = vmatprep.subr.mxu0 0.0
    %1349 = vmatpush1.msra.mxu0 0.0
    %1350 = vmatprep.subr.mxu0 0.0
    %1351 = vmatpush1.msra.mxu0 0.0
    %1352 = vmatprep.subr.mxu0 0.0
    %1353 = vmatpush1.msra.mxu0 0.0
    %1354 = vmatprep.subr.mxu0 0.0
    %1355 = vmatpush1.msra.mxu0 0.0
    %1356 = vmatprep.subr.mxu0 0.0
    %1357 = vmatpush1.msra.mxu0 0.0
    %1358 = vmatprep.mubr.f32.mxu0 0.0
    %1359 = vmatmul.mubr.f32.gmra.mrb[0].mxu0 %v1289
    %v1360 = vpop.f32.mrb[0].mxu0
    %v1361 = vadd.f32 0.0, %v1360
    %v1362 = vpop.f32.mrb[0].mxu0
    %1363 = vmatprep.mubr.f32.mxu0 0.0
    %1364 = vmatmul.mubr.f32.gmra.mrb[0].mxu0 %v1292
    %v1365 = vpop.f32.mrb[0].mxu0
    %v1366 = vadd.f32 0.0, %v1365
    %v1367 = vpop.f32.mrb[0].mxu0
    %1368 = vdwg.mxu0
    %v1370 = vsel %vm633, %v1043, 0
    %v1373 = vsel %vm633, %v1044, 0
    %1375 = vmatprep.subr.mxu0 0.0
    %1376 = vmatpush1.msra.mxu0 %v954
    %1377 = vmatprep.subr.mxu0 0.0
    %1378 = vmatpush1.msra.mxu0 %v959
    %1379 = vmatprep.subr.mxu0 0.0
    %1380 = vmatpush1.msra.mxu0 0.0
    %1381 = vmatprep.subr.mxu0 0.0
    %1382 = vmatpush1.msra.mxu0 0.0
    %1383 = vmatprep.subr.mxu0 0.0
    %1384 = vmatpush1.msra.mxu0 0.0
    %1385 = vmatprep.subr.mxu0 0.0
    %1386 = vmatpush1.msra.mxu0 0.0
    %1387 = vmatprep.subr.mxu0 0.0
    %1388 = vmatpush1.msra.mxu0 0.0
    %1389 = vmatprep.subr.mxu0 0.0
    %1390 = vmatpush1.msra.mxu0 0.0
    %1391 = vmatprep.subr.mxu0 0.0
    %1392 = vmatpush1.msra.mxu0 0.0
    %1393 = vmatprep.subr.mxu0 0.0
    %1394 = vmatpush1.msra.mxu0 0.0
    %1395 = vmatprep.subr.mxu0 0.0
    %1396 = vmatpush1.msra.mxu0 0.0
    %1397 = vmatprep.subr.mxu0 0.0
    %1398 = vmatpush1.msra.mxu0 0.0
    %1399 = vmatprep.subr.mxu0 0.0
    %1400 = vmatpush1.msra.mxu0 0.0
    %1401 = vmatprep.subr.mxu0 0.0
    %1402 = vmatpush1.msra.mxu0 0.0
    %1403 = vmatprep.subr.mxu0 0.0
    %1404 = vmatpush1.msra.mxu0 0.0
    %1405 = vmatprep.subr.mxu0 0.0
    %1406 = vmatpush1.msra.mxu0 0.0
    %1407 = vmatprep.subr.mxu0 0.0
    %1408 = vmatpush1.msra.mxu0 0.0
    %1409 = vmatprep.subr.mxu0 0.0
    %1410 = vmatpush1.msra.mxu0 0.0
    %1411 = vmatprep.subr.mxu0 0.0
    %1412 = vmatpush1.msra.mxu0 0.0
    %1413 = vmatprep.subr.mxu0 0.0
    %1414 = vmatpush1.msra.mxu0 0.0
    %1415 = vmatprep.subr.mxu0 0.0
    %1416 = vmatpush1.msra.mxu0 0.0
    %1417 = vmatprep.subr.mxu0 0.0
    %1418 = vmatpush1.msra.mxu0 0.0
    %1419 = vmatprep.subr.mxu0 0.0
    %1420 = vmatpush1.msra.mxu0 0.0
    %1421 = vmatprep.subr.mxu0 0.0
    %1422 = vmatpush1.msra.mxu0 0.0
    %1423 = vmatprep.subr.mxu0 0.0
    %1424 = vmatpush1.msra.mxu0 0.0
    %1425 = vmatprep.subr.mxu0 0.0
    %1426 = vmatpush1.msra.mxu0 0.0
    %1427 = vmatprep.subr.mxu0 0.0
    %1428 = vmatpush1.msra.mxu0 0.0
    %1429 = vmatprep.subr.mxu0 0.0
    %1430 = vmatpush1.msra.mxu0 0.0
    %1431 = vmatprep.subr.mxu0 0.0
    %1432 = vmatpush1.msra.mxu0 0.0
    %1433 = vmatprep.subr.mxu0 0.0
    %1434 = vmatpush1.msra.mxu0 0.0
    %1435 = vmatprep.subr.mxu0 0.0
    %1436 = vmatpush1.msra.mxu0 0.0
    %1437 = vmatprep.subr.mxu0 0.0
    %1438 = vmatpush1.msra.mxu0 0.0
    %1439 = vmatprep.mubr.f32.mxu0 0.0
    %1440 = vmatmul.mubr.f32.gmra.mrb[0].mxu0 %v1370
    %v1441 = vpop.f32.mrb[0].mxu0
    %v1442 = vadd.f32 %v1361, %v1441
    %v1443 = vpop.f32.mrb[0].mxu0
    %1444 = vmatprep.mubr.f32.mxu0 0.0
    %1445 = vmatmul.mubr.f32.gmra.mrb[0].mxu0 %v1373
    %v1446 = vpop.f32.mrb[0].mxu0
    %v1447 = vadd.f32 %v1366, %v1446
    %v1448 = vpop.f32.mrb[0].mxu0
    %1449 = vdwg.mxu0
    %1450 = vst.msk [vmem:[#allocation5] sm:$0xff] %vm145, %v1442
    %1451 = vst.msk [vmem:[#allocation5 + $0x8] sm:$0xff] %vm145, %v1447
    %s1452 = scalar_lea.vmem %s2, 16
    %v1453 = vld [vmem:[%s1452] sm:$0xff]
    %v1454 = vld [vmem:[%s1452 + $0x8] sm:$0xff]
    %s1455 = scalar_lea.vmem %s0, 4
    %v1456 = vld [vmem:[%s1455] sm:$0xf]
    %v1458 = vsel %vm55, %v1453, 0
    %v1461 = vsel %vm55, %v1454, 0
    %v1464 = vsel %vm62, %v1456, 0
    %1466 = vmatprep.subr.mxu0 0.0
    %1467 = vmatpush1.msra.mxu0 %v1464
    %1468 = vmatprep.subr.mxu0 0.0
    %1469 = vmatpush1.msra.mxu0 0.0
    %1470 = vmatprep.subr.mxu0 0.0
    %1471 = vmatpush1.msra.mxu0 0.0
    %1472 = vmatprep.subr.mxu0 0.0
    %1473 = vmatpush1.msra.mxu0 0.0
    %1474 = vmatprep.subr.mxu0 0.0
    %1475 = vmatpush1.msra.mxu0 0.0
    %1476 = vmatprep.subr.mxu0 0.0
    %1477 = vmatpush1.msra.mxu0 0.0
    %1478 = vmatprep.subr.mxu0 0.0
    %1479 = vmatpush1.msra.mxu0 0.0
    %1480 = vmatprep.subr.mxu0 0.0
    %1481 = vmatpush1.msra.mxu0 0.0
    %1482 = vmatprep.subr.mxu0 0.0
    %1483 = vmatpush1.msra.mxu0 0.0
    %1484 = vmatprep.subr.mxu0 0.0
    %1485 = vmatpush1.msra.mxu0 0.0
    %1486 = vmatprep.subr.mxu0 0.0
    %1487 = vmatpush1.msra.mxu0 0.0
    %1488 = vmatprep.subr.mxu0 0.0
    %1489 = vmatpush1.msra.mxu0 0.0
    %1490 = vmatprep.subr.mxu0 0.0
    %1491 = vmatpush1.msra.mxu0 0.0
    %1492 = vmatprep.subr.mxu0 0.0
    %1493 = vmatpush1.msra.mxu0 0.0
    %1494 = vmatprep.subr.mxu0 0.0
    %1495 = vmatpush1.msra.mxu0 0.0
    %1496 = vmatprep.subr.mxu0 0.0
    %1497 = vmatpush1.msra.mxu0 0.0
    %1498 = vmatprep.subr.mxu0 0.0
    %1499 = vmatpush1.msra.mxu0 0.0
    %1500 = vmatprep.subr.mxu0 0.0
    %1501 = vmatpush1.msra.mxu0 0.0
    %1502 = vmatprep.subr.mxu0 0.0
    %1503 = vmatpush1.msra.mxu0 0.0
    %1504 = vmatprep.subr.mxu0 0.0
    %1505 = vmatpush1.msra.mxu0 0.0
    %1506 = vmatprep.subr.mxu0 0.0
    %1507 = vmatpush1.msra.mxu0 0.0
    %1508 = vmatprep.subr.mxu0 0.0
    %1509 = vmatpush1.msra.mxu0 0.0
    %1510 = vmatprep.subr.mxu0 0.0
    %1511 = vmatpush1.msra.mxu0 0.0
    %1512 = vmatprep.subr.mxu0 0.0
    %1513 = vmatpush1.msra.mxu0 0.0
    %1514 = vmatprep.subr.mxu0 0.0
    %1515 = vmatpush1.msra.mxu0 0.0
    %1516 = vmatprep.subr.mxu0 0.0
    %1517 = vmatpush1.msra.mxu0 0.0
    %1518 = vmatprep.subr.mxu0 0.0
    %1519 = vmatpush1.msra.mxu0 0.0
    %1520 = vmatprep.subr.mxu0 0.0
    %1521 = vmatpush1.msra.mxu0 0.0
    %1522 = vmatprep.subr.mxu0 0.0
    %1523 = vmatpush1.msra.mxu0 0.0
    %1524 = vmatprep.subr.mxu0 0.0
    %1525 = vmatpush1.msra.mxu0 0.0
    %1526 = vmatprep.subr.mxu0 0.0
    %1527 = vmatpush1.msra.mxu0 0.0
    %1528 = vmatprep.subr.mxu0 0.0
    %1529 = vmatpush1.msra.mxu0 0.0
    %1530 = vmatprep.mubr.f32.mxu0 0.0
    %1531 = vmatmul.mubr.f32.gmra.mrb[0].mxu0 %v1458
    %v1532 = vpop.f32.mrb[0].mxu0
    %v1533 = vadd.f32 0.0, %v1532
    %v1534 = vpop.f32.mrb[0].mxu0
    %1535 = vmatprep.mubr.f32.mxu0 0.0
    %1536 = vmatmul.mubr.f32.gmra.mrb[0].mxu0 %v1461
    %v1537 = vpop.f32.mrb[0].mxu0
    %v1538 = vadd.f32 0.0, %v1537
    %v1539 = vpop.f32.mrb[0].mxu0
    %1540 = vdwg.mxu0
    %s1541 = scalar_lea.vmem [#allocation2], 256
    %v1542 = vld [vmem:[%s1541] sm:$0xff]
    %v1543 = vld [vmem:[%s1541 + $0x8] sm:$0xff]
    %v1544 = vld [vmem:[%s1541 + $0x10] sm:$0xff]
    %v1545 = vld [vmem:[%s1541 + $0x18] sm:$0xff]
    %v1547 = vsel %vm145, %v1533, 0
    %v1550 = vsel %vm145, %v1538, 0
    %1552 = vmatprep.subr.mxu0 0.0
    %1553 = vmatpush1.msra.mxu0 %v1542
    %1554 = vmatprep.subr.mxu0 0.0
    %1555 = vmatpush1.msra.mxu0 %v1543
    %1556 = vmatprep.subr.mxu0 0.0
    %1557 = vmatpush1.msra.mxu0 %v1544
    %1558 = vmatprep.subr.mxu0 0.0
    %1559 = vmatpush1.msra.mxu0 %v1545
    %1560 = vmatprep.subr.mxu0 0.0
    %1561 = vmatpush1.msra.mxu0 0.0
    %1562 = vmatprep.subr.mxu0 0.0
    %1563 = vmatpush1.msra.mxu0 0.0
    %1564 = vmatprep.subr.mxu0 0.0
    %1565 = vmatpush1.msra.mxu0 0.0
    %1566 = vmatprep.subr.mxu0 0.0
    %1567 = vmatpush1.msra.mxu0 0.0
    %1568 = vmatprep.subr.mxu0 0.0
    %1569 = vmatpush1.msra.mxu0 0.0
    %1570 = vmatprep.subr.mxu0 0.0
    %1571 = vmatpush1.msra.mxu0 0.0
    %1572 = vmatprep.subr.mxu0 0.0
    %1573 = vmatpush1.msra.mxu0 0.0
    %1574 = vmatprep.subr.mxu0 0.0
    %1575 = vmatpush1.msra.mxu0 0.0
    %1576 = vmatprep.subr.mxu0 0.0
    %1577 = vmatpush1.msra.mxu0 0.0
    %1578 = vmatprep.subr.mxu0 0.0
    %1579 = vmatpush1.msra.mxu0 0.0
    %1580 = vmatprep.subr.mxu0 0.0
    %1581 = vmatpush1.msra.mxu0 0.0
    %1582 = vmatprep.subr.mxu0 0.0
    %1583 = vmatpush1.msra.mxu0 0.0
    %1584 = vmatprep.subr.mxu0 0.0
    %1585 = vmatpush1.msra.mxu0 0.0
    %1586 = vmatprep.subr.mxu0 0.0
    %1587 = vmatpush1.msra.mxu0 0.0
    %1588 = vmatprep.subr.mxu0 0.0
    %1589 = vmatpush1.msra.mxu0 0.0
    %1590 = vmatprep.subr.mxu0 0.0
    %1591 = vmatpush1.msra.mxu0 0.0
    %1592 = vmatprep.subr.mxu0 0.0
    %1593 = vmatpush1.msra.mxu0 0.0
    %1594 = vmatprep.subr.mxu0 0.0
    %1595 = vmatpush1.msra.mxu0 0.0
    %1596 = vmatprep.subr.mxu0 0.0
    %1597 = vmatpush1.msra.mxu0 0.0
    %1598 = vmatprep.subr.mxu0 0.0
    %1599 = vmatpush1.msra.mxu0 0.0
    %1600 = vmatprep.subr.mxu0 0.0
    %1601 = vmatpush1.msra.mxu0 0.0
    %1602 = vmatprep.subr.mxu0 0.0
    %1603 = vmatpush1.msra.mxu0 0.0
    %1604 = vmatprep.subr.mxu0 0.0
    %1605 = vmatpush1.msra.mxu0 0.0
    %1606 = vmatprep.subr.mxu0 0.0
    %1607 = vmatpush1.msra.mxu0 0.0
    %1608 = vmatprep.subr.mxu0 0.0
    %1609 = vmatpush1.msra.mxu0 0.0
    %1610 = vmatprep.subr.mxu0 0.0
    %1611 = vmatpush1.msra.mxu0 0.0
    %1612 = vmatprep.subr.mxu0 0.0
    %1613 = vmatpush1.msra.mxu0 0.0
    %1614 = vmatprep.subr.mxu0 0.0
    %1615 = vmatpush1.msra.mxu0 0.0
    %1616 = vmatprep.mubr.f32.mxu0 0.0
    %1617 = vmatmul.mubr.f32.gmra.mrb[0].mxu0 %v1547
    %v1618 = vpop.f32.mrb[0].mxu0
    %v1619 = vadd.f32 0.0, %v1618
    %v1620 = vpop.f32.mrb[0].mxu0
    %1621 = vmatprep.mubr.f32.mxu0 0.0
    %1622 = vmatmul.mubr.f32.gmra.mrb[0].mxu0 %v1550
    %v1623 = vpop.f32.mrb[0].mxu0
    %v1624 = vadd.f32 0.0, %v1623
    %v1625 = vpop.f32.mrb[0].mxu0
    %1626 = vdwg.mxu0
    %s1627 = scalar_lea.vmem [#allocation2], 320
    %v1628 = vld [vmem:[%s1627] sm:$0xff]
    %v1629 = vld [vmem:[%s1627 + $0x8] sm:$0xff]
    %v1630 = vld [vmem:[%s1627 + $0x10] sm:$0xff]
    %v1631 = vld [vmem:[%s1627 + $0x18] sm:$0xff]
    %1632 = vmatprep.subr.mxu0 0.0
    %1633 = vmatpush1.msra.mxu0 %v1628
    %1634 = vmatprep.subr.mxu0 0.0
    %1635 = vmatpush1.msra.mxu0 %v1629
    %1636 = vmatprep.subr.mxu0 0.0
    %1637 = vmatpush1.msra.mxu0 %v1630
    %1638 = vmatprep.subr.mxu0 0.0
    %1639 = vmatpush1.msra.mxu0 %v1631
    %1640 = vmatprep.subr.mxu0 0.0
    %1641 = vmatpush1.msra.mxu0 0.0
    %1642 = vmatprep.subr.mxu0 0.0
    %1643 = vmatpush1.msra.mxu0 0.0
    %1644 = vmatprep.subr.mxu0 0.0
    %1645 = vmatpush1.msra.mxu0 0.0
    %1646 = vmatprep.subr.mxu0 0.0
    %1647 = vmatpush1.msra.mxu0 0.0
    %1648 = vmatprep.subr.mxu0 0.0
    %1649 = vmatpush1.msra.mxu0 0.0
    %1650 = vmatprep.subr.mxu0 0.0
    %1651 = vmatpush1.msra.mxu0 0.0
    %1652 = vmatprep.subr.mxu0 0.0
    %1653 = vmatpush1.msra.mxu0 0.0
    %1654 = vmatprep.subr.mxu0 0.0
    %1655 = vmatpush1.msra.mxu0 0.0
    %1656 = vmatprep.subr.mxu0 0.0
    %1657 = vmatpush1.msra.mxu0 0.0
    %1658 = vmatprep.subr.mxu0 0.0
    %1659 = vmatpush1.msra.mxu0 0.0
    %1660 = vmatprep.subr.mxu0 0.0
    %1661 = vmatpush1.msra.mxu0 0.0
    %1662 = vmatprep.subr.mxu0 0.0
    %1663 = vmatpush1.msra.mxu0 0.0
    %1664 = vmatprep.subr.mxu0 0.0
    %1665 = vmatpush1.msra.mxu0 0.0
    %1666 = vmatprep.subr.mxu0 0.0
    %1667 = vmatpush1.msra.mxu0 0.0
    %1668 = vmatprep.subr.mxu0 0.0
    %1669 = vmatpush1.msra.mxu0 0.0
    %1670 = vmatprep.subr.mxu0 0.0
    %1671 = vmatpush1.msra.mxu0 0.0
    %1672 = vmatprep.subr.mxu0 0.0
    %1673 = vmatpush1.msra.mxu0 0.0
    %1674 = vmatprep.subr.mxu0 0.0
    %1675 = vmatpush1.msra.mxu0 0.0
    %1676 = vmatprep.subr.mxu0 0.0
    %1677 = vmatpush1.msra.mxu0 0.0
    %1678 = vmatprep.subr.mxu0 0.0
    %1679 = vmatpush1.msra.mxu0 0.0
    %1680 = vmatprep.subr.mxu0 0.0
    %1681 = vmatpush1.msra.mxu0 0.0
    %1682 = vmatprep.subr.mxu0 0.0
    %1683 = vmatpush1.msra.mxu0 0.0
    %1684 = vmatprep.subr.mxu0 0.0
    %1685 = vmatpush1.msra.mxu0 0.0
    %1686 = vmatprep.subr.mxu0 0.0
    %1687 = vmatpush1.msra.mxu0 0.0
    %1688 = vmatprep.subr.mxu0 0.0
    %1689 = vmatpush1.msra.mxu0 0.0
    %1690 = vmatprep.subr.mxu0 0.0
    %1691 = vmatpush1.msra.mxu0 0.0
    %1692 = vmatprep.subr.mxu0 0.0
    %1693 = vmatpush1.msra.mxu0 0.0
    %1694 = vmatprep.subr.mxu0 0.0
    %1695 = vmatpush1.msra.mxu0 0.0
    %1696 = vmatprep.mubr.f32.mxu0 0.0
    %1697 = vmatmul.mubr.f32.gmra.mrb[0].mxu0 %v1547
    %v1698 = vpop.f32.mrb[0].mxu0
    %v1699 = vadd.f32 0.0, %v1698
    %v1700 = vpop.f32.mrb[0].mxu0
    %1701 = vmatprep.mubr.f32.mxu0 0.0
    %1702 = vmatmul.mubr.f32.gmra.mrb[0].mxu0 %v1550
    %v1703 = vpop.f32.mrb[0].mxu0
    %v1704 = vadd.f32 0.0, %v1703
    %v1705 = vpop.f32.mrb[0].mxu0
    %1706 = vdwg.mxu0
    %v1708 = vsel %vm145, %v1619, 0
    %v1711 = vsel %vm145, %v1624, 0
    %1713 = vmatprep.subr.mxu0 0.0
    %1714 = vmatpush1.xpose.msra.mxu0 %v1547
    %1715 = vmatprep.subr.mxu0 0.0
    %1716 = vmatpush1.xpose.msra.mxu0 %v1550
    %1717 = vmatprep.subr.mxu0 0.0
    %1718 = vmatpush1.xpose.msra.mxu0 0.0
    %1719 = vmatprep.subr.mxu0 0.0
    %1720 = vmatpush1.xpose.msra.mxu0 0.0
    %1721 = vmatprep.subr.mxu0 0.0
    %1722 = vmatpush1.xpose.msra.mxu0 0.0
    %1723 = vmatprep.subr.mxu0 0.0
    %1724 = vmatpush1.xpose.msra.mxu0 0.0
    %1725 = vmatprep.subr.mxu0 0.0
    %1726 = vmatpush1.xpose.msra.mxu0 0.0
    %1727 = vmatprep.subr.mxu0 0.0
    %1728 = vmatpush1.xpose.msra.mxu0 0.0
    %1729 = vmatprep.subr.mxu0 0.0
    %1730 = vmatpush1.xpose.msra.mxu0 0.0
    %1731 = vmatprep.subr.mxu0 0.0
    %1732 = vmatpush1.xpose.msra.mxu0 0.0
    %1733 = vmatprep.subr.mxu0 0.0
    %1734 = vmatpush1.xpose.msra.mxu0 0.0
    %1735 = vmatprep.subr.mxu0 0.0
    %1736 = vmatpush1.xpose.msra.mxu0 0.0
    %1737 = vmatprep.subr.mxu0 0.0
    %1738 = vmatpush1.xpose.msra.mxu0 0.0
    %1739 = vmatprep.subr.mxu0 0.0
    %1740 = vmatpush1.xpose.msra.mxu0 0.0
    %1741 = vmatprep.subr.mxu0 0.0
    %1742 = vmatpush1.xpose.msra.mxu0 0.0
    %1743 = vmatprep.subr.mxu0 0.0
    %1744 = vmatpush1.xpose.msra.mxu0 0.0
    %1745 = vmatprep.subr.mxu0 0.0
    %1746 = vmatpush1.xpose.msra.mxu0 0.0
    %1747 = vmatprep.subr.mxu0 0.0
    %1748 = vmatpush1.xpose.msra.mxu0 0.0
    %1749 = vmatprep.subr.mxu0 0.0
    %1750 = vmatpush1.xpose.msra.mxu0 0.0
    %1751 = vmatprep.subr.mxu0 0.0
    %1752 = vmatpush1.xpose.msra.mxu0 0.0
    %1753 = vmatprep.subr.mxu0 0.0
    %1754 = vmatpush1.xpose.msra.mxu0 0.0
    %1755 = vmatprep.subr.mxu0 0.0
    %1756 = vmatpush1.xpose.msra.mxu0 0.0
    %1757 = vmatprep.subr.mxu0 0.0
    %1758 = vmatpush1.xpose.msra.mxu0 0.0
    %1759 = vmatprep.subr.mxu0 0.0
    %1760 = vmatpush1.xpose.msra.mxu0 0.0
    %1761 = vmatprep.subr.mxu0 0.0
    %1762 = vmatpush1.xpose.msra.mxu0 0.0
    %1763 = vmatprep.subr.mxu0 0.0
    %1764 = vmatpush1.xpose.msra.mxu0 0.0
    %1765 = vmatprep.subr.mxu0 0.0
    %1766 = vmatpush1.xpose.msra.mxu0 0.0
    %1767 = vmatprep.subr.mxu0 0.0
    %1768 = vmatpush1.xpose.msra.mxu0 0.0
    %1769 = vmatprep.subr.mxu0 0.0
    %1770 = vmatpush1.xpose.msra.mxu0 0.0
    %1771 = vmatprep.subr.mxu0 0.0
    %1772 = vmatpush1.xpose.msra.mxu0 0.0
    %1773 = vmatprep.subr.mxu0 0.0
    %1774 = vmatpush1.xpose.msra.mxu0 0.0
    %1775 = vmatprep.subr.mxu0 0.0
    %1776 = vmatpush1.xpose.msra.mxu0 0.0
    %1777 = vmatprep.mubr.f32.mxu0 0.0
    %1778 = vmatmul.mubr.f32.gmra.mrb[0].mxu0 %v1708
    %v1779 = vpop.f32.mrb[0].mxu0
    %v1780 = vadd.f32 0.0, %v1779
    %v1781 = vpop.f32.mrb[0].mxu0
    %1782 = vmatprep.mubr.f32.mxu0 0.0
    %1783 = vmatmul.mubr.f32.gmra.mrb[0].mxu0 %v1711
    %v1784 = vpop.f32.mrb[0].mxu0
    %v1785 = vadd.f32 0.0, %v1784
    %v1786 = vpop.f32.mrb[0].mxu0
    %1787 = vdwg.mxu0
    %v1788 = vsel %vm50, %v1780, 0.0
    %v1789 = vsel %vm51, %v1785, 0.0
    %s1790 = scalar_lea.vmem [#allocation2], 288
    %v1791 = vld [vmem:[%s1790] sm:$0xff]
    %v1792 = vld [vmem:[%s1790 + $0x8] sm:$0xff]
    %v1793 = vld [vmem:[%s1790 + $0x10] sm:$0xff]
    %v1794 = vld [vmem:[%s1790 + $0x18] sm:$0xff]
    %1795 = vmatprep.subr.mxu0 0.0
    %1796 = vmatpush1.msra.mxu0 %v1791
    %1797 = vmatprep.subr.mxu0 0.0
    %1798 = vmatpush1.msra.mxu0 %v1792
    %1799 = vmatprep.subr.mxu0 0.0
    %1800 = vmatpush1.msra.mxu0 %v1793
    %1801 = vmatprep.subr.mxu0 0.0
    %1802 = vmatpush1.msra.mxu0 %v1794
    %1803 = vmatprep.subr.mxu0 0.0
    %1804 = vmatpush1.msra.mxu0 0.0
    %1805 = vmatprep.subr.mxu0 0.0
    %1806 = vmatpush1.msra.mxu0 0.0
    %1807 = vmatprep.subr.mxu0 0.0
    %1808 = vmatpush1.msra.mxu0 0.0
    %1809 = vmatprep.subr.mxu0 0.0
    %1810 = vmatpush1.msra.mxu0 0.0
    %1811 = vmatprep.subr.mxu0 0.0
    %1812 = vmatpush1.msra.mxu0 0.0
    %1813 = vmatprep.subr.mxu0 0.0
    %1814 = vmatpush1.msra.mxu0 0.0
    %1815 = vmatprep.subr.mxu0 0.0
    %1816 = vmatpush1.msra.mxu0 0.0
    %1817 = vmatprep.subr.mxu0 0.0
    %1818 = vmatpush1.msra.mxu0 0.0
    %1819 = vmatprep.subr.mxu0 0.0
    %1820 = vmatpush1.msra.mxu0 0.0
    %1821 = vmatprep.subr.mxu0 0.0
    %1822 = vmatpush1.msra.mxu0 0.0
    %1823 = vmatprep.subr.mxu0 0.0
    %1824 = vmatpush1.msra.mxu0 0.0
    %1825 = vmatprep.subr.mxu0 0.0
    %1826 = vmatpush1.msra.mxu0 0.0
    %1827 = vmatprep.subr.mxu0 0.0
    %1828 = vmatpush1.msra.mxu0 0.0
    %1829 = vmatprep.subr.mxu0 0.0
    %1830 = vmatpush1.msra.mxu0 0.0
    %1831 = vmatprep.subr.mxu0 0.0
    %1832 = vmatpush1.msra.mxu0 0.0
    %1833 = vmatprep.subr.mxu0 0.0
    %1834 = vmatpush1.msra.mxu0 0.0
    %1835 = vmatprep.subr.mxu0 0.0
    %1836 = vmatpush1.msra.mxu0 0.0
    %1837 = vmatprep.subr.mxu0 0.0
    %1838 = vmatpush1.msra.mxu0 0.0
    %1839 = vmatprep.subr.mxu0 0.0
    %1840 = vmatpush1.msra.mxu0 0.0
    %1841 = vmatprep.subr.mxu0 0.0
    %1842 = vmatpush1.msra.mxu0 0.0
    %1843 = vmatprep.subr.mxu0 0.0
    %1844 = vmatpush1.msra.mxu0 0.0
    %1845 = vmatprep.subr.mxu0 0.0
    %1846 = vmatpush1.msra.mxu0 0.0
    %1847 = vmatprep.subr.mxu0 0.0
    %1848 = vmatpush1.msra.mxu0 0.0
    %1849 = vmatprep.subr.mxu0 0.0
    %1850 = vmatpush1.msra.mxu0 0.0
    %1851 = vmatprep.subr.mxu0 0.0
    %1852 = vmatpush1.msra.mxu0 0.0
    %1853 = vmatprep.subr.mxu0 0.0
    %1854 = vmatpush1.msra.mxu0 0.0
    %1855 = vmatprep.subr.mxu0 0.0
    %1856 = vmatpush1.msra.mxu0 0.0
    %1857 = vmatprep.subr.mxu0 0.0
    %1858 = vmatpush1.msra.mxu0 0.0
    %1859 = vmatprep.mubr.f32.mxu0 0.0
    %1860 = vmatmul.mubr.f32.gmra.mrb[0].mxu0 %v1547
    %v1861 = vpop.f32.mrb[0].mxu0
    %v1862 = vadd.f32 0.0, %v1861
    %v1863 = vpop.f32.mrb[0].mxu0
    %1864 = vmatprep.mubr.f32.mxu0 0.0
    %1865 = vmatmul.mubr.f32.gmra.mrb[0].mxu0 %v1550
    %v1866 = vpop.f32.mrb[0].mxu0
    %v1867 = vadd.f32 0.0, %v1866
    %v1868 = vpop.f32.mrb[0].mxu0
    %1869 = vdwg.mxu0
    %s1870 = scalar_lea.vmem [#allocation2], 352
    %v1871 = vld [vmem:[%s1870] sm:$0xff]
    %v1872 = vld [vmem:[%s1870 + $0x8] sm:$0xff]
    %v1873 = vld [vmem:[%s1870 + $0x10] sm:$0xff]
    %v1874 = vld [vmem:[%s1870 + $0x18] sm:$0xff]
    %1875 = vmatprep.subr.mxu0 0.0
    %1876 = vmatpush1.msra.mxu0 %v1871
    %1877 = vmatprep.subr.mxu0 0.0
    %1878 = vmatpush1.msra.mxu0 %v1872
    %1879 = vmatprep.subr.mxu0 0.0
    %1880 = vmatpush1.msra.mxu0 %v1873
    %1881 = vmatprep.subr.mxu0 0.0
    %1882 = vmatpush1.msra.mxu0 %v1874
    %1883 = vmatprep.subr.mxu0 0.0
    %1884 = vmatpush1.msra.mxu0 0.0
    %1885 = vmatprep.subr.mxu0 0.0
    %1886 = vmatpush1.msra.mxu0 0.0
    %1887 = vmatprep.subr.mxu0 0.0
    %1888 = vmatpush1.msra.mxu0 0.0
    %1889 = vmatprep.subr.mxu0 0.0
    %1890 = vmatpush1.msra.mxu0 0.0
    %1891 = vmatprep.subr.mxu0 0.0
    %1892 = vmatpush1.msra.mxu0 0.0
    %1893 = vmatprep.subr.mxu0 0.0
    %1894 = vmatpush1.msra.mxu0 0.0
    %1895 = vmatprep.subr.mxu0 0.0
    %1896 = vmatpush1.msra.mxu0 0.0
    %1897 = vmatprep.subr.mxu0 0.0
    %1898 = vmatpush1.msra.mxu0 0.0
    %1899 = vmatprep.subr.mxu0 0.0
    %1900 = vmatpush1.msra.mxu0 0.0
    %1901 = vmatprep.subr.mxu0 0.0
    %1902 = vmatpush1.msra.mxu0 0.0
    %1903 = vmatprep.subr.mxu0 0.0
    %1904 = vmatpush1.msra.mxu0 0.0
    %1905 = vmatprep.subr.mxu0 0.0
    %1906 = vmatpush1.msra.mxu0 0.0
    %1907 = vmatprep.subr.mxu0 0.0
    %1908 = vmatpush1.msra.mxu0 0.0
    %1909 = vmatprep.subr.mxu0 0.0
    %1910 = vmatpush1.msra.mxu0 0.0
    %1911 = vmatprep.subr.mxu0 0.0
    %1912 = vmatpush1.msra.mxu0 0.0
    %1913 = vmatprep.subr.mxu0 0.0
    %1914 = vmatpush1.msra.mxu0 0.0
    %1915 = vmatprep.subr.mxu0 0.0
    %1916 = vmatpush1.msra.mxu0 0.0
    %1917 = vmatprep.subr.mxu0 0.0
    %1918 = vmatpush1.msra.mxu0 0.0
    %1919 = vmatprep.subr.mxu0 0.0
    %1920 = vmatpush1.msra.mxu0 0.0
    %1921 = vmatprep.subr.mxu0 0.0
    %1922 = vmatpush1.msra.mxu0 0.0
    %1923 = vmatprep.subr.mxu0 0.0
    %1924 = vmatpush1.msra.mxu0 0.0
    %1925 = vmatprep.subr.mxu0 0.0
    %1926 = vmatpush1.msra.mxu0 0.0
    %1927 = vmatprep.subr.mxu0 0.0
    %1928 = vmatpush1.msra.mxu0 0.0
    %1929 = vmatprep.subr.mxu0 0.0
    %1930 = vmatpush1.msra.mxu0 0.0
    %1931 = vmatprep.subr.mxu0 0.0
    %1932 = vmatpush1.msra.mxu0 0.0
    %1933 = vmatprep.subr.mxu0 0.0
    %1934 = vmatpush1.msra.mxu0 0.0
    %1935 = vmatprep.subr.mxu0 0.0
    %1936 = vmatpush1.msra.mxu0 0.0
    %1937 = vmatprep.subr.mxu0 0.0
    %1938 = vmatpush1.msra.mxu0 0.0
    %1939 = vmatprep.mubr.f32.mxu0 0.0
    %1940 = vmatmul.mubr.f32.gmra.mrb[0].mxu0 %v1547
    %v1941 = vpop.f32.mrb[0].mxu0
    %v1942 = vadd.f32 0.0, %v1941
    %v1943 = vpop.f32.mrb[0].mxu0
    %1944 = vmatprep.mubr.f32.mxu0 0.0
    %1945 = vmatmul.mubr.f32.gmra.mrb[0].mxu0 %v1550
    %v1946 = vpop.f32.mrb[0].mxu0
    %v1947 = vadd.f32 0.0, %v1946
    %v1948 = vpop.f32.mrb[0].mxu0
    %1949 = vdwg.mxu0
    %v1951 = vsel %vm145, %v1862, 0
    %v1954 = vsel %vm145, %v1867, 0
    %1956 = vmatprep.subr.mxu0 0.0
    %1957 = vmatpush1.xpose.msra.mxu0 %v1547
    %1958 = vmatprep.subr.mxu0 0.0
    %1959 = vmatpush1.xpose.msra.mxu0 %v1550
    %1960 = vmatprep.subr.mxu0 0.0
    %1961 = vmatpush1.xpose.msra.mxu0 0.0
    %1962 = vmatprep.subr.mxu0 0.0
    %1963 = vmatpush1.xpose.msra.mxu0 0.0
    %1964 = vmatprep.subr.mxu0 0.0
    %1965 = vmatpush1.xpose.msra.mxu0 0.0
    %1966 = vmatprep.subr.mxu0 0.0
    %1967 = vmatpush1.xpose.msra.mxu0 0.0
    %1968 = vmatprep.subr.mxu0 0.0
    %1969 = vmatpush1.xpose.msra.mxu0 0.0
    %1970 = vmatprep.subr.mxu0 0.0
    %1971 = vmatpush1.xpose.msra.mxu0 0.0
    %1972 = vmatprep.subr.mxu0 0.0
    %1973 = vmatpush1.xpose.msra.mxu0 0.0
    %1974 = vmatprep.subr.mxu0 0.0
    %1975 = vmatpush1.xpose.msra.mxu0 0.0
    %1976 = vmatprep.subr.mxu0 0.0
    %1977 = vmatpush1.xpose.msra.mxu0 0.0
    %1978 = vmatprep.subr.mxu0 0.0
    %1979 = vmatpush1.xpose.msra.mxu0 0.0
    %1980 = vmatprep.subr.mxu0 0.0
    %1981 = vmatpush1.xpose.msra.mxu0 0.0
    %1982 = vmatprep.subr.mxu0 0.0
    %1983 = vmatpush1.xpose.msra.mxu0 0.0
    %1984 = vmatprep.subr.mxu0 0.0
    %1985 = vmatpush1.xpose.msra.mxu0 0.0
    %1986 = vmatprep.subr.mxu0 0.0
    %1987 = vmatpush1.xpose.msra.mxu0 0.0
    %1988 = vmatprep.subr.mxu0 0.0
    %1989 = vmatpush1.xpose.msra.mxu0 0.0
    %1990 = vmatprep.subr.mxu0 0.0
    %1991 = vmatpush1.xpose.msra.mxu0 0.0
    %1992 = vmatprep.subr.mxu0 0.0
    %1993 = vmatpush1.xpose.msra.mxu0 0.0
    %1994 = vmatprep.subr.mxu0 0.0
    %1995 = vmatpush1.xpose.msra.mxu0 0.0
    %1996 = vmatprep.subr.mxu0 0.0
    %1997 = vmatpush1.xpose.msra.mxu0 0.0
    %1998 = vmatprep.subr.mxu0 0.0
    %1999 = vmatpush1.xpose.msra.mxu0 0.0
    %2000 = vmatprep.subr.mxu0 0.0
    %2001 = vmatpush1.xpose.msra.mxu0 0.0
    %2002 = vmatprep.subr.mxu0 0.0
    %2003 = vmatpush1.xpose.msra.mxu0 0.0
    %2004 = vmatprep.subr.mxu0 0.0
    %2005 = vmatpush1.xpose.msra.mxu0 0.0
    %2006 = vmatprep.subr.mxu0 0.0
    %2007 = vmatpush1.xpose.msra.mxu0 0.0
    %2008 = vmatprep.subr.mxu0 0.0
    %2009 = vmatpush1.xpose.msra.mxu0 0.0
    %2010 = vmatprep.subr.mxu0 0.0
    %2011 = vmatpush1.xpose.msra.mxu0 0.0
    %2012 = vmatprep.subr.mxu0 0.0
    %2013 = vmatpush1.xpose.msra.mxu0 0.0
    %2014 = vmatprep.subr.mxu0 0.0
    %2015 = vmatpush1.xpose.msra.mxu0 0.0
    %2016 = vmatprep.subr.mxu0 0.0
    %2017 = vmatpush1.xpose.msra.mxu0 0.0
    %2018 = vmatprep.subr.mxu0 0.0
    %2019 = vmatpush1.xpose.msra.mxu0 0.0
    %2020 = vmatprep.mubr.f32.mxu0 0.0
    %2021 = vmatmul.mubr.f32.gmra.mrb[0].mxu0 %v1951
    %v2022 = vpop.f32.mrb[0].mxu0
    %v2023 = vadd.f32 0.0, %v2022
    %v2024 = vpop.f32.mrb[0].mxu0
    %2025 = vmatprep.mubr.f32.mxu0 0.0
    %2026 = vmatmul.mubr.f32.gmra.mrb[0].mxu0 %v1954
    %v2027 = vpop.f32.mrb[0].mxu0
    %v2028 = vadd.f32 0.0, %v2027
    %v2029 = vpop.f32.mrb[0].mxu0
    %2030 = vdwg.mxu0
    %v2031 = vsel %vm50, %v2023, 0.0
    %v2032 = vsel %vm51, %v2028, 0.0
    %v2034 = vsel %vm633, %v2031, 0
    %v2037 = vsel %vm633, %v2032, 0
    %2039 = vmatprep.subr.mxu0 0.0
    %2040 = vmatpush1.msra.mxu0 %v1942
    %2041 = vmatprep.subr.mxu0 0.0
    %2042 = vmatpush1.msra.mxu0 %v1947
    %2043 = vmatprep.subr.mxu0 0.0
    %2044 = vmatpush1.msra.mxu0 0.0
    %2045 = vmatprep.subr.mxu0 0.0
    %2046 = vmatpush1.msra.mxu0 0.0
    %2047 = vmatprep.subr.mxu0 0.0
    %2048 = vmatpush1.msra.mxu0 0.0
    %2049 = vmatprep.subr.mxu0 0.0
    %2050 = vmatpush1.msra.mxu0 0.0
    %2051 = vmatprep.subr.mxu0 0.0
    %2052 = vmatpush1.msra.mxu0 0.0
    %2053 = vmatprep.subr.mxu0 0.0
    %2054 = vmatpush1.msra.mxu0 0.0
    %2055 = vmatprep.subr.mxu0 0.0
    %2056 = vmatpush1.msra.mxu0 0.0
    %2057 = vmatprep.subr.mxu0 0.0
    %2058 = vmatpush1.msra.mxu0 0.0
    %2059 = vmatprep.subr.mxu0 0.0
    %2060 = vmatpush1.msra.mxu0 0.0
    %2061 = vmatprep.subr.mxu0 0.0
    %2062 = vmatpush1.msra.mxu0 0.0
    %2063 = vmatprep.subr.mxu0 0.0
    %2064 = vmatpush1.msra.mxu0 0.0
    %2065 = vmatprep.subr.mxu0 0.0
    %2066 = vmatpush1.msra.mxu0 0.0
    %2067 = vmatprep.subr.mxu0 0.0
    %2068 = vmatpush1.msra.mxu0 0.0
    %2069 = vmatprep.subr.mxu0 0.0
    %2070 = vmatpush1.msra.mxu0 0.0
    %2071 = vmatprep.subr.mxu0 0.0
    %2072 = vmatpush1.msra.mxu0 0.0
    %2073 = vmatprep.subr.mxu0 0.0
    %2074 = vmatpush1.msra.mxu0 0.0
    %2075 = vmatprep.subr.mxu0 0.0
    %2076 = vmatpush1.msra.mxu0 0.0
    %2077 = vmatprep.subr.mxu0 0.0
    %2078 = vmatpush1.msra.mxu0 0.0
    %2079 = vmatprep.subr.mxu0 0.0
    %2080 = vmatpush1.msra.mxu0 0.0
    %2081 = vmatprep.subr.mxu0 0.0
    %2082 = vmatpush1.msra.mxu0 0.0
    %2083 = vmatprep.subr.mxu0 0.0
    %2084 = vmatpush1.msra.mxu0 0.0
    %2085 = vmatprep.subr.mxu0 0.0
    %2086 = vmatpush1.msra.mxu0 0.0
    %2087 = vmatprep.subr.mxu0 0.0
    %2088 = vmatpush1.msra.mxu0 0.0
    %2089 = vmatprep.subr.mxu0 0.0
    %2090 = vmatpush1.msra.mxu0 0.0
    %2091 = vmatprep.subr.mxu0 0.0
    %2092 = vmatpush1.msra.mxu0 0.0
    %2093 = vmatprep.subr.mxu0 0.0
    %2094 = vmatpush1.msra.mxu0 0.0
    %2095 = vmatprep.subr.mxu0 0.0
    %2096 = vmatpush1.msra.mxu0 0.0
    %2097 = vmatprep.subr.mxu0 0.0
    %2098 = vmatpush1.msra.mxu0 0.0
    %2099 = vmatprep.subr.mxu0 0.0
    %2100 = vmatpush1.msra.mxu0 0.0
    %2101 = vmatprep.subr.mxu0 0.0
    %2102 = vmatpush1.msra.mxu0 0.0
    %2103 = vmatprep.mubr.f32.mxu0 0.0
    %2104 = vmatmul.mubr.f32.gmra.mrb[0].mxu0 %v2034
    %v2105 = vpop.f32.mrb[0].mxu0
    %v2106 = vadd.f32 0.0, %v2105
    %v2107 = vpop.f32.mrb[0].mxu0
    %2108 = vmatprep.mubr.f32.mxu0 0.0
    %2109 = vmatmul.mubr.f32.gmra.mrb[0].mxu0 %v2037
    %v2110 = vpop.f32.mrb[0].mxu0
    %v2111 = vadd.f32 0.0, %v2110
    %v2112 = vpop.f32.mrb[0].mxu0
    %2113 = vdwg.mxu0
    %v2115 = vsel %vm633, %v1788, 0
    %v2118 = vsel %vm633, %v1789, 0
    %2120 = vmatprep.subr.mxu0 0.0
    %2121 = vmatpush1.msra.mxu0 %v1699
    %2122 = vmatprep.subr.mxu0 0.0
    %2123 = vmatpush1.msra.mxu0 %v1704
    %2124 = vmatprep.subr.mxu0 0.0
    %2125 = vmatpush1.msra.mxu0 0.0
    %2126 = vmatprep.subr.mxu0 0.0
    %2127 = vmatpush1.msra.mxu0 0.0
    %2128 = vmatprep.subr.mxu0 0.0
    %2129 = vmatpush1.msra.mxu0 0.0
    %2130 = vmatprep.subr.mxu0 0.0
    %2131 = vmatpush1.msra.mxu0 0.0
    %2132 = vmatprep.subr.mxu0 0.0
    %2133 = vmatpush1.msra.mxu0 0.0
    %2134 = vmatprep.subr.mxu0 0.0
    %2135 = vmatpush1.msra.mxu0 0.0
    %2136 = vmatprep.subr.mxu0 0.0
    %2137 = vmatpush1.msra.mxu0 0.0
    %2138 = vmatprep.subr.mxu0 0.0
    %2139 = vmatpush1.msra.mxu0 0.0
    %2140 = vmatprep.subr.mxu0 0.0
    %2141 = vmatpush1.msra.mxu0 0.0
    %2142 = vmatprep.subr.mxu0 0.0
    %2143 = vmatpush1.msra.mxu0 0.0
    %2144 = vmatprep.subr.mxu0 0.0
    %2145 = vmatpush1.msra.mxu0 0.0
    %2146 = vmatprep.subr.mxu0 0.0
    %2147 = vmatpush1.msra.mxu0 0.0
    %2148 = vmatprep.subr.mxu0 0.0
    %2149 = vmatpush1.msra.mxu0 0.0
    %2150 = vmatprep.subr.mxu0 0.0
    %2151 = vmatpush1.msra.mxu0 0.0
    %2152 = vmatprep.subr.mxu0 0.0
    %2153 = vmatpush1.msra.mxu0 0.0
    %2154 = vmatprep.subr.mxu0 0.0
    %2155 = vmatpush1.msra.mxu0 0.0
    %2156 = vmatprep.subr.mxu0 0.0
    %2157 = vmatpush1.msra.mxu0 0.0
    %2158 = vmatprep.subr.mxu0 0.0
    %2159 = vmatpush1.msra.mxu0 0.0
    %2160 = vmatprep.subr.mxu0 0.0
    %2161 = vmatpush1.msra.mxu0 0.0
    %2162 = vmatprep.subr.mxu0 0.0
    %2163 = vmatpush1.msra.mxu0 0.0
    %2164 = vmatprep.subr.mxu0 0.0
    %2165 = vmatpush1.msra.mxu0 0.0
    %2166 = vmatprep.subr.mxu0 0.0
    %2167 = vmatpush1.msra.mxu0 0.0
    %2168 = vmatprep.subr.mxu0 0.0
    %2169 = vmatpush1.msra.mxu0 0.0
    %2170 = vmatprep.subr.mxu0 0.0
    %2171 = vmatpush1.msra.mxu0 0.0
    %2172 = vmatprep.subr.mxu0 0.0
    %2173 = vmatpush1.msra.mxu0 0.0
    %2174 = vmatprep.subr.mxu0 0.0
    %2175 = vmatpush1.msra.mxu0 0.0
    %2176 = vmatprep.subr.mxu0 0.0
    %2177 = vmatpush1.msra.mxu0 0.0
    %2178 = vmatprep.subr.mxu0 0.0
    %2179 = vmatpush1.msra.mxu0 0.0
    %2180 = vmatprep.subr.mxu0 0.0
    %2181 = vmatpush1.msra.mxu0 0.0
    %2182 = vmatprep.subr.mxu0 0.0
    %2183 = vmatpush1.msra.mxu0 0.0
    %2184 = vmatprep.mubr.f32.mxu0 0.0
    %2185 = vmatmul.mubr.f32.gmra.mrb[0].mxu0 %v2115
    %v2186 = vpop.f32.mrb[0].mxu0
    %v2187 = vadd.f32 %v2106, %v2186
    %v2188 = vpop.f32.mrb[0].mxu0
    %2189 = vmatprep.mubr.f32.mxu0 0.0
    %2190 = vmatmul.mubr.f32.gmra.mrb[0].mxu0 %v2118
    %v2191 = vpop.f32.mrb[0].mxu0
    %v2192 = vadd.f32 %v2111, %v2191
    %v2193 = vpop.f32.mrb[0].mxu0
    %2194 = vdwg.mxu0
    %s2195 = scalar_lea.vmem [#allocation2], 384
    %v2196 = vld [vmem:[%s2195] sm:$0xff]
    %v2197 = vld [vmem:[%s2195 + $0x8] sm:$0xff]
    %v2198 = vld [vmem:[%s2195 + $0x10] sm:$0xff]
    %v2199 = vld [vmem:[%s2195 + $0x18] sm:$0xff]
    %v2201 = vsel %vm145, %v2187, 0
    %v2204 = vsel %vm145, %v2192, 0
    %2206 = vmatprep.subr.mxu0 0.0
    %2207 = vmatpush1.msra.mxu0 %v2196
    %2208 = vmatprep.subr.mxu0 0.0
    %2209 = vmatpush1.msra.mxu0 %v2197
    %2210 = vmatprep.subr.mxu0 0.0
    %2211 = vmatpush1.msra.mxu0 %v2198
    %2212 = vmatprep.subr.mxu0 0.0
    %2213 = vmatpush1.msra.mxu0 %v2199
    %2214 = vmatprep.subr.mxu0 0.0
    %2215 = vmatpush1.msra.mxu0 0.0
    %2216 = vmatprep.subr.mxu0 0.0
    %2217 = vmatpush1.msra.mxu0 0.0
    %2218 = vmatprep.subr.mxu0 0.0
    %2219 = vmatpush1.msra.mxu0 0.0
    %2220 = vmatprep.subr.mxu0 0.0
    %2221 = vmatpush1.msra.mxu0 0.0
    %2222 = vmatprep.subr.mxu0 0.0
    %2223 = vmatpush1.msra.mxu0 0.0
    %2224 = vmatprep.subr.mxu0 0.0
    %2225 = vmatpush1.msra.mxu0 0.0
    %2226 = vmatprep.subr.mxu0 0.0
    %2227 = vmatpush1.msra.mxu0 0.0
    %2228 = vmatprep.subr.mxu0 0.0
    %2229 = vmatpush1.msra.mxu0 0.0
    %2230 = vmatprep.subr.mxu0 0.0
    %2231 = vmatpush1.msra.mxu0 0.0
    %2232 = vmatprep.subr.mxu0 0.0
    %2233 = vmatpush1.msra.mxu0 0.0
    %2234 = vmatprep.subr.mxu0 0.0
    %2235 = vmatpush1.msra.mxu0 0.0
    %2236 = vmatprep.subr.mxu0 0.0
    %2237 = vmatpush1.msra.mxu0 0.0
    %2238 = vmatprep.subr.mxu0 0.0
    %2239 = vmatpush1.msra.mxu0 0.0
    %2240 = vmatprep.subr.mxu0 0.0
    %2241 = vmatpush1.msra.mxu0 0.0
    %2242 = vmatprep.subr.mxu0 0.0
    %2243 = vmatpush1.msra.mxu0 0.0
    %2244 = vmatprep.subr.mxu0 0.0
    %2245 = vmatpush1.msra.mxu0 0.0
    %2246 = vmatprep.subr.mxu0 0.0
    %2247 = vmatpush1.msra.mxu0 0.0
    %2248 = vmatprep.subr.mxu0 0.0
    %2249 = vmatpush1.msra.mxu0 0.0
    %2250 = vmatprep.subr.mxu0 0.0
    %2251 = vmatpush1.msra.mxu0 0.0
    %2252 = vmatprep.subr.mxu0 0.0
    %2253 = vmatpush1.msra.mxu0 0.0
    %2254 = vmatprep.subr.mxu0 0.0
    %2255 = vmatpush1.msra.mxu0 0.0
    %2256 = vmatprep.subr.mxu0 0.0
    %2257 = vmatpush1.msra.mxu0 0.0
    %2258 = vmatprep.subr.mxu0 0.0
    %2259 = vmatpush1.msra.mxu0 0.0
    %2260 = vmatprep.subr.mxu0 0.0
    %2261 = vmatpush1.msra.mxu0 0.0
    %2262 = vmatprep.subr.mxu0 0.0
    %2263 = vmatpush1.msra.mxu0 0.0
    %2264 = vmatprep.subr.mxu0 0.0
    %2265 = vmatpush1.msra.mxu0 0.0
    %2266 = vmatprep.subr.mxu0 0.0
    %2267 = vmatpush1.msra.mxu0 0.0
    %2268 = vmatprep.subr.mxu0 0.0
    %2269 = vmatpush1.msra.mxu0 0.0
    %2270 = vmatprep.mubr.f32.mxu0 0.0
    %2271 = vmatmul.mubr.f32.gmra.mrb[0].mxu0 %v2201
    %v2272 = vpop.f32.mrb[0].mxu0
    %v2273 = vadd.f32 0.0, %v2272
    %v2274 = vpop.f32.mrb[0].mxu0
    %2275 = vmatprep.mubr.f32.mxu0 0.0
    %2276 = vmatmul.mubr.f32.gmra.mrb[0].mxu0 %v2204
    %v2277 = vpop.f32.mrb[0].mxu0
    %v2278 = vadd.f32 0.0, %v2277
    %v2279 = vpop.f32.mrb[0].mxu0
    %2280 = vdwg.mxu0
    %s2281 = scalar_lea.vmem [#allocation2], 448
    %v2282 = vld [vmem:[%s2281] sm:$0xff]
    %v2283 = vld [vmem:[%s2281 + $0x8] sm:$0xff]
    %v2284 = vld [vmem:[%s2281 + $0x10] sm:$0xff]
    %v2285 = vld [vmem:[%s2281 + $0x18] sm:$0xff]
    %2286 = vmatprep.subr.mxu0 0.0
    %2287 = vmatpush1.msra.mxu0 %v2282
    %2288 = vmatprep.subr.mxu0 0.0
    %2289 = vmatpush1.msra.mxu0 %v2283
    %2290 = vmatprep.subr.mxu0 0.0
    %2291 = vmatpush1.msra.mxu0 %v2284
    %2292 = vmatprep.subr.mxu0 0.0
    %2293 = vmatpush1.msra.mxu0 %v2285
    %2294 = vmatprep.subr.mxu0 0.0
    %2295 = vmatpush1.msra.mxu0 0.0
    %2296 = vmatprep.subr.mxu0 0.0
    %2297 = vmatpush1.msra.mxu0 0.0
    %2298 = vmatprep.subr.mxu0 0.0
    %2299 = vmatpush1.msra.mxu0 0.0
    %2300 = vmatprep.subr.mxu0 0.0
    %2301 = vmatpush1.msra.mxu0 0.0
    %2302 = vmatprep.subr.mxu0 0.0
    %2303 = vmatpush1.msra.mxu0 0.0
    %2304 = vmatprep.subr.mxu0 0.0
    %2305 = vmatpush1.msra.mxu0 0.0
    %2306 = vmatprep.subr.mxu0 0.0
    %2307 = vmatpush1.msra.mxu0 0.0
    %2308 = vmatprep.subr.mxu0 0.0
    %2309 = vmatpush1.msra.mxu0 0.0
    %2310 = vmatprep.subr.mxu0 0.0
    %2311 = vmatpush1.msra.mxu0 0.0
    %2312 = vmatprep.subr.mxu0 0.0
    %2313 = vmatpush1.msra.mxu0 0.0
    %2314 = vmatprep.subr.mxu0 0.0
    %2315 = vmatpush1.msra.mxu0 0.0
    %2316 = vmatprep.subr.mxu0 0.0
    %2317 = vmatpush1.msra.mxu0 0.0
    %2318 = vmatprep.subr.mxu0 0.0
    %2319 = vmatpush1.msra.mxu0 0.0
    %2320 = vmatprep.subr.mxu0 0.0
    %2321 = vmatpush1.msra.mxu0 0.0
    %2322 = vmatprep.subr.mxu0 0.0
    %2323 = vmatpush1.msra.mxu0 0.0
    %2324 = vmatprep.subr.mxu0 0.0
    %2325 = vmatpush1.msra.mxu0 0.0
    %2326 = vmatprep.subr.mxu0 0.0
    %2327 = vmatpush1.msra.mxu0 0.0
    %2328 = vmatprep.subr.mxu0 0.0
    %2329 = vmatpush1.msra.mxu0 0.0
    %2330 = vmatprep.subr.mxu0 0.0
    %2331 = vmatpush1.msra.mxu0 0.0
    %2332 = vmatprep.subr.mxu0 0.0
    %2333 = vmatpush1.msra.mxu0 0.0
    %2334 = vmatprep.subr.mxu0 0.0
    %2335 = vmatpush1.msra.mxu0 0.0
    %2336 = vmatprep.subr.mxu0 0.0
    %2337 = vmatpush1.msra.mxu0 0.0
    %2338 = vmatprep.subr.mxu0 0.0
    %2339 = vmatpush1.msra.mxu0 0.0
    %2340 = vmatprep.subr.mxu0 0.0
    %2341 = vmatpush1.msra.mxu0 0.0
    %2342 = vmatprep.subr.mxu0 0.0
    %2343 = vmatpush1.msra.mxu0 0.0
    %2344 = vmatprep.subr.mxu0 0.0
    %2345 = vmatpush1.msra.mxu0 0.0
    %2346 = vmatprep.subr.mxu0 0.0
    %2347 = vmatpush1.msra.mxu0 0.0
    %2348 = vmatprep.subr.mxu0 0.0
    %2349 = vmatpush1.msra.mxu0 0.0
    %2350 = vmatprep.mubr.f32.mxu0 0.0
    %2351 = vmatmul.mubr.f32.gmra.mrb[0].mxu0 %v2201
    %v2352 = vpop.f32.mrb[0].mxu0
    %v2353 = vadd.f32 0.0, %v2352
    %v2354 = vpop.f32.mrb[0].mxu0
    %2355 = vmatprep.mubr.f32.mxu0 0.0
    %2356 = vmatmul.mubr.f32.gmra.mrb[0].mxu0 %v2204
    %v2357 = vpop.f32.mrb[0].mxu0
    %v2358 = vadd.f32 0.0, %v2357
    %v2359 = vpop.f32.mrb[0].mxu0
    %2360 = vdwg.mxu0
    %v2362 = vsel %vm145, %v2273, 0
    %v2365 = vsel %vm145, %v2278, 0
    %2367 = vmatprep.subr.mxu0 0.0
    %2368 = vmatpush1.xpose.msra.mxu0 %v2201
    %2369 = vmatprep.subr.mxu0 0.0
    %2370 = vmatpush1.xpose.msra.mxu0 %v2204
    %2371 = vmatprep.subr.mxu0 0.0
    %2372 = vmatpush1.xpose.msra.mxu0 0.0
    %2373 = vmatprep.subr.mxu0 0.0
    %2374 = vmatpush1.xpose.msra.mxu0 0.0
    %2375 = vmatprep.subr.mxu0 0.0
    %2376 = vmatpush1.xpose.msra.mxu0 0.0
    %2377 = vmatprep.subr.mxu0 0.0
    %2378 = vmatpush1.xpose.msra.mxu0 0.0
    %2379 = vmatprep.subr.mxu0 0.0
    %2380 = vmatpush1.xpose.msra.mxu0 0.0
    %2381 = vmatprep.subr.mxu0 0.0
    %2382 = vmatpush1.xpose.msra.mxu0 0.0
    %2383 = vmatprep.subr.mxu0 0.0
    %2384 = vmatpush1.xpose.msra.mxu0 0.0
    %2385 = vmatprep.subr.mxu0 0.0
    %2386 = vmatpush1.xpose.msra.mxu0 0.0
    %2387 = vmatprep.subr.mxu0 0.0
    %2388 = vmatpush1.xpose.msra.mxu0 0.0
    %2389 = vmatprep.subr.mxu0 0.0
    %2390 = vmatpush1.xpose.msra.mxu0 0.0
    %2391 = vmatprep.subr.mxu0 0.0
    %2392 = vmatpush1.xpose.msra.mxu0 0.0
    %2393 = vmatprep.subr.mxu0 0.0
    %2394 = vmatpush1.xpose.msra.mxu0 0.0
    %2395 = vmatprep.subr.mxu0 0.0
    %2396 = vmatpush1.xpose.msra.mxu0 0.0
    %2397 = vmatprep.subr.mxu0 0.0
    %2398 = vmatpush1.xpose.msra.mxu0 0.0
    %2399 = vmatprep.subr.mxu0 0.0
    %2400 = vmatpush1.xpose.msra.mxu0 0.0
    %2401 = vmatprep.subr.mxu0 0.0
    %2402 = vmatpush1.xpose.msra.mxu0 0.0
    %2403 = vmatprep.subr.mxu0 0.0
    %2404 = vmatpush1.xpose.msra.mxu0 0.0
    %2405 = vmatprep.subr.mxu0 0.0
    %2406 = vmatpush1.xpose.msra.mxu0 0.0
    %2407 = vmatprep.subr.mxu0 0.0
    %2408 = vmatpush1.xpose.msra.mxu0 0.0
    %2409 = vmatprep.subr.mxu0 0.0
    %2410 = vmatpush1.xpose.msra.mxu0 0.0
    %2411 = vmatprep.subr.mxu0 0.0
    %2412 = vmatpush1.xpose.msra.mxu0 0.0
    %2413 = vmatprep.subr.mxu0 0.0
    %2414 = vmatpush1.xpose.msra.mxu0 0.0
    %2415 = vmatprep.subr.mxu0 0.0
    %2416 = vmatpush1.xpose.msra.mxu0 0.0
    %2417 = vmatprep.subr.mxu0 0.0
    %2418 = vmatpush1.xpose.msra.mxu0 0.0
    %2419 = vmatprep.subr.mxu0 0.0
    %2420 = vmatpush1.xpose.msra.mxu0 0.0
    %2421 = vmatprep.subr.mxu0 0.0
    %2422 = vmatpush1.xpose.msra.mxu0 0.0
    %2423 = vmatprep.subr.mxu0 0.0
    %2424 = vmatpush1.xpose.msra.mxu0 0.0
    %2425 = vmatprep.subr.mxu0 0.0
    %2426 = vmatpush1.xpose.msra.mxu0 0.0
    %2427 = vmatprep.subr.mxu0 0.0
    %2428 = vmatpush1.xpose.msra.mxu0 0.0
    %2429 = vmatprep.subr.mxu0 0.0
    %2430 = vmatpush1.xpose.msra.mxu0 0.0
    %2431 = vmatprep.mubr.f32.mxu0 0.0
    %2432 = vmatmul.mubr.f32.gmra.mrb[0].mxu0 %v2362
    %v2433 = vpop.f32.mrb[0].mxu0
    %v2434 = vadd.f32 0.0, %v2433
    %v2435 = vpop.f32.mrb[0].mxu0
    %2436 = vmatprep.mubr.f32.mxu0 0.0
    %2437 = vmatmul.mubr.f32.gmra.mrb[0].mxu0 %v2365
    %v2438 = vpop.f32.mrb[0].mxu0
    %v2439 = vadd.f32 0.0, %v2438
    %v2440 = vpop.f32.mrb[0].mxu0
    %2441 = vdwg.mxu0
    %v2442 = vsel %vm50, %v2434, 0.0
    %v2443 = vsel %vm51, %v2439, 0.0
    %s2444 = scalar_lea.vmem [#allocation2], 416
    %v2445 = vld [vmem:[%s2444] sm:$0xff]
    %v2446 = vld [vmem:[%s2444 + $0x8] sm:$0xff]
    %v2447 = vld [vmem:[%s2444 + $0x10] sm:$0xff]
    %v2448 = vld [vmem:[%s2444 + $0x18] sm:$0xff]
    %2449 = vmatprep.subr.mxu0 0.0
    %2450 = vmatpush1.msra.mxu0 %v2445
    %2451 = vmatprep.subr.mxu0 0.0
    %2452 = vmatpush1.msra.mxu0 %v2446
    %2453 = vmatprep.subr.mxu0 0.0
    %2454 = vmatpush1.msra.mxu0 %v2447
    %2455 = vmatprep.subr.mxu0 0.0
    %2456 = vmatpush1.msra.mxu0 %v2448
    %2457 = vmatprep.subr.mxu0 0.0
    %2458 = vmatpush1.msra.mxu0 0.0
    %2459 = vmatprep.subr.mxu0 0.0
    %2460 = vmatpush1.msra.mxu0 0.0
    %2461 = vmatprep.subr.mxu0 0.0
    %2462 = vmatpush1.msra.mxu0 0.0
    %2463 = vmatprep.subr.mxu0 0.0
    %2464 = vmatpush1.msra.mxu0 0.0
    %2465 = vmatprep.subr.mxu0 0.0
    %2466 = vmatpush1.msra.mxu0 0.0
    %2467 = vmatprep.subr.mxu0 0.0
    %2468 = vmatpush1.msra.mxu0 0.0
    %2469 = vmatprep.subr.mxu0 0.0
    %2470 = vmatpush1.msra.mxu0 0.0
    %2471 = vmatprep.subr.mxu0 0.0
    %2472 = vmatpush1.msra.mxu0 0.0
    %2473 = vmatprep.subr.mxu0 0.0
    %2474 = vmatpush1.msra.mxu0 0.0
    %2475 = vmatprep.subr.mxu0 0.0
    %2476 = vmatpush1.msra.mxu0 0.0
    %2477 = vmatprep.subr.mxu0 0.0
    %2478 = vmatpush1.msra.mxu0 0.0
    %2479 = vmatprep.subr.mxu0 0.0
    %2480 = vmatpush1.msra.mxu0 0.0
    %2481 = vmatprep.subr.mxu0 0.0
    %2482 = vmatpush1.msra.mxu0 0.0
    %2483 = vmatprep.subr.mxu0 0.0
    %2484 = vmatpush1.msra.mxu0 0.0
    %2485 = vmatprep.subr.mxu0 0.0
    %2486 = vmatpush1.msra.mxu0 0.0
    %2487 = vmatprep.subr.mxu0 0.0
    %2488 = vmatpush1.msra.mxu0 0.0
    %2489 = vmatprep.subr.mxu0 0.0
    %2490 = vmatpush1.msra.mxu0 0.0
    %2491 = vmatprep.subr.mxu0 0.0
    %2492 = vmatpush1.msra.mxu0 0.0
    %2493 = vmatprep.subr.mxu0 0.0
    %2494 = vmatpush1.msra.mxu0 0.0
    %2495 = vmatprep.subr.mxu0 0.0
    %2496 = vmatpush1.msra.mxu0 0.0
    %2497 = vmatprep.subr.mxu0 0.0
    %2498 = vmatpush1.msra.mxu0 0.0
    %2499 = vmatprep.subr.mxu0 0.0
    %2500 = vmatpush1.msra.mxu0 0.0
    %2501 = vmatprep.subr.mxu0 0.0
    %2502 = vmatpush1.msra.mxu0 0.0
    %2503 = vmatprep.subr.mxu0 0.0
    %2504 = vmatpush1.msra.mxu0 0.0
    %2505 = vmatprep.subr.mxu0 0.0
    %2506 = vmatpush1.msra.mxu0 0.0
    %2507 = vmatprep.subr.mxu0 0.0
    %2508 = vmatpush1.msra.mxu0 0.0
    %2509 = vmatprep.subr.mxu0 0.0
    %2510 = vmatpush1.msra.mxu0 0.0
    %2511 = vmatprep.subr.mxu0 0.0
    %2512 = vmatpush1.msra.mxu0 0.0
    %2513 = vmatprep.mubr.f32.mxu0 0.0
    %2514 = vmatmul.mubr.f32.gmra.mrb[0].mxu0 %v2201
    %v2515 = vpop.f32.mrb[0].mxu0
    %v2516 = vadd.f32 0.0, %v2515
    %v2517 = vpop.f32.mrb[0].mxu0
    %2518 = vmatprep.mubr.f32.mxu0 0.0
    %2519 = vmatmul.mubr.f32.gmra.mrb[0].mxu0 %v2204
    %v2520 = vpop.f32.mrb[0].mxu0
    %v2521 = vadd.f32 0.0, %v2520
    %v2522 = vpop.f32.mrb[0].mxu0
    %2523 = vdwg.mxu0
    %s2524 = scalar_lea.vmem [#allocation2], 480
    %v2525 = vld [vmem:[%s2524] sm:$0xff]
    %v2526 = vld [vmem:[%s2524 + $0x8] sm:$0xff]
    %v2527 = vld [vmem:[%s2524 + $0x10] sm:$0xff]
    %v2528 = vld [vmem:[%s2524 + $0x18] sm:$0xff]
    %2529 = vmatprep.subr.mxu0 0.0
    %2530 = vmatpush1.msra.mxu0 %v2525
    %2531 = vmatprep.subr.mxu0 0.0
    %2532 = vmatpush1.msra.mxu0 %v2526
    %2533 = vmatprep.subr.mxu0 0.0
    %2534 = vmatpush1.msra.mxu0 %v2527
    %2535 = vmatprep.subr.mxu0 0.0
    %2536 = vmatpush1.msra.mxu0 %v2528
    %2537 = vmatprep.subr.mxu0 0.0
    %2538 = vmatpush1.msra.mxu0 0.0
    %2539 = vmatprep.subr.mxu0 0.0
    %2540 = vmatpush1.msra.mxu0 0.0
    %2541 = vmatprep.subr.mxu0 0.0
    %2542 = vmatpush1.msra.mxu0 0.0
    %2543 = vmatprep.subr.mxu0 0.0
    %2544 = vmatpush1.msra.mxu0 0.0
    %2545 = vmatprep.subr.mxu0 0.0
    %2546 = vmatpush1.msra.mxu0 0.0
    %2547 = vmatprep.subr.mxu0 0.0
    %2548 = vmatpush1.msra.mxu0 0.0
    %2549 = vmatprep.subr.mxu0 0.0
    %2550 = vmatpush1.msra.mxu0 0.0
    %2551 = vmatprep.subr.mxu0 0.0
    %2552 = vmatpush1.msra.mxu0 0.0
    %2553 = vmatprep.subr.mxu0 0.0
    %2554 = vmatpush1.msra.mxu0 0.0
    %2555 = vmatprep.subr.mxu0 0.0
    %2556 = vmatpush1.msra.mxu0 0.0
    %2557 = vmatprep.subr.mxu0 0.0
    %2558 = vmatpush1.msra.mxu0 0.0
    %2559 = vmatprep.subr.mxu0 0.0
    %2560 = vmatpush1.msra.mxu0 0.0
    %2561 = vmatprep.subr.mxu0 0.0
    %2562 = vmatpush1.msra.mxu0 0.0
    %2563 = vmatprep.subr.mxu0 0.0
    %2564 = vmatpush1.msra.mxu0 0.0
    %2565 = vmatprep.subr.mxu0 0.0
    %2566 = vmatpush1.msra.mxu0 0.0
    %2567 = vmatprep.subr.mxu0 0.0
    %2568 = vmatpush1.msra.mxu0 0.0
    %2569 = vmatprep.subr.mxu0 0.0
    %2570 = vmatpush1.msra.mxu0 0.0
    %2571 = vmatprep.subr.mxu0 0.0
    %2572 = vmatpush1.msra.mxu0 0.0
    %2573 = vmatprep.subr.mxu0 0.0
    %2574 = vmatpush1.msra.mxu0 0.0
    %2575 = vmatprep.subr.mxu0 0.0
    %2576 = vmatpush1.msra.mxu0 0.0
    %2577 = vmatprep.subr.mxu0 0.0
    %2578 = vmatpush1.msra.mxu0 0.0
    %2579 = vmatprep.subr.mxu0 0.0
    %2580 = vmatpush1.msra.mxu0 0.0
    %2581 = vmatprep.subr.mxu0 0.0
    %2582 = vmatpush1.msra.mxu0 0.0
    %2583 = vmatprep.subr.mxu0 0.0
    %2584 = vmatpush1.msra.mxu0 0.0
    %2585 = vmatprep.subr.mxu0 0.0
    %2586 = vmatpush1.msra.mxu0 0.0
    %2587 = vmatprep.subr.mxu0 0.0
    %2588 = vmatpush1.msra.mxu0 0.0
    %2589 = vmatprep.subr.mxu0 0.0
    %2590 = vmatpush1.msra.mxu0 0.0
    %2591 = vmatprep.subr.mxu0 0.0
    %2592 = vmatpush1.msra.mxu0 0.0
    %2593 = vmatprep.mubr.f32.mxu0 0.0
    %2594 = vmatmul.mubr.f32.gmra.mrb[0].mxu0 %v2201
    %v2595 = vpop.f32.mrb[0].mxu0
    %v2596 = vadd.f32 0.0, %v2595
    %v2597 = vpop.f32.mrb[0].mxu0
    %2598 = vmatprep.mubr.f32.mxu0 0.0
    %2599 = vmatmul.mubr.f32.gmra.mrb[0].mxu0 %v2204
    %v2600 = vpop.f32.mrb[0].mxu0
    %v2601 = vadd.f32 0.0, %v2600
    %v2602 = vpop.f32.mrb[0].mxu0
    %2603 = vdwg.mxu0
    %v2605 = vsel %vm145, %v2516, 0
    %v2608 = vsel %vm145, %v2521, 0
    %2610 = vmatprep.subr.mxu0 0.0
    %2611 = vmatpush1.xpose.msra.mxu0 %v2201
    %2612 = vmatprep.subr.mxu0 0.0
    %2613 = vmatpush1.xpose.msra.mxu0 %v2204
    %2614 = vmatprep.subr.mxu0 0.0
    %2615 = vmatpush1.xpose.msra.mxu0 0.0
    %2616 = vmatprep.subr.mxu0 0.0
    %2617 = vmatpush1.xpose.msra.mxu0 0.0
    %2618 = vmatprep.subr.mxu0 0.0
    %2619 = vmatpush1.xpose.msra.mxu0 0.0
    %2620 = vmatprep.subr.mxu0 0.0
    %2621 = vmatpush1.xpose.msra.mxu0 0.0
    %2622 = vmatprep.subr.mxu0 0.0
    %2623 = vmatpush1.xpose.msra.mxu0 0.0
    %2624 = vmatprep.subr.mxu0 0.0
    %2625 = vmatpush1.xpose.msra.mxu0 0.0
    %2626 = vmatprep.subr.mxu0 0.0
    %2627 = vmatpush1.xpose.msra.mxu0 0.0
    %2628 = vmatprep.subr.mxu0 0.0
    %2629 = vmatpush1.xpose.msra.mxu0 0.0
    %2630 = vmatprep.subr.mxu0 0.0
    %2631 = vmatpush1.xpose.msra.mxu0 0.0
    %2632 = vmatprep.subr.mxu0 0.0
    %2633 = vmatpush1.xpose.msra.mxu0 0.0
    %2634 = vmatprep.subr.mxu0 0.0
    %2635 = vmatpush1.xpose.msra.mxu0 0.0
    %2636 = vmatprep.subr.mxu0 0.0
    %2637 = vmatpush1.xpose.msra.mxu0 0.0
    %2638 = vmatprep.subr.mxu0 0.0
    %2639 = vmatpush1.xpose.msra.mxu0 0.0
    %2640 = vmatprep.subr.mxu0 0.0
    %2641 = vmatpush1.xpose.msra.mxu0 0.0
    %2642 = vmatprep.subr.mxu0 0.0
    %2643 = vmatpush1.xpose.msra.mxu0 0.0
    %2644 = vmatprep.subr.mxu0 0.0
    %2645 = vmatpush1.xpose.msra.mxu0 0.0
    %2646 = vmatprep.subr.mxu0 0.0
    %2647 = vmatpush1.xpose.msra.mxu0 0.0
    %2648 = vmatprep.subr.mxu0 0.0
    %2649 = vmatpush1.xpose.msra.mxu0 0.0
    %2650 = vmatprep.subr.mxu0 0.0
    %2651 = vmatpush1.xpose.msra.mxu0 0.0
    %2652 = vmatprep.subr.mxu0 0.0
    %2653 = vmatpush1.xpose.msra.mxu0 0.0
    %2654 = vmatprep.subr.mxu0 0.0
    %2655 = vmatpush1.xpose.msra.mxu0 0.0
    %2656 = vmatprep.subr.mxu0 0.0
    %2657 = vmatpush1.xpose.msra.mxu0 0.0
    %2658 = vmatprep.subr.mxu0 0.0
    %2659 = vmatpush1.xpose.msra.mxu0 0.0
    %2660 = vmatprep.subr.mxu0 0.0
    %2661 = vmatpush1.xpose.msra.mxu0 0.0
    %2662 = vmatprep.subr.mxu0 0.0
    %2663 = vmatpush1.xpose.msra.mxu0 0.0
    %2664 = vmatprep.subr.mxu0 0.0
    %2665 = vmatpush1.xpose.msra.mxu0 0.0
    %2666 = vmatprep.subr.mxu0 0.0
    %2667 = vmatpush1.xpose.msra.mxu0 0.0
    %2668 = vmatprep.subr.mxu0 0.0
    %2669 = vmatpush1.xpose.msra.mxu0 0.0
    %2670 = vmatprep.subr.mxu0 0.0
    %2671 = vmatpush1.xpose.msra.mxu0 0.0
    %2672 = vmatprep.subr.mxu0 0.0
    %2673 = vmatpush1.xpose.msra.mxu0 0.0
    %2674 = vmatprep.mubr.f32.mxu0 0.0
    %2675 = vmatmul.mubr.f32.gmra.mrb[0].mxu0 %v2605
    %v2676 = vpop.f32.mrb[0].mxu0
    %v2677 = vadd.f32 0.0, %v2676
    %v2678 = vpop.f32.mrb[0].mxu0
    %2679 = vmatprep.mubr.f32.mxu0 0.0
    %2680 = vmatmul.mubr.f32.gmra.mrb[0].mxu0 %v2608
    %v2681 = vpop.f32.mrb[0].mxu0
    %v2682 = vadd.f32 0.0, %v2681
    %v2683 = vpop.f32.mrb[0].mxu0
    %2684 = vdwg.mxu0
    %v2685 = vsel %vm50, %v2677, 0.0
    %v2686 = vsel %vm51, %v2682, 0.0
    %v2688 = vsel %vm633, %v2685, 0
    %v2691 = vsel %vm633, %v2686, 0
    %2693 = vmatprep.subr.mxu0 0.0
    %2694 = vmatpush1.msra.mxu0 %v2596
    %2695 = vmatprep.subr.mxu0 0.0
    %2696 = vmatpush1.msra.mxu0 %v2601
    %2697 = vmatprep.subr.mxu0 0.0
    %2698 = vmatpush1.msra.mxu0 0.0
    %2699 = vmatprep.subr.mxu0 0.0
    %2700 = vmatpush1.msra.mxu0 0.0
    %2701 = vmatprep.subr.mxu0 0.0
    %2702 = vmatpush1.msra.mxu0 0.0
    %2703 = vmatprep.subr.mxu0 0.0
    %2704 = vmatpush1.msra.mxu0 0.0
    %2705 = vmatprep.subr.mxu0 0.0
    %2706 = vmatpush1.msra.mxu0 0.0
    %2707 = vmatprep.subr.mxu0 0.0
    %2708 = vmatpush1.msra.mxu0 0.0
    %2709 = vmatprep.subr.mxu0 0.0
    %2710 = vmatpush1.msra.mxu0 0.0
    %2711 = vmatprep.subr.mxu0 0.0
    %2712 = vmatpush1.msra.mxu0 0.0
    %2713 = vmatprep.subr.mxu0 0.0
    %2714 = vmatpush1.msra.mxu0 0.0
    %2715 = vmatprep.subr.mxu0 0.0
    %2716 = vmatpush1.msra.mxu0 0.0
    %2717 = vmatprep.subr.mxu0 0.0
    %2718 = vmatpush1.msra.mxu0 0.0
    %2719 = vmatprep.subr.mxu0 0.0
    %2720 = vmatpush1.msra.mxu0 0.0
    %2721 = vmatprep.subr.mxu0 0.0
    %2722 = vmatpush1.msra.mxu0 0.0
    %2723 = vmatprep.subr.mxu0 0.0
    %2724 = vmatpush1.msra.mxu0 0.0
    %2725 = vmatprep.subr.mxu0 0.0
    %2726 = vmatpush1.msra.mxu0 0.0
    %2727 = vmatprep.subr.mxu0 0.0
    %2728 = vmatpush1.msra.mxu0 0.0
    %2729 = vmatprep.subr.mxu0 0.0
    %2730 = vmatpush1.msra.mxu0 0.0
    %2731 = vmatprep.subr.mxu0 0.0
    %2732 = vmatpush1.msra.mxu0 0.0
    %2733 = vmatprep.subr.mxu0 0.0
    %2734 = vmatpush1.msra.mxu0 0.0
    %2735 = vmatprep.subr.mxu0 0.0
    %2736 = vmatpush1.msra.mxu0 0.0
    %2737 = vmatprep.subr.mxu0 0.0
    %2738 = vmatpush1.msra.mxu0 0.0
    %2739 = vmatprep.subr.mxu0 0.0
    %2740 = vmatpush1.msra.mxu0 0.0
    %2741 = vmatprep.subr.mxu0 0.0
    %2742 = vmatpush1.msra.mxu0 0.0
    %2743 = vmatprep.subr.mxu0 0.0
    %2744 = vmatpush1.msra.mxu0 0.0
    %2745 = vmatprep.subr.mxu0 0.0
    %2746 = vmatpush1.msra.mxu0 0.0
    %2747 = vmatprep.subr.mxu0 0.0
    %2748 = vmatpush1.msra.mxu0 0.0
    %2749 = vmatprep.subr.mxu0 0.0
    %2750 = vmatpush1.msra.mxu0 0.0
    %2751 = vmatprep.subr.mxu0 0.0
    %2752 = vmatpush1.msra.mxu0 0.0
    %2753 = vmatprep.subr.mxu0 0.0
    %2754 = vmatpush1.msra.mxu0 0.0
    %2755 = vmatprep.subr.mxu0 0.0
    %2756 = vmatpush1.msra.mxu0 0.0
    %2757 = vmatprep.mubr.f32.mxu0 0.0
    %2758 = vmatmul.mubr.f32.gmra.mrb[0].mxu0 %v2688
    %v2759 = vpop.f32.mrb[0].mxu0
    %v2760 = vadd.f32 0.0, %v2759
    %v2761 = vpop.f32.mrb[0].mxu0
    %2762 = vmatprep.mubr.f32.mxu0 0.0
    %2763 = vmatmul.mubr.f32.gmra.mrb[0].mxu0 %v2691
    %v2764 = vpop.f32.mrb[0].mxu0
    %v2765 = vadd.f32 0.0, %v2764
    %v2766 = vpop.f32.mrb[0].mxu0
    %2767 = vdwg.mxu0
    %v2769 = vsel %vm633, %v2442, 0
    %v2772 = vsel %vm633, %v2443, 0
    %2774 = vmatprep.subr.mxu0 0.0
    %2775 = vmatpush1.msra.mxu0 %v2353
    %2776 = vmatprep.subr.mxu0 0.0
    %2777 = vmatpush1.msra.mxu0 %v2358
    %2778 = vmatprep.subr.mxu0 0.0
    %2779 = vmatpush1.msra.mxu0 0.0
    %2780 = vmatprep.subr.mxu0 0.0
    %2781 = vmatpush1.msra.mxu0 0.0
    %2782 = vmatprep.subr.mxu0 0.0
    %2783 = vmatpush1.msra.mxu0 0.0
    %2784 = vmatprep.subr.mxu0 0.0
    %2785 = vmatpush1.msra.mxu0 0.0
    %2786 = vmatprep.subr.mxu0 0.0
    %2787 = vmatpush1.msra.mxu0 0.0
    %2788 = vmatprep.subr.mxu0 0.0
    %2789 = vmatpush1.msra.mxu0 0.0
    %2790 = vmatprep.subr.mxu0 0.0
    %2791 = vmatpush1.msra.mxu0 0.0
    %2792 = vmatprep.subr.mxu0 0.0
    %2793 = vmatpush1.msra.mxu0 0.0
    %2794 = vmatprep.subr.mxu0 0.0
    %2795 = vmatpush1.msra.mxu0 0.0
    %2796 = vmatprep.subr.mxu0 0.0
    %2797 = vmatpush1.msra.mxu0 0.0
    %2798 = vmatprep.subr.mxu0 0.0
    %2799 = vmatpush1.msra.mxu0 0.0
    %2800 = vmatprep.subr.mxu0 0.0
    %2801 = vmatpush1.msra.mxu0 0.0
    %2802 = vmatprep.subr.mxu0 0.0
    %2803 = vmatpush1.msra.mxu0 0.0
    %2804 = vmatprep.subr.mxu0 0.0
    %2805 = vmatpush1.msra.mxu0 0.0
    %2806 = vmatprep.subr.mxu0 0.0
    %2807 = vmatpush1.msra.mxu0 0.0
    %2808 = vmatprep.subr.mxu0 0.0
    %2809 = vmatpush1.msra.mxu0 0.0
    %2810 = vmatprep.subr.mxu0 0.0
    %2811 = vmatpush1.msra.mxu0 0.0
    %2812 = vmatprep.subr.mxu0 0.0
    %2813 = vmatpush1.msra.mxu0 0.0
    %2814 = vmatprep.subr.mxu0 0.0
    %2815 = vmatpush1.msra.mxu0 0.0
    %2816 = vmatprep.subr.mxu0 0.0
    %2817 = vmatpush1.msra.mxu0 0.0
    %2818 = vmatprep.subr.mxu0 0.0
    %2819 = vmatpush1.msra.mxu0 0.0
    %2820 = vmatprep.subr.mxu0 0.0
    %2821 = vmatpush1.msra.mxu0 0.0
    %2822 = vmatprep.subr.mxu0 0.0
    %2823 = vmatpush1.msra.mxu0 0.0
    %2824 = vmatprep.subr.mxu0 0.0
    %2825 = vmatpush1.msra.mxu0 0.0
    %2826 = vmatprep.subr.mxu0 0.0
    %2827 = vmatpush1.msra.mxu0 0.0
    %2828 = vmatprep.subr.mxu0 0.0
    %2829 = vmatpush1.msra.mxu0 0.0
    %2830 = vmatprep.subr.mxu0 0.0
    %2831 = vmatpush1.msra.mxu0 0.0
    %2832 = vmatprep.subr.mxu0 0.0
    %2833 = vmatpush1.msra.mxu0 0.0
    %2834 = vmatprep.subr.mxu0 0.0
    %2835 = vmatpush1.msra.mxu0 0.0
    %2836 = vmatprep.subr.mxu0 0.0
    %2837 = vmatpush1.msra.mxu0 0.0
    %2838 = vmatprep.mubr.f32.mxu0 0.0
    %2839 = vmatmul.mubr.f32.gmra.mrb[0].mxu0 %v2769
    %v2840 = vpop.f32.mrb[0].mxu0
    %v2841 = vadd.f32 %v2760, %v2840
    %v2842 = vpop.f32.mrb[0].mxu0
    %2843 = vmatprep.mubr.f32.mxu0 0.0
    %2844 = vmatmul.mubr.f32.gmra.mrb[0].mxu0 %v2772
    %v2845 = vpop.f32.mrb[0].mxu0
    %v2846 = vadd.f32 %v2765, %v2845
    %v2847 = vpop.f32.mrb[0].mxu0
    %2848 = vdwg.mxu0
    %s2849 = scalar_lea.vmem [#allocation5], 16
    %2850 = vst.msk [vmem:[%s2849] sm:$0xff] %vm145, %v2841
    %2851 = vst.msk [vmem:[%s2849 + $0x8] sm:$0xff] %vm145, %v2846
    // Predicated region
    $region18: #{tpu_custom_call.1} parent=1 // pred_check
      _
    $region19: #{tpu_custom_call.1} parent=1 // pred_check_branch
      %2853 = sbr.rel (0) target = $region21
    $region20: #{tpu_custom_call.1} parent=1 // pred_region
      %s2855 = ssub.s32 512, 512
      %2856 = vsyncadd [#allocation4], %s2855
      %s2857 = sshll.u32 [#allocation5], 4
      %s2858 = int_to_ptr.vmem [resolvable:$true] %s2857
      %2863 = dma.vmem_to_hbm [thread:$0]  %s2858, 512, %s3, [#allocation4], 128, 128, 8
    $region21: #{tpu_custom_call.1} parent=1 // pred_fallthru
      _
    // Predicated region
    $region22: #{tpu_custom_call.1} parent=1 // pred_check
      _
    $region23: #{tpu_custom_call.1} parent=1 // pred_check_branch
      %2865 = sbr.rel (0) target = $region25
    $region24: #{tpu_custom_call.1} parent=1 // pred_region
      %2866 = dma.done [#allocation4], 512
    $region25: #{tpu_custom_call.1} parent=1 // pred_fallthru
      _
    %2867 = vsyncpa [#allocation3], 1
    %2868 = vsyncpa [#allocation4], 1

</llo_original>
